<compile_context>
chip_gen: v5e
topology: v5e:2x2
jax: 0.10.0
libtpu: 0.0.40
codegen_flags: <defaults>
</compile_context>

<pallas_src>
import functools

import jax
import jax.numpy as jnp
from jax.experimental import pallas as pl
from jax.experimental.pallas import tpu as pltpu


INVENTORY_KEYS = ['health', 'food', 'drink', 'energy', 'sapling', 'wood', 'stone',
                  'coal', 'iron', 'diamond', 'wood_pickaxe', 'stone_pickaxe',
                  'iron_pickaxe', 'wood_sword', 'stone_sword', 'iron_sword']
INVENTORY_SIZE = len(INVENTORY_KEYS)  # 16


# ----------------------------- in-kernel helpers ------------------------------

def _halo(w):
    # Halo rows needed on each side of the flattened (y*W + x) row index for a
    # 3x3 / pad=1 conv: max |dy*W + dx| = W + 1; rounded up to a multiple of 8 so the
    # interior store stays sublane-tile aligned.
    return ((w + 1 + 7) // 8) * 8


def _zero_halos(pad_ref, halo, interior):
    """Zero ONLY the halo rows (leading + trailing). Interior rows are always written."""
    c = pad_ref.shape[-1]
    zeros = jnp.zeros((halo, c), pad_ref.dtype)
    pad_ref[pl.ds(0, halo), :] = zeros
    pad_ref[pl.ds(halo + interior, halo), :] = zeros


def _conv3x3_relu(pad_ref, hc, wc, halo, w_ref, b_ref):
    """3x3 'same' conv + bias + ReLU as a single im2col matmul.

    pad_ref: VMEM ref (2*halo + hc*wc, Cin) f32; activation at rows [halo, halo+hc*wc),
             halo rows are zero (so dy=+/-1 taps at the top/bottom rows read zeros).
    w_ref:   (9*Cin, Cout) bf16 ref, flattened in (dy, dx, ci) order.
    b_ref:   (1, Cout) f32 ref.
    Returns a (hc*wc, Cout) f32 value.
    """
    assert (wc & (wc - 1)) == 0, "stage width must be a power of two"
    m = hc * wc

    # x coordinate of every flattened row -> masks for the two x-wrapping taps.
    row = jax.lax.broadcasted_iota(jnp.int32, (m, 1), 0)
    xx = jnp.bitwise_and(row, wc - 1)
    ok_left = xx >= 1            # tap dx = -1 is valid
    ok_right = xx < (wc - 1)     # tap dx = +1 is valid

    pieces = []
    for dy in (-1, 0, 1):
        base = halo + dy * wc
        for dx in (-1, 0, 1):
            s = pad_ref[pl.ds(base + dx, m), :]          # (m, Cin) f32
            if dx == -1:
                s = jnp.where(ok_left, s, 0.0)
            elif dx == 1:
                s = jnp.where(ok_right, s, 0.0)
            pieces.append(s)
    cols = jnp.concatenate(pieces, axis=-1).astype(jnp.bfloat16)   # (m, 9*Cin)
    acc = jnp.dot(cols, w_ref[...], preferred_element_type=jnp.float32)
    return jnp.maximum(acc + b_ref[...], 0.0)


def _maxpool2x2(src_ref, hc, wc, xbuf, dst_ref, dst_halo):
    """2x2 max pool of (hc*wc, C) rows into dst rows [dst_halo, dst_halo + hc*wc/4)."""
    wp, hp = wc // 2, hc // 2
    # x-pool: two whole-buffer stride-2 loads + one max (rows (y, 2j) and (y, 2j+1)).
    xbuf[...] = jnp.maximum(src_ref[pl.ds(0, hc * wp, stride=2), :],
                            src_ref[pl.ds(1, hc * wp, stride=2), :])
    # y-pool: pairwise max of consecutive wp-row blocks; one aligned store at the end.
    blocks = [jnp.maximum(xbuf[pl.ds((2 * yp) * wp, wp), :],
                          xbuf[pl.ds((2 * yp + 1) * wp, wp), :])
              for yp in range(hp)]
    dst_ref[pl.ds(dst_halo, hp * wp), :] = jnp.concatenate(blocks, axis=0)


# ----------------------------- fused conv-encoder kernel ----------------------

def _encoder_kernel(hgt, wid,
                    x_ref, w1_ref, b1_ref, w2_ref, b2_ref, w3_ref, b3_ref,
                    img_ref,
                    pad0, cbuf1, xbuf1, pad1, cbuf2, xbuf2, pad2):
    halo0 = _halo(wid)
    halo1 = _halo(wid // 2)
    halo2 = _halo(wid // 4)
    hw = hgt * wid

    # Scratch is uninitialized / persists across grid steps; zero only the halo rows.
    # (Done unconditionally so it is also correct when the "parallel" batch axis is
    #  split across TensorCores — each core zeroes its own scratch.)
    _zero_halos(pad0, halo0, hw)
    _zero_halos(pad1, halo1, hw // 4)
    _zero_halos(pad2, halo2, hw // 16)

    # stage 0: place the (H*W, Cin) input rows inside the halo'd scratch.
    pad0[pl.ds(halo0, hw), :] = x_ref[0]

    # conv1 (Cin -> 16) + ReLU, then 2x2 maxpool into the next halo'd scratch.
    cbuf1[...] = _conv3x3_relu(pad0, hgt, wid, halo0, w1_ref, b1_ref)
    _maxpool2x2(cbuf1, hgt, wid, xbuf1, pad1, halo1)

    # conv2 (16 -> 32) + ReLU + 2x2 maxpool.
    cbuf2[...] = _conv3x3_relu(pad1, hgt // 2, wid // 2, halo1, w2_ref, b2_ref)
    _maxpool2x2(cbuf2, hgt // 2, wid // 2, xbuf2, pad2, halo2)

    # conv3 (32 -> 64) + ReLU: rows ordered (y, x), channels on lanes.
    img_ref[0] = _conv3x3_relu(pad2, hgt // 4, wid // 4, halo2, w3_ref, b3_ref)


# ----------------------------- inventory MLP kernel ---------------------------

def _inventory_kernel(inv_ref, wi1_ref, bi1_ref, wi2_ref, bi2_ref, out_ref):
    """Linear(16,64)+ReLU, Linear(64,64)+ReLU for the WHOLE batch in one shot (M=N)."""
    iv = inv_ref[...].astype(jnp.bfloat16)                                  # (N, 16)
    h = jnp.dot(iv, wi1_ref[...], preferred_element_type=jnp.float32) + bi1_ref[...]
    h = jnp.maximum(h, 0.0).astype(jnp.bfloat16)
    e = jnp.dot(h, wi2_ref[...], preferred_element_type=jnp.float32) + bi2_ref[...]
    out_ref[...] = jnp.maximum(e, 0.0)


# ----------------------------- params ------------------------------------------

def init_params(key, channel):
    """Conv weights are stored pre-flattened as (9*Cin, Cout) bf16 — the im2col layout.
    (A PyTorch Conv2d weight (Cout,Cin,3,3) maps via w.transpose(2,3,1,0).reshape(9*Cin,Cout).)
    """
    ks = jax.random.split(key, 10)
    f32, bf16 = jnp.float32, jnp.bfloat16

    def conv_w(k, cin, cout):
        w = jax.random.normal(k, (3, 3, cin, cout), f32) * (9 * cin) ** -0.5
        return w.reshape(9 * cin, cout).astype(bf16)

    def lin_w(k, fin, fout):
        w = jax.random.normal(k, (fin, fout), f32) * fin ** -0.5
        return w.astype(bf16)

    return {
        'w1': conv_w(ks[0], channel, 16), 'b1': 0.01 * jax.random.normal(ks[1], (1, 16), f32),
        'w2': conv_w(ks[2], 16, 32),      'b2': 0.01 * jax.random.normal(ks[3], (1, 32), f32),
        'w3': conv_w(ks[4], 32, 64),      'b3': 0.01 * jax.random.normal(ks[5], (1, 64), f32),
        'wi1': lin_w(ks[6], INVENTORY_SIZE, 64),
        'bi1': 0.01 * jax.random.normal(ks[7], (1, 64), f32),
        'wi2': lin_w(ks[8], 64, 64),
        'bi2': 0.01 * jax.random.normal(ks[9], (1, 64), f32),
    }


# ----------------------------- forward -----------------------------------------

def nnbase_forward(params, obs_nchw, inventory):
    """obs_nchw: (N,C,H,W) f32; inventory: (N,16) f32 -> (N, 64*H/4*W/4 + 64) f32."""
    N, C, H, W = obs_nchw.shape
    assert H % 4 == 0 and W % 4 == 0 and (W & (W - 1)) == 0
    HW = H * W
    H4, W4 = H // 4, W // 4
    conv_output_size = 64 * H4 * W4

    halo0, halo1, halo2 = _halo(W), _halo(W // 2), _halo(W // 4)

    # Tiny XLA glue: NCHW -> rows ordered (y, x) with channels on lanes.
    x_rows = jnp.transpose(obs_nchw, (0, 2, 3, 1)).reshape(N, HW, C)

    kernel = functools.partial(_encoder_kernel, H, W)

    img = pl.pallas_call(
        kernel,
        grid=(N,),
        in_specs=[
            pl.BlockSpec((1, HW, C), lambda i: (i, 0, 0)),        # image rows (per step)
            pl.BlockSpec((9 * C, 16), lambda i: (0, 0)),          # w1 (im2col-flat)
            pl.BlockSpec((1, 16), lambda i: (0, 0)),              # b1
            pl.BlockSpec((9 * 16, 32), lambda i: (0, 0)),         # w2
            pl.BlockSpec((1, 32), lambda i: (0, 0)),              # b2
            pl.BlockSpec((9 * 32, 64), lambda i: (0, 0)),         # w3
            pl.BlockSpec((1, 64), lambda i: (0, 0)),              # b3
        ],
        out_shape=jax.ShapeDtypeStruct((N, H4 * W4, 64), jnp.float32),
        out_specs=pl.BlockSpec((1, H4 * W4, 64), lambda i: (i, 0, 0)),
        scratch_shapes=[
            pltpu.VMEM((2 * halo0 + HW, C), jnp.float32),                 # pad0 (halo'd input)
            pltpu.VMEM((HW, 16), jnp.float32),                            # conv1 out
            pltpu.VMEM((HW // 2, 16), jnp.float32),                       # conv1 x-pooled
            pltpu.VMEM((2 * halo1 + HW // 4, 16), jnp.float32),           # pad1
            pltpu.VMEM((HW // 4, 32), jnp.float32),                       # conv2 out
            pltpu.VMEM((HW // 8, 32), jnp.float32),                       # conv2 x-pooled
            pltpu.VMEM((2 * halo2 + HW // 16, 32), jnp.float32),          # pad2
        ],
        compiler_params=pltpu.CompilerParams(
            dimension_semantics=("parallel",)),   # batch axis -> both TCs on v7x
    )(x_rows, params['w1'], params['b1'], params['w2'], params['b2'],
      params['w3'], params['b3'])

    # Inventory MLP for the whole batch in one shot (M=N matmuls, single small call).
    inv_feat = pl.pallas_call(
        _inventory_kernel,
        out_shape=jax.ShapeDtypeStruct((N, 64), jnp.float32),
    )(inventory, params['wi1'], params['bi1'], params['wi2'], params['bi2'])

    # Tiny XLA glue: PyTorch NCHW-order flatten of conv3 output + concat.
    img_feat = jnp.transpose(img, (0, 2, 1)).reshape(N, conv_output_size)
    return jnp.concatenate([img_feat, inv_feat], axis=-1)


# ----------------------------- pure-XLA reference ------------------------------

def _reference_forward(params, obs_nchw, inventory):
    """f32 reference using the same bf16 weights (for a loose correctness check)."""
    def conv(x, wf, b, cin, cout):
        w = wf.astype(jnp.float32).reshape(3, 3, cin, cout)
        y = jax.lax.conv_general_dilated(
            x, w, window_strides=(1, 1), padding='SAME',
            dimension_numbers=('NCHW', 'HWIO', 'NCHW'))
        return jnp.maximum(y + b.reshape(1, cout, 1, 1), 0.0)

    def pool(x):
        return jax.lax.reduce_window(x, -jnp.inf, jax.lax.max,
                                     (1, 1, 2, 2), (1, 1, 2, 2), 'VALID')

    c = obs_nchw.shape[1]
    y = pool(conv(obs_nchw, params['w1'], params['b1'], c, 16))
    y = pool(conv(y, params['w2'], params['b2'], 16, 32))
    y = conv(y, params['w3'], params['b3'], 32, 64)
    img_feat = y.reshape(y.shape[0], -1)

    h = jnp.maximum(inventory @ params['wi1'].astype(jnp.float32) + params['bi1'], 0.0)
    e = jnp.maximum(h @ params['wi2'].astype(jnp.float32) + params['bi2'], 0.0)
    return jnp.concatenate([img_feat, e], axis=-1)


# ----------------------------- main --------------------------------------------

if __name__ == "__main__":
    # obs_space = (batch, channels, height, width)
    obs_space = (2, 4, 16, 16)
    action_space = 17  # unused by the encoder

    batch, channel, height, width = obs_space
    conv_output_size = 64 * (height // 4) * (width // 4)   # 64 * 4 * 4 = 1024
    embedding_size = conv_output_size + 64                 # 1088

    key = jax.random.PRNGKey(0)
    k_param, k_obs, k_inv = jax.random.split(key, 3)

    params = init_params(k_param, channel)
    obs = jax.random.normal(k_obs, (batch, channel, height, width), jnp.float32)
    inventory = jax.random.uniform(k_inv, (batch, INVENTORY_SIZE), jnp.float32, 0.0, 9.0)

    fwd = jax.jit(nnbase_forward)
    out = jax.block_until_ready(fwd(params, obs, inventory))
    assert out.shape == (batch, embedding_size), out.shape
    assert out.dtype == jnp.float32
    assert bool(jnp.isfinite(out).all())

    # Loose check vs. a pure-XLA reference (bf16 matmul operands -> ~1e-2 deviations).
    ref = _reference_forward(params, obs, inventory)
    err = float(jnp.max(jnp.abs(out - ref)))
    assert err < 0.2, f"max abs error vs reference = {err}"

    print("KERNEL_OK")
</pallas_src>

<mosaic_0001>
module attributes {stable_mosaic.version = 11 : i64} {
  func.func @_encoder_kernel(%arg0: i32, %arg1: memref<1x256x4xf32, #tpu.memory_space<vmem>>, %arg2: memref<36x16xbf16, #tpu.memory_space<vmem>>, %arg3: memref<1x16xf32, #tpu.memory_space<vmem>>, %arg4: memref<144x32xbf16, #tpu.memory_space<vmem>>, %arg5: memref<1x32xf32, #tpu.memory_space<vmem>>, %arg6: memref<288x64xbf16, #tpu.memory_space<vmem>>, %arg7: memref<1x64xf32, #tpu.memory_space<vmem>>, %arg8: memref<1x16x64xf32, #tpu.memory_space<vmem>>, %arg9: memref<304x4xf32, #tpu.memory_space<vmem>>, %arg10: memref<256x16xf32, #tpu.memory_space<vmem>>, %arg11: memref<128x16xf32, #tpu.memory_space<vmem>>, %arg12: memref<96x16xf32, #tpu.memory_space<vmem>>, %arg13: memref<64x32xf32, #tpu.memory_space<vmem>>, %arg14: memref<32x32xf32, #tpu.memory_space<vmem>>, %arg15: memref<32x32xf32, #tpu.memory_space<vmem>>) attributes {dimension_semantics = [#tpu.dimension_semantics<parallel>], iteration_bounds = array<i64: 2>, scalar_prefetch = 0 : i64, scratch_operands = 7 : i64, tpu.core_type = #tpu.core_type<tc>, window_params = [{transform_indices = @transform_0, window_bounds = array<i64: 1, 256, 4>}, {pipeline_mode = #tpu.pipeline_mode<synchronous>, transform_indices = @transform_1, window_bounds = array<i64: 36, 16>}, {pipeline_mode = #tpu.pipeline_mode<synchronous>, transform_indices = @transform_2, window_bounds = array<i64: 1, 16>}, {pipeline_mode = #tpu.pipeline_mode<synchronous>, transform_indices = @transform_3, window_bounds = array<i64: 144, 32>}, {pipeline_mode = #tpu.pipeline_mode<synchronous>, transform_indices = @transform_4, window_bounds = array<i64: 1, 32>}, {pipeline_mode = #tpu.pipeline_mode<synchronous>, transform_indices = @transform_5, window_bounds = array<i64: 288, 64>}, {pipeline_mode = #tpu.pipeline_mode<synchronous>, transform_indices = @transform_6, window_bounds = array<i64: 1, 64>}, {transform_indices = @transform_7, window_bounds = array<i64: 1, 16, 64>}]} {
    %cst = arith.constant 0.000000e+00 : f32
    %0 = vector.broadcast %cst : f32 to vector<24x4xf32>
    %c0 = arith.constant 0 : index
    %c0_0 = arith.constant 0 : index
    %1 = vector.load %arg9[%c0, %c0_0] : memref<304x4xf32, #tpu.memory_space<vmem>>, vector<24x4xf32>
    tpu.vector_store %arg9[%c0, %c0_0], %0 {strides = array<i32>} : memref<304x4xf32, #tpu.memory_space<vmem>>, vector<24x4xf32>,
    %c280 = arith.constant 280 : index
    %c0_1 = arith.constant 0 : index
    %2 = vector.load %arg9[%c280, %c0_1] : memref<304x4xf32, #tpu.memory_space<vmem>>, vector<24x4xf32>
    tpu.vector_store %arg9[%c280, %c0_1], %0 {strides = array<i32>} : memref<304x4xf32, #tpu.memory_space<vmem>>, vector<24x4xf32>,
    %cst_2 = arith.constant 0.000000e+00 : f32
    %3 = vector.broadcast %cst_2 : f32 to vector<16x16xf32>
    %c0_3 = arith.constant 0 : index
    %c0_4 = arith.constant 0 : index
    %4 = vector.load %arg12[%c0_3, %c0_4] : memref<96x16xf32, #tpu.memory_space<vmem>>, vector<16x16xf32>
    tpu.vector_store %arg12[%c0_3, %c0_4], %3 {strides = array<i32>} : memref<96x16xf32, #tpu.memory_space<vmem>>, vector<16x16xf32>,
    %c80 = arith.constant 80 : index
    %c0_5 = arith.constant 0 : index
    %5 = vector.load %arg12[%c80, %c0_5] : memref<96x16xf32, #tpu.memory_space<vmem>>, vector<16x16xf32>
    tpu.vector_store %arg12[%c80, %c0_5], %3 {strides = array<i32>} : memref<96x16xf32, #tpu.memory_space<vmem>>, vector<16x16xf32>,
    %cst_6 = arith.constant 0.000000e+00 : f32
    %6 = vector.broadcast %cst_6 : f32 to vector<8x32xf32>
    %c0_7 = arith.constant 0 : index
    %c0_8 = arith.constant 0 : index
    %7 = vector.load %arg15[%c0_7, %c0_8] : memref<32x32xf32, #tpu.memory_space<vmem>>, vector<8x32xf32>
    tpu.vector_store %arg15[%c0_7, %c0_8], %6 {strides = array<i32>} : memref<32x32xf32, #tpu.memory_space<vmem>>, vector<8x32xf32>,
    %c24 = arith.constant 24 : index
    %c0_9 = arith.constant 0 : index
    %8 = vector.load %arg15[%c24, %c0_9] : memref<32x32xf32, #tpu.memory_space<vmem>>, vector<8x32xf32>
    tpu.vector_store %arg15[%c24, %c0_9], %6 {strides = array<i32>} : memref<32x32xf32, #tpu.memory_space<vmem>>, vector<8x32xf32>,
    %c0_10 = arith.constant 0 : index
    %c0_11 = arith.constant 0 : index
    %c0_12 = arith.constant 0 : index
    %9 = vector.load %arg1[%c0_10, %c0_11, %c0_12] : memref<1x256x4xf32, #tpu.memory_space<vmem>>, vector<1x256x4xf32>
    %10 = vector.shape_cast %9 : vector<1x256x4xf32> to vector<256x4xf32>
    %c24_13 = arith.constant 24 : index
    %c0_14 = arith.constant 0 : index
    %11 = vector.load %arg9[%c24_13, %c0_14] : memref<304x4xf32, #tpu.memory_space<vmem>>, vector<256x4xf32>
    tpu.vector_store %arg9[%c24_13, %c0_14], %10 {strides = array<i32>} : memref<304x4xf32, #tpu.memory_space<vmem>>, vector<256x4xf32>,
    %12 = tpu.iota {dimensions = array<i32: 0>} : vector<256x1xi32>
    %c15_i32 = arith.constant 15 : i32
    %13 = vector.broadcast %c15_i32 : i32 to vector<256x1xi32>
    %14 = arith.andi %12, %13 : vector<256x1xi32>
    %c1_i32 = arith.constant 1 : i32
    %15 = vector.broadcast %c1_i32 : i32 to vector<256x1xi32>
    %16 = arith.cmpi sge, %14, %15 : vector<256x1xi32>
    %c15_i32_15 = arith.constant 15 : i32
    %17 = vector.broadcast %c15_i32_15 : i32 to vector<256x1xi32>
    %18 = arith.cmpi slt, %14, %17 : vector<256x1xi32>
    %c7 = arith.constant 7 : index
    %c0_16 = arith.constant 0 : index
    %19 = vector.load %arg9[%c7, %c0_16] : memref<304x4xf32, #tpu.memory_space<vmem>>, vector<256x4xf32>
    %cst_17 = arith.constant 0.000000e+00 : f32
    %20 = vector.shape_cast %16 : vector<256x1xi1> to vector<256x1xi1>
    %21 = vector.broadcast %20 : vector<256x1xi1> to vector<256x4xi1>
    %22 = vector.broadcast %cst_17 : f32 to vector<256x4xf32>
    %23 = arith.select %21, %19, %22 : vector<256x4xi1>, vector<256x4xf32>
    %c8 = arith.constant 8 : index
    %c0_18 = arith.constant 0 : index
    %24 = vector.load %arg9[%c8, %c0_18] : memref<304x4xf32, #tpu.memory_space<vmem>>, vector<256x4xf32>
    %c9 = arith.constant 9 : index
    %c0_19 = arith.constant 0 : index
    %25 = vector.load %arg9[%c9, %c0_19] : memref<304x4xf32, #tpu.memory_space<vmem>>, vector<256x4xf32>
    %cst_20 = arith.constant 0.000000e+00 : f32
    %26 = vector.shape_cast %18 : vector<256x1xi1> to vector<256x1xi1>
    %27 = vector.broadcast %26 : vector<256x1xi1> to vector<256x4xi1>
    %28 = vector.broadcast %cst_20 : f32 to vector<256x4xf32>
    %29 = arith.select %27, %25, %28 : vector<256x4xi1>, vector<256x4xf32>
    %c23 = arith.constant 23 : index
    %c0_21 = arith.constant 0 : index
    %30 = vector.load %arg9[%c23, %c0_21] : memref<304x4xf32, #tpu.memory_space<vmem>>, vector<256x4xf32>
    %cst_22 = arith.constant 0.000000e+00 : f32
    %31 = vector.shape_cast %16 : vector<256x1xi1> to vector<256x1xi1>
    %32 = vector.broadcast %31 : vector<256x1xi1> to vector<256x4xi1>
    %33 = vector.broadcast %cst_22 : f32 to vector<256x4xf32>
    %34 = arith.select %32, %30, %33 : vector<256x4xi1>, vector<256x4xf32>
    %c24_23 = arith.constant 24 : index
    %c0_24 = arith.constant 0 : index
    %35 = vector.load %arg9[%c24_23, %c0_24] : memref<304x4xf32, #tpu.memory_space<vmem>>, vector<256x4xf32>
    %c25 = arith.constant 25 : index
    %c0_25 = arith.constant 0 : index
    %36 = vector.load %arg9[%c25, %c0_25] : memref<304x4xf32, #tpu.memory_space<vmem>>, vector<256x4xf32>
    %cst_26 = arith.constant 0.000000e+00 : f32
    %37 = vector.shape_cast %18 : vector<256x1xi1> to vector<256x1xi1>
    %38 = vector.broadcast %37 : vector<256x1xi1> to vector<256x4xi1>
    %39 = vector.broadcast %cst_26 : f32 to vector<256x4xf32>
    %40 = arith.select %38, %36, %39 : vector<256x4xi1>, vector<256x4xf32>
    %c39 = arith.constant 39 : index
    %c0_27 = arith.constant 0 : index
    %41 = vector.load %arg9[%c39, %c0_27] : memref<304x4xf32, #tpu.memory_space<vmem>>, vector<256x4xf32>
    %cst_28 = arith.constant 0.000000e+00 : f32
    %42 = vector.shape_cast %16 : vector<256x1xi1> to vector<256x1xi1>
    %43 = vector.broadcast %42 : vector<256x1xi1> to vector<256x4xi1>
    %44 = vector.broadcast %cst_28 : f32 to vector<256x4xf32>
    %45 = arith.select %43, %41, %44 : vector<256x4xi1>, vector<256x4xf32>
    %c40 = arith.constant 40 : index
    %c0_29 = arith.constant 0 : index
    %46 = vector.load %arg9[%c40, %c0_29] : memref<304x4xf32, #tpu.memory_space<vmem>>, vector<256x4xf32>
    %c41 = arith.constant 41 : index
    %c0_30 = arith.constant 0 : index
    %47 = vector.load %arg9[%c41, %c0_30] : memref<304x4xf32, #tpu.memory_space<vmem>>, vector<256x4xf32>
    %cst_31 = arith.constant 0.000000e+00 : f32
    %48 = vector.shape_cast %18 : vector<256x1xi1> to vector<256x1xi1>
    %49 = vector.broadcast %48 : vector<256x1xi1> to vector<256x4xi1>
    %50 = vector.broadcast %cst_31 : f32 to vector<256x4xf32>
    %51 = arith.select %49, %47, %50 : vector<256x4xi1>, vector<256x4xf32>
    %52 = tpu.concatenate %23, %24, %29, %34, %35, %40, %45, %46, %51 in 1 : vector<256x4xf32>, vector<256x4xf32>, vector<256x4xf32>, vector<256x4xf32>, vector<256x4xf32>, vector<256x4xf32>, vector<256x4xf32>, vector<256x4xf32>, vector<256x4xf32> -> vector<256x36xf32>
    %53 = arith.truncf %52 : vector<256x36xf32> to vector<256x36xbf16>
    %c0_32 = arith.constant 0 : index
    %c0_33 = arith.constant 0 : index
    %54 = vector.load %arg2[%c0_32, %c0_33] : memref<36x16xbf16, #tpu.memory_space<vmem>>, vector<36x16xbf16>
    %cst_34 = arith.constant dense<0.000000e+00> : vector<256x16xf32>
    %55 = tpu.matmul %53, %54, %cst_34 {dimension_numbers = #tpu.dot_dimension_numbers<[1], [0], [0], [1], [0, 0, 1, 1], [], []>} : vector<256x36xbf16>, vector<36x16xbf16>, vector<256x16xf32> -> vector<256x16xf32>
    %c0_35 = arith.constant 0 : index
    %c0_36 = arith.constant 0 : index
    %56 = vector.load %arg3[%c0_35, %c0_36] : memref<1x16xf32, #tpu.memory_space<vmem>>, vector<1x16xf32>
    %57 = vector.broadcast %56 : vector<1x16xf32> to vector<256x16xf32>
    %58 = arith.addf %55, %57 : vector<256x16xf32>
    %cst_37 = arith.constant 0.000000e+00 : f32
    %59 = vector.broadcast %cst_37 : f32 to vector<256x16xf32>
    %60 = arith.maximumf %58, %59 : vector<256x16xf32>
    %c0_38 = arith.constant 0 : index
    %c0_39 = arith.constant 0 : index
    %61 = vector.load %arg10[%c0_38, %c0_39] : memref<256x16xf32, #tpu.memory_space<vmem>>, vector<256x16xf32>
    tpu.vector_store %arg10[%c0_38, %c0_39], %60 {strides = array<i32>} : memref<256x16xf32, #tpu.memory_space<vmem>>, vector<256x16xf32>,
    %c0_40 = arith.constant 0 : index
    %c0_41 = arith.constant 0 : index
    %62 = tpu.strided_load %arg10[%c0_40, %c0_41] {strides = array<i32: 2, 1>} : memref<256x16xf32, #tpu.memory_space<vmem>>, vector<128x16xf32>
    %c1 = arith.constant 1 : index
    %c0_42 = arith.constant 0 : index
    %63 = tpu.strided_load %arg10[%c1, %c0_42] {strides = array<i32: 2, 1>} : memref<256x16xf32, #tpu.memory_space<vmem>>, vector<128x16xf32>
    %64 = arith.maximumf %62, %63 : vector<128x16xf32>
    %c0_43 = arith.constant 0 : index
    %c0_44 = arith.constant 0 : index
    %65 = vector.load %arg11[%c0_43, %c0_44] : memref<128x16xf32, #tpu.memory_space<vmem>>, vector<128x16xf32>
    tpu.vector_store %arg11[%c0_43, %c0_44], %64 {strides = array<i32>} : memref<128x16xf32, #tpu.memory_space<vmem>>, vector<128x16xf32>,
    %c0_45 = arith.constant 0 : index
    %c0_46 = arith.constant 0 : index
    %66 = vector.load %arg11[%c0_45, %c0_46] : memref<128x16xf32, #tpu.memory_space<vmem>>, vector<8x16xf32>
    %c8_47 = arith.constant 8 : index
    %c0_48 = arith.constant 0 : index
    %67 = vector.load %arg11[%c8_47, %c0_48] : memref<128x16xf32, #tpu.memory_space<vmem>>, vector<8x16xf32>
    %68 = arith.maximumf %66, %67 : vector<8x16xf32>
    %c16 = arith.constant 16 : index
    %c0_49 = arith.constant 0 : index
    %69 = vector.load %arg11[%c16, %c0_49] : memref<128x16xf32, #tpu.memory_space<vmem>>, vector<8x16xf32>
    %c24_50 = arith.constant 24 : index
    %c0_51 = arith.constant 0 : index
    %70 = vector.load %arg11[%c24_50, %c0_51] : memref<128x16xf32, #tpu.memory_space<vmem>>, vector<8x16xf32>
    %71 = arith.maximumf %69, %70 : vector<8x16xf32>
    %c32 = arith.constant 32 : index
    %c0_52 = arith.constant 0 : index
    %72 = vector.load %arg11[%c32, %c0_52] : memref<128x16xf32, #tpu.memory_space<vmem>>, vector<8x16xf32>
    %c40_53 = arith.constant 40 : index
    %c0_54 = arith.constant 0 : index
    %73 = vector.load %arg11[%c40_53, %c0_54] : memref<128x16xf32, #tpu.memory_space<vmem>>, vector<8x16xf32>
    %74 = arith.maximumf %72, %73 : vector<8x16xf32>
    %c48 = arith.constant 48 : index
    %c0_55 = arith.constant 0 : index
    %75 = vector.load %arg11[%c48, %c0_55] : memref<128x16xf32, #tpu.memory_space<vmem>>, vector<8x16xf32>
    %c56 = arith.constant 56 : index
    %c0_56 = arith.constant 0 : index
    %76 = vector.load %arg11[%c56, %c0_56] : memref<128x16xf32, #tpu.memory_space<vmem>>, vector<8x16xf32>
    %77 = arith.maximumf %75, %76 : vector<8x16xf32>
    %c64 = arith.constant 64 : index
    %c0_57 = arith.constant 0 : index
    %78 = vector.load %arg11[%c64, %c0_57] : memref<128x16xf32, #tpu.memory_space<vmem>>, vector<8x16xf32>
    %c72 = arith.constant 72 : index
    %c0_58 = arith.constant 0 : index
    %79 = vector.load %arg11[%c72, %c0_58] : memref<128x16xf32, #tpu.memory_space<vmem>>, vector<8x16xf32>
    %80 = arith.maximumf %78, %79 : vector<8x16xf32>
    %c80_59 = arith.constant 80 : index
    %c0_60 = arith.constant 0 : index
    %81 = vector.load %arg11[%c80_59, %c0_60] : memref<128x16xf32, #tpu.memory_space<vmem>>, vector<8x16xf32>
    %c88 = arith.constant 88 : index
    %c0_61 = arith.constant 0 : index
    %82 = vector.load %arg11[%c88, %c0_61] : memref<128x16xf32, #tpu.memory_space<vmem>>, vector<8x16xf32>
    %83 = arith.maximumf %81, %82 : vector<8x16xf32>
    %c96 = arith.constant 96 : index
    %c0_62 = arith.constant 0 : index
    %84 = vector.load %arg11[%c96, %c0_62] : memref<128x16xf32, #tpu.memory_space<vmem>>, vector<8x16xf32>
    %c104 = arith.constant 104 : index
    %c0_63 = arith.constant 0 : index
    %85 = vector.load %arg11[%c104, %c0_63] : memref<128x16xf32, #tpu.memory_space<vmem>>, vector<8x16xf32>
    %86 = arith.maximumf %84, %85 : vector<8x16xf32>
    %c112 = arith.constant 112 : index
    %c0_64 = arith.constant 0 : index
    %87 = vector.load %arg11[%c112, %c0_64] : memref<128x16xf32, #tpu.memory_space<vmem>>, vector<8x16xf32>
    %c120 = arith.constant 120 : index
    %c0_65 = arith.constant 0 : index
    %88 = vector.load %arg11[%c120, %c0_65] : memref<128x16xf32, #tpu.memory_space<vmem>>, vector<8x16xf32>
    %89 = arith.maximumf %87, %88 : vector<8x16xf32>
    %90 = tpu.concatenate %68, %71, %74, %77, %80, %83, %86, %89 in 0 : vector<8x16xf32>, vector<8x16xf32>, vector<8x16xf32>, vector<8x16xf32>, vector<8x16xf32>, vector<8x16xf32>, vector<8x16xf32>, vector<8x16xf32> -> vector<64x16xf32>
    %c16_66 = arith.constant 16 : index
    %c0_67 = arith.constant 0 : index
    %91 = vector.load %arg12[%c16_66, %c0_67] : memref<96x16xf32, #tpu.memory_space<vmem>>, vector<64x16xf32>
    tpu.vector_store %arg12[%c16_66, %c0_67], %90 {strides = array<i32>} : memref<96x16xf32, #tpu.memory_space<vmem>>, vector<64x16xf32>,
    %92 = tpu.iota {dimensions = array<i32: 0>} : vector<64x1xi32>
    %c7_i32 = arith.constant 7 : i32
    %93 = vector.broadcast %c7_i32 : i32 to vector<64x1xi32>
    %94 = arith.andi %92, %93 : vector<64x1xi32>
    %c1_i32_68 = arith.constant 1 : i32
    %95 = vector.broadcast %c1_i32_68 : i32 to vector<64x1xi32>
    %96 = arith.cmpi sge, %94, %95 : vector<64x1xi32>
    %c7_i32_69 = arith.constant 7 : i32
    %97 = vector.broadcast %c7_i32_69 : i32 to vector<64x1xi32>
    %98 = arith.cmpi slt, %94, %97 : vector<64x1xi32>
    %c7_70 = arith.constant 7 : index
    %c0_71 = arith.constant 0 : index
    %99 = vector.load %arg12[%c7_70, %c0_71] : memref<96x16xf32, #tpu.memory_space<vmem>>, vector<64x16xf32>
    %cst_72 = arith.constant 0.000000e+00 : f32
    %100 = vector.shape_cast %96 : vector<64x1xi1> to vector<64x1xi1>
    %101 = vector.broadcast %100 : vector<64x1xi1> to vector<64x16xi1>
    %102 = vector.broadcast %cst_72 : f32 to vector<64x16xf32>
    %103 = arith.select %101, %99, %102 : vector<64x16xi1>, vector<64x16xf32>
    %c8_73 = arith.constant 8 : index
    %c0_74 = arith.constant 0 : index
    %104 = vector.load %arg12[%c8_73, %c0_74] : memref<96x16xf32, #tpu.memory_space<vmem>>, vector<64x16xf32>
    %c9_75 = arith.constant 9 : index
    %c0_76 = arith.constant 0 : index
    %105 = vector.load %arg12[%c9_75, %c0_76] : memref<96x16xf32, #tpu.memory_space<vmem>>, vector<64x16xf32>
    %cst_77 = arith.constant 0.000000e+00 : f32
    %106 = vector.shape_cast %98 : vector<64x1xi1> to vector<64x1xi1>
    %107 = vector.broadcast %106 : vector<64x1xi1> to vector<64x16xi1>
    %108 = vector.broadcast %cst_77 : f32 to vector<64x16xf32>
    %109 = arith.select %107, %105, %108 : vector<64x16xi1>, vector<64x16xf32>
    %c15 = arith.constant 15 : index
    %c0_78 = arith.constant 0 : index
    %110 = vector.load %arg12[%c15, %c0_78] : memref<96x16xf32, #tpu.memory_space<vmem>>, vector<64x16xf32>
    %cst_79 = arith.constant 0.000000e+00 : f32
    %111 = vector.shape_cast %96 : vector<64x1xi1> to vector<64x1xi1>
    %112 = vector.broadcast %111 : vector<64x1xi1> to vector<64x16xi1>
    %113 = vector.broadcast %cst_79 : f32 to vector<64x16xf32>
    %114 = arith.select %112, %110, %113 : vector<64x16xi1>, vector<64x16xf32>
    %c16_80 = arith.constant 16 : index
    %c0_81 = arith.constant 0 : index
    %115 = vector.load %arg12[%c16_80, %c0_81] : memref<96x16xf32, #tpu.memory_space<vmem>>, vector<64x16xf32>
    %c17 = arith.constant 17 : index
    %c0_82 = arith.constant 0 : index
    %116 = vector.load %arg12[%c17, %c0_82] : memref<96x16xf32, #tpu.memory_space<vmem>>, vector<64x16xf32>
    %cst_83 = arith.constant 0.000000e+00 : f32
    %117 = vector.shape_cast %98 : vector<64x1xi1> to vector<64x1xi1>
    %118 = vector.broadcast %117 : vector<64x1xi1> to vector<64x16xi1>
    %119 = vector.broadcast %cst_83 : f32 to vector<64x16xf32>
    %120 = arith.select %118, %116, %119 : vector<64x16xi1>, vector<64x16xf32>
    %c23_84 = arith.constant 23 : index
    %c0_85 = arith.constant 0 : index
    %121 = vector.load %arg12[%c23_84, %c0_85] : memref<96x16xf32, #tpu.memory_space<vmem>>, vector<64x16xf32>
    %cst_86 = arith.constant 0.000000e+00 : f32
    %122 = vector.shape_cast %96 : vector<64x1xi1> to vector<64x1xi1>
    %123 = vector.broadcast %122 : vector<64x1xi1> to vector<64x16xi1>
    %124 = vector.broadcast %cst_86 : f32 to vector<64x16xf32>
    %125 = arith.select %123, %121, %124 : vector<64x16xi1>, vector<64x16xf32>
    %c24_87 = arith.constant 24 : index
    %c0_88 = arith.constant 0 : index
    %126 = vector.load %arg12[%c24_87, %c0_88] : memref<96x16xf32, #tpu.memory_space<vmem>>, vector<64x16xf32>
    %c25_89 = arith.constant 25 : index
    %c0_90 = arith.constant 0 : index
    %127 = vector.load %arg12[%c25_89, %c0_90] : memref<96x16xf32, #tpu.memory_space<vmem>>, vector<64x16xf32>
    %cst_91 = arith.constant 0.000000e+00 : f32
    %128 = vector.shape_cast %98 : vector<64x1xi1> to vector<64x1xi1>
    %129 = vector.broadcast %128 : vector<64x1xi1> to vector<64x16xi1>
    %130 = vector.broadcast %cst_91 : f32 to vector<64x16xf32>
    %131 = arith.select %129, %127, %130 : vector<64x16xi1>, vector<64x16xf32>
    %132 = tpu.concatenate %103, %104, %109, %114, %115, %120, %125, %126, %131 in 1 : vector<64x16xf32>, vector<64x16xf32>, vector<64x16xf32>, vector<64x16xf32>, vector<64x16xf32>, vector<64x16xf32>, vector<64x16xf32>, vector<64x16xf32>, vector<64x16xf32> -> vector<64x144xf32>
    %133 = arith.truncf %132 : vector<64x144xf32> to vector<64x144xbf16>
    %c0_92 = arith.constant 0 : index
    %c0_93 = arith.constant 0 : index
    %134 = vector.load %arg4[%c0_92, %c0_93] : memref<144x32xbf16, #tpu.memory_space<vmem>>, vector<144x32xbf16>
    %cst_94 = arith.constant dense<0.000000e+00> : vector<64x32xf32>
    %135 = tpu.matmul %133, %134, %cst_94 {dimension_numbers = #tpu.dot_dimension_numbers<[1], [0], [0], [1], [0, 0, 1, 1], [], []>} : vector<64x144xbf16>, vector<144x32xbf16>, vector<64x32xf32> -> vector<64x32xf32>
    %c0_95 = arith.constant 0 : index
    %c0_96 = arith.constant 0 : index
    %136 = vector.load %arg5[%c0_95, %c0_96] : memref<1x32xf32, #tpu.memory_space<vmem>>, vector<1x32xf32>
    %137 = vector.broadcast %136 : vector<1x32xf32> to vector<64x32xf32>
    %138 = arith.addf %135, %137 : vector<64x32xf32>
    %cst_97 = arith.constant 0.000000e+00 : f32
    %139 = vector.broadcast %cst_97 : f32 to vector<64x32xf32>
    %140 = arith.maximumf %138, %139 : vector<64x32xf32>
    %c0_98 = arith.constant 0 : index
    %c0_99 = arith.constant 0 : index
    %141 = vector.load %arg13[%c0_98, %c0_99] : memref<64x32xf32, #tpu.memory_space<vmem>>, vector<64x32xf32>
    tpu.vector_store %arg13[%c0_98, %c0_99], %140 {strides = array<i32>} : memref<64x32xf32, #tpu.memory_space<vmem>>, vector<64x32xf32>,
    %c0_100 = arith.constant 0 : index
    %c0_101 = arith.constant 0 : index
    %142 = tpu.strided_load %arg13[%c0_100, %c0_101] {strides = array<i32: 2, 1>} : memref<64x32xf32, #tpu.memory_space<vmem>>, vector<32x32xf32>
    %c1_102 = arith.constant 1 : index
    %c0_103 = arith.constant 0 : index
    %143 = tpu.strided_load %arg13[%c1_102, %c0_103] {strides = array<i32: 2, 1>} : memref<64x32xf32, #tpu.memory_space<vmem>>, vector<32x32xf32>
    %144 = arith.maximumf %142, %143 : vector<32x32xf32>
    %c0_104 = arith.constant 0 : index
    %c0_105 = arith.constant 0 : index
    %145 = vector.load %arg14[%c0_104, %c0_105] : memref<32x32xf32, #tpu.memory_space<vmem>>, vector<32x32xf32>
    tpu.vector_store %arg14[%c0_104, %c0_105], %144 {strides = array<i32>} : memref<32x32xf32, #tpu.memory_space<vmem>>, vector<32x32xf32>,
    %c0_106 = arith.constant 0 : index
    %c0_107 = arith.constant 0 : index
    %146 = vector.load %arg14[%c0_106, %c0_107] : memref<32x32xf32, #tpu.memory_space<vmem>>, vector<4x32xf32>
    %c4 = arith.constant 4 : index
    %c0_108 = arith.constant 0 : index
    %147 = vector.load %arg14[%c4, %c0_108] : memref<32x32xf32, #tpu.memory_space<vmem>>, vector<4x32xf32>
    %148 = arith.maximumf %146, %147 : vector<4x32xf32>
    %c8_109 = arith.constant 8 : index
    %c0_110 = arith.constant 0 : index
    %149 = vector.load %arg14[%c8_109, %c0_110] : memref<32x32xf32, #tpu.memory_space<vmem>>, vector<4x32xf32>
    %c12 = arith.constant 12 : index
    %c0_111 = arith.constant 0 : index
    %150 = vector.load %arg14[%c12, %c0_111] : memref<32x32xf32, #tpu.memory_space<vmem>>, vector<4x32xf32>
    %151 = arith.maximumf %149, %150 : vector<4x32xf32>
    %c16_112 = arith.constant 16 : index
    %c0_113 = arith.constant 0 : index
    %152 = vector.load %arg14[%c16_112, %c0_113] : memref<32x32xf32, #tpu.memory_space<vmem>>, vector<4x32xf32>
    %c20 = arith.constant 20 : index
    %c0_114 = arith.constant 0 : index
    %153 = vector.load %arg14[%c20, %c0_114] : memref<32x32xf32, #tpu.memory_space<vmem>>, vector<4x32xf32>
    %154 = arith.maximumf %152, %153 : vector<4x32xf32>
    %c24_115 = arith.constant 24 : index
    %c0_116 = arith.constant 0 : index
    %155 = vector.load %arg14[%c24_115, %c0_116] : memref<32x32xf32, #tpu.memory_space<vmem>>, vector<4x32xf32>
    %c28 = arith.constant 28 : index
    %c0_117 = arith.constant 0 : index
    %156 = vector.load %arg14[%c28, %c0_117] : memref<32x32xf32, #tpu.memory_space<vmem>>, vector<4x32xf32>
    %157 = arith.maximumf %155, %156 : vector<4x32xf32>
    %158 = tpu.concatenate %148, %151, %154, %157 in 0 : vector<4x32xf32>, vector<4x32xf32>, vector<4x32xf32>, vector<4x32xf32> -> vector<16x32xf32>
    %c8_118 = arith.constant 8 : index
    %c0_119 = arith.constant 0 : index
    %159 = vector.load %arg15[%c8_118, %c0_119] : memref<32x32xf32, #tpu.memory_space<vmem>>, vector<16x32xf32>
    tpu.vector_store %arg15[%c8_118, %c0_119], %158 {strides = array<i32>} : memref<32x32xf32, #tpu.memory_space<vmem>>, vector<16x32xf32>,
    %160 = tpu.iota {dimensions = array<i32: 0>} : vector<16x1xi32>
    %c3_i32 = arith.constant 3 : i32
    %161 = vector.broadcast %c3_i32 : i32 to vector<16x1xi32>
    %162 = arith.andi %160, %161 : vector<16x1xi32>
    %c1_i32_120 = arith.constant 1 : i32
    %163 = vector.broadcast %c1_i32_120 : i32 to vector<16x1xi32>
    %164 = arith.cmpi sge, %162, %163 : vector<16x1xi32>
    %c3_i32_121 = arith.constant 3 : i32
    %165 = vector.broadcast %c3_i32_121 : i32 to vector<16x1xi32>
    %166 = arith.cmpi slt, %162, %165 : vector<16x1xi32>
    %c3 = arith.constant 3 : index
    %c0_122 = arith.constant 0 : index
    %167 = vector.load %arg15[%c3, %c0_122] : memref<32x32xf32, #tpu.memory_space<vmem>>, vector<16x32xf32>
    %cst_123 = arith.constant 0.000000e+00 : f32
    %168 = vector.shape_cast %164 : vector<16x1xi1> to vector<16x1xi1>
    %169 = vector.broadcast %168 : vector<16x1xi1> to vector<16x32xi1>
    %170 = vector.broadcast %cst_123 : f32 to vector<16x32xf32>
    %171 = arith.select %169, %167, %170 : vector<16x32xi1>, vector<16x32xf32>
    %c4_124 = arith.constant 4 : index
    %c0_125 = arith.constant 0 : index
    %172 = vector.load %arg15[%c4_124, %c0_125] : memref<32x32xf32, #tpu.memory_space<vmem>>, vector<16x32xf32>
    %c5 = arith.constant 5 : index
    %c0_126 = arith.constant 0 : index
    %173 = vector.load %arg15[%c5, %c0_126] : memref<32x32xf32, #tpu.memory_space<vmem>>, vector<16x32xf32>
    %cst_127 = arith.constant 0.000000e+00 : f32
    %174 = vector.shape_cast %166 : vector<16x1xi1> to vector<16x1xi1>
    %175 = vector.broadcast %174 : vector<16x1xi1> to vector<16x32xi1>
    %176 = vector.broadcast %cst_127 : f32 to vector<16x32xf32>
    %177 = arith.select %175, %173, %176 : vector<16x32xi1>, vector<16x32xf32>
    %c7_128 = arith.constant 7 : index
    %c0_129 = arith.constant 0 : index
    %178 = vector.load %arg15[%c7_128, %c0_129] : memref<32x32xf32, #tpu.memory_space<vmem>>, vector<16x32xf32>
    %cst_130 = arith.constant 0.000000e+00 : f32
    %179 = vector.shape_cast %164 : vector<16x1xi1> to vector<16x1xi1>
    %180 = vector.broadcast %179 : vector<16x1xi1> to vector<16x32xi1>
    %181 = vector.broadcast %cst_130 : f32 to vector<16x32xf32>
    %182 = arith.select %180, %178, %181 : vector<16x32xi1>, vector<16x32xf32>
    %c8_131 = arith.constant 8 : index
    %c0_132 = arith.constant 0 : index
    %183 = vector.load %arg15[%c8_131, %c0_132] : memref<32x32xf32, #tpu.memory_space<vmem>>, vector<16x32xf32>
    %c9_133 = arith.constant 9 : index
    %c0_134 = arith.constant 0 : index
    %184 = vector.load %arg15[%c9_133, %c0_134] : memref<32x32xf32, #tpu.memory_space<vmem>>, vector<16x32xf32>
    %cst_135 = arith.constant 0.000000e+00 : f32
    %185 = vector.shape_cast %166 : vector<16x1xi1> to vector<16x1xi1>
    %186 = vector.broadcast %185 : vector<16x1xi1> to vector<16x32xi1>
    %187 = vector.broadcast %cst_135 : f32 to vector<16x32xf32>
    %188 = arith.select %186, %184, %187 : vector<16x32xi1>, vector<16x32xf32>
    %c11 = arith.constant 11 : index
    %c0_136 = arith.constant 0 : index
    %189 = vector.load %arg15[%c11, %c0_136] : memref<32x32xf32, #tpu.memory_space<vmem>>, vector<16x32xf32>
    %cst_137 = arith.constant 0.000000e+00 : f32
    %190 = vector.shape_cast %164 : vector<16x1xi1> to vector<16x1xi1>
    %191 = vector.broadcast %190 : vector<16x1xi1> to vector<16x32xi1>
    %192 = vector.broadcast %cst_137 : f32 to vector<16x32xf32>
    %193 = arith.select %191, %189, %192 : vector<16x32xi1>, vector<16x32xf32>
    %c12_138 = arith.constant 12 : index
    %c0_139 = arith.constant 0 : index
    %194 = vector.load %arg15[%c12_138, %c0_139] : memref<32x32xf32, #tpu.memory_space<vmem>>, vector<16x32xf32>
    %c13 = arith.constant 13 : index
    %c0_140 = arith.constant 0 : index
    %195 = vector.load %arg15[%c13, %c0_140] : memref<32x32xf32, #tpu.memory_space<vmem>>, vector<16x32xf32>
    %cst_141 = arith.constant 0.000000e+00 : f32
    %196 = vector.shape_cast %166 : vector<16x1xi1> to vector<16x1xi1>
    %197 = vector.broadcast %196 : vector<16x1xi1> to vector<16x32xi1>
    %198 = vector.broadcast %cst_141 : f32 to vector<16x32xf32>
    %199 = arith.select %197, %195, %198 : vector<16x32xi1>, vector<16x32xf32>
    %200 = tpu.concatenate %171, %172, %177, %182, %183, %188, %193, %194, %199 in 1 : vector<16x32xf32>, vector<16x32xf32>, vector<16x32xf32>, vector<16x32xf32>, vector<16x32xf32>, vector<16x32xf32>, vector<16x32xf32>, vector<16x32xf32>, vector<16x32xf32> -> vector<16x288xf32>
    %201 = arith.truncf %200 : vector<16x288xf32> to vector<16x288xbf16>
    %c0_142 = arith.constant 0 : index
    %c0_143 = arith.constant 0 : index
    %202 = vector.load %arg6[%c0_142, %c0_143] : memref<288x64xbf16, #tpu.memory_space<vmem>>, vector<288x64xbf16>
    %cst_144 = arith.constant dense<0.000000e+00> : vector<16x64xf32>
    %203 = tpu.matmul %201, %202, %cst_144 {dimension_numbers = #tpu.dot_dimension_numbers<[1], [0], [0], [1], [0, 0, 1, 1], [], []>} : vector<16x288xbf16>, vector<288x64xbf16>, vector<16x64xf32> -> vector<16x64xf32>
    %c0_145 = arith.constant 0 : index
    %c0_146 = arith.constant 0 : index
    %204 = vector.load %arg7[%c0_145, %c0_146] : memref<1x64xf32, #tpu.memory_space<vmem>>, vector<1x64xf32>
    %205 = vector.broadcast %204 : vector<1x64xf32> to vector<16x64xf32>
    %206 = arith.addf %203, %205 : vector<16x64xf32>
    %cst_147 = arith.constant 0.000000e+00 : f32
    %207 = vector.broadcast %cst_147 : f32 to vector<16x64xf32>
    %208 = arith.maximumf %206, %207 : vector<16x64xf32>
    %c0_148 = arith.constant 0 : index
    %c0_149 = arith.constant 0 : index
    %c0_150 = arith.constant 0 : index
    %209 = vector.load %arg8[%c0_148, %c0_149, %c0_150] : memref<1x16x64xf32, #tpu.memory_space<vmem>>, vector<1x16x64xf32>
    %210 = vector.shape_cast %209 : vector<1x16x64xf32> to vector<16x64xf32>
    %211 = vector.shape_cast %208 : vector<16x64xf32> to vector<1x16x64xf32>
    tpu.vector_store %arg8[%c0_148, %c0_149, %c0_150], %211 {strides = array<i32>} : memref<1x16x64xf32, #tpu.memory_space<vmem>>, vector<1x16x64xf32>,
    return
  }
  func.func @transform_0(%arg0: i32) -> (i32, i32, i32) {
    %c0_i32 = arith.constant 0 : i32
    %c0_i32_0 = arith.constant 0 : i32
    %c0_i32_1 = arith.constant 0 : i32
    return %arg0, %c0_i32, %c0_i32_0 : i32, i32, i32
  }
  func.func @transform_1(%arg0: i32) -> (i32, i32) {
    %c0_i32 = arith.constant 0 : i32
    %c0_i32_0 = arith.constant 0 : i32
    %c0_i32_1 = arith.constant 0 : i32
    return %c0_i32, %c0_i32_0 : i32, i32
  }
  func.func @transform_2(%arg0: i32) -> (i32, i32) {
    %c0_i32 = arith.constant 0 : i32
    %c0_i32_0 = arith.constant 0 : i32
    %c0_i32_1 = arith.constant 0 : i32
    return %c0_i32, %c0_i32_0 : i32, i32
  }
  func.func @transform_3(%arg0: i32) -> (i32, i32) {
    %c0_i32 = arith.constant 0 : i32
    %c0_i32_0 = arith.constant 0 : i32
    %c0_i32_1 = arith.constant 0 : i32
    return %c0_i32, %c0_i32_0 : i32, i32
  }
  func.func @transform_4(%arg0: i32) -> (i32, i32) {
    %c0_i32 = arith.constant 0 : i32
    %c0_i32_0 = arith.constant 0 : i32
    %c0_i32_1 = arith.constant 0 : i32
    return %c0_i32, %c0_i32_0 : i32, i32
  }
  func.func @transform_5(%arg0: i32) -> (i32, i32) {
    %c0_i32 = arith.constant 0 : i32
    %c0_i32_0 = arith.constant 0 : i32
    %c0_i32_1 = arith.constant 0 : i32
    return %c0_i32, %c0_i32_0 : i32, i32
  }
  func.func @transform_6(%arg0: i32) -> (i32, i32) {
    %c0_i32 = arith.constant 0 : i32
    %c0_i32_0 = arith.constant 0 : i32
    %c0_i32_1 = arith.constant 0 : i32
    return %c0_i32, %c0_i32_0 : i32, i32
  }
  func.func @transform_7(%arg0: i32) -> (i32, i32, i32) {
    %c0_i32 = arith.constant 0 : i32
    %c0_i32_0 = arith.constant 0 : i32
    %c0_i32_1 = arith.constant 0 : i32
    return %arg0, %c0_i32, %c0_i32_0 : i32, i32, i32
  }
}

module attributes {stable_mosaic.version = 11 : i64} {
  func.func @_inventory_kernel(%arg0: memref<2x16xf32, #tpu.memory_space<vmem>>, %arg1: memref<16x64xbf16, #tpu.memory_space<vmem>>, %arg2: memref<1x64xf32, #tpu.memory_space<vmem>>, %arg3: memref<64x64xbf16, #tpu.memory_space<vmem>>, %arg4: memref<1x64xf32, #tpu.memory_space<vmem>>, %arg5: memref<2x64xf32, #tpu.memory_space<vmem>>) attributes {dimension_semantics = [], scalar_prefetch = 0 : i64, scratch_operands = 0 : i64, tpu.core_type = #tpu.core_type<tc>} {
    %c0 = arith.constant 0 : index
    %c0_0 = arith.constant 0 : index
    %0 = vector.load %arg0[%c0, %c0_0] : memref<2x16xf32, #tpu.memory_space<vmem>>, vector<2x16xf32>
    %1 = arith.truncf %0 : vector<2x16xf32> to vector<2x16xbf16>
    %c0_1 = arith.constant 0 : index
    %c0_2 = arith.constant 0 : index
    %2 = vector.load %arg1[%c0_1, %c0_2] : memref<16x64xbf16, #tpu.memory_space<vmem>>, vector<16x64xbf16>
    %cst = arith.constant dense<0.000000e+00> : vector<2x64xf32>
    %3 = tpu.matmul %1, %2, %cst {dimension_numbers = #tpu.dot_dimension_numbers<[1], [0], [0], [1], [0, 0, 1, 1], [], []>} : vector<2x16xbf16>, vector<16x64xbf16>, vector<2x64xf32> -> vector<2x64xf32>
    %c0_3 = arith.constant 0 : index
    %c0_4 = arith.constant 0 : index
    %4 = vector.load %arg2[%c0_3, %c0_4] : memref<1x64xf32, #tpu.memory_space<vmem>>, vector<1x64xf32>
    %5 = vector.broadcast %4 : vector<1x64xf32> to vector<2x64xf32>
    %6 = arith.addf %3, %5 : vector<2x64xf32>
    %cst_5 = arith.constant 0.000000e+00 : f32
    %7 = vector.broadcast %cst_5 : f32 to vector<2x64xf32>
    %8 = arith.maximumf %6, %7 : vector<2x64xf32>
    %9 = arith.truncf %8 : vector<2x64xf32> to vector<2x64xbf16>
    %c0_6 = arith.constant 0 : index
    %c0_7 = arith.constant 0 : index
    %10 = vector.load %arg3[%c0_6, %c0_7] : memref<64x64xbf16, #tpu.memory_space<vmem>>, vector<64x64xbf16>
    %cst_8 = arith.constant dense<0.000000e+00> : vector<2x64xf32>
    %11 = tpu.matmul %9, %10, %cst_8 {dimension_numbers = #tpu.dot_dimension_numbers<[1], [0], [0], [1], [0, 0, 1, 1], [], []>} : vector<2x64xbf16>, vector<64x64xbf16>, vector<2x64xf32> -> vector<2x64xf32>
    %c0_9 = arith.constant 0 : index
    %c0_10 = arith.constant 0 : index
    %12 = vector.load %arg4[%c0_9, %c0_10] : memref<1x64xf32, #tpu.memory_space<vmem>>, vector<1x64xf32>
    %13 = vector.broadcast %12 : vector<1x64xf32> to vector<2x64xf32>
    %14 = arith.addf %11, %13 : vector<2x64xf32>
    %cst_11 = arith.constant 0.000000e+00 : f32
    %15 = vector.broadcast %cst_11 : f32 to vector<2x64xf32>
    %16 = arith.maximumf %14, %15 : vector<2x64xf32>
    %c0_12 = arith.constant 0 : index
    %c0_13 = arith.constant 0 : index
    %17 = vector.load %arg5[%c0_12, %c0_13] : memref<2x64xf32, #tpu.memory_space<vmem>>, vector<2x64xf32>
    tpu.vector_store %arg5[%c0_12, %c0_13], %16 {strides = array<i32>} : memref<2x64xf32, #tpu.memory_space<vmem>>, vector<2x64xf32>,
    return
  }
}

</mosaic_0001>

<llo_original>
// kernel: nnbase_forward.3
$region0: #{nnbase_forward.3}
  #allocation0 [shape = 'u32[]', space=smem, size = 0x4, offset = 0x4, fixed_abs, tag = 'smem constant byte address 0x4 - core index']
  #allocation1 [shape = 'u32[72,128]{1,0:T(1,128)}', space=vmem, size = 0x9000, scoped, tag = 'internal scratch']
  %s0 = inlined_call_operand.vmem [shape: f32[2,16], index: 0, kind: input, shape index: {}]
  %s1 = inlined_call_operand.vmem [shape: bf16[16,64], index: 1, kind: input, shape index: {}]
  %s2 = inlined_call_operand.vmem [shape: f32[1,64], index: 2, kind: input, shape index: {}]
  %s3 = inlined_call_operand.vmem [shape: bf16[64,64], index: 3, kind: input, shape index: {}]
  %s4 = inlined_call_operand.vmem [shape: f32[1,64], index: 4, kind: input, shape index: {}]
  %s5 = inlined_call_operand.vmem [shape: f32[2,64], index: 5, kind: output, shape index: {}]
  %s6 = sld [smem:[#allocation0]]
  $region30: #{nnbase_forward.3} parent=0
    _
  %s8 = ssub.s32 1, %s6
  %s9 = scalar_select 0, %s8, %s6
  // Predicated region
  $region2: #{nnbase_forward.3} parent=0 // pred_check
    _
  $region3: #{nnbase_forward.3} parent=0 // pred_check_branch
    %11 = sbr.rel (0) target = $region5
  $region4: #{nnbase_forward.3} parent=0 // pred_region
    _
  $region5: #{nnbase_forward.3} parent=0 // pred_fallthru
    _
  // Predicated region
  $region6: #{nnbase_forward.3} parent=0 // pred_check
    _
  $region7: #{nnbase_forward.3} parent=0 // pred_check_branch
    %13 = sbr.rel (0) target = $region9
  $region8: #{nnbase_forward.3} parent=0 // pred_region
    _
  $region9: #{nnbase_forward.3} parent=0 // pred_fallthru
    _
  // Predicated region
  $region10: #{nnbase_forward.3} parent=0 // pred_check
    _
  $region11: #{nnbase_forward.3} parent=0 // pred_check_branch
    %15 = sbr.rel (0) target = $region13
  $region12: #{nnbase_forward.3} parent=0 // pred_region
    _
  $region13: #{nnbase_forward.3} parent=0 // pred_fallthru
    _
  // Predicated region
  $region14: #{nnbase_forward.3} parent=0 // pred_check
    _
  $region15: #{nnbase_forward.3} parent=0 // pred_check_branch
    %17 = sbr.rel (0) target = $region17
  $region16: #{nnbase_forward.3} parent=0 // pred_region
    _
  $region17: #{nnbase_forward.3} parent=0 // pred_fallthru
    _
  // Predicated region
  $region18: #{nnbase_forward.3} parent=0 // pred_check
    _
  $region19: #{nnbase_forward.3} parent=0 // pred_check_branch
    %19 = sbr.rel (0) target = $region21
  $region20: #{nnbase_forward.3} parent=0 // pred_region
    _
  $region21: #{nnbase_forward.3} parent=0 // pred_fallthru
    _
  %v21 = vld [vmem:[%s0] sm:$0x3]
  %v22 = vpack.c.bf16 %v21, %v21
  %v23 = vld [vmem:[%s1] sm:$0xf]
  %v24 = vld [vmem:[%s1 + $0x4] sm:$0xf]
  %v25 = vld [vmem:[%s2] sm:$0x1]
  %v27 = vperm.slane %v25, 0
  %v31 = vunpack.c.l.b16 %v23
  %v32 = vunpack.c.l.b16 %v24
  %v33 = vpack.c.b16 %v32, %v31
  %vm35 = vcmask 130048
  %v37 = vsel %vm35, %v22, 0
  %39 = vmatpush.bf16.msra.mxu0 0
  %40 = vmatpush.bf16.msra.mxu0 0
  %41 = vmatpush.bf16.msra.mxu0 0
  %42 = vmatpush.bf16.msra.mxu0 0
  %43 = vmatpush.bf16.msra.mxu0 0
  %44 = vmatpush.bf16.msra.mxu0 0
  %45 = vmatpush.bf16.msra.mxu0 0
  %46 = vmatpush.bf16.msra.mxu0 %v33
  %47 = vmatmul.bf16.gmra.mxu0 %v37
  %v48 = vpop.f32.mrf.mxu0
  %v49 = vadd.f32 %v27, %v48
  %v50 = vpop.f32.mrf.mxu0
  %51 = vdwg.mxu0
  %v52 = vmax.f32 %v49, 0.0
  %v53 = vpack.c.bf16 %v52, %v52
  %v54 = vld [vmem:[%s3] sm:$0xf]
  %v55 = vld [vmem:[%s3 + $0x4] sm:$0xf]
  %v56 = vld [vmem:[%s3 + $0x8] sm:$0xf]
  %v57 = vld [vmem:[%s3 + $0xc] sm:$0xf]
  %v58 = vld [vmem:[%s3 + $0x10] sm:$0xf]
  %v59 = vld [vmem:[%s3 + $0x14] sm:$0xf]
  %v60 = vld [vmem:[%s3 + $0x18] sm:$0xf]
  %v61 = vld [vmem:[%s3 + $0x1c] sm:$0xf]
  %v62 = vld [vmem:[%s4] sm:$0x1]
  %v64 = vperm.slane %v62, 0
  %v74 = vunpack.c.l.b16 %v54
  %v75 = vunpack.c.l.b16 %v55
  %v76 = vunpack.c.l.b16 %v56
  %v77 = vunpack.c.l.b16 %v57
  %v78 = vunpack.c.l.b16 %v58
  %v79 = vunpack.c.l.b16 %v59
  %v80 = vunpack.c.l.b16 %v60
  %v81 = vunpack.c.l.b16 %v61
  %v82 = vpack.c.b16 %v75, %v74
  %v83 = vpack.c.b16 %v77, %v76
  %v84 = vpack.c.b16 %v79, %v78
  %v85 = vpack.c.b16 %v81, %v80
  %vm90 = vcmask 523264
  %v92 = vsel %vm90, %v53, 0
  %94 = vmatpush.bf16.msra.mxu0 0
  %95 = vmatpush.bf16.msra.mxu0 0
  %96 = vmatpush.bf16.msra.mxu0 0
  %97 = vmatpush.bf16.msra.mxu0 0
  %98 = vmatpush.bf16.msra.mxu0 %v85
  %99 = vmatpush.bf16.msra.mxu0 %v84
  %100 = vmatpush.bf16.msra.mxu0 %v83
  %101 = vmatpush.bf16.msra.mxu0 %v82
  %102 = vmatmul.bf16.gmra.mxu0 %v92
  %v103 = vpop.f32.mrf.mxu0
  %v104 = vadd.f32 %v64, %v103
  %v105 = vpop.f32.mrf.mxu0
  %106 = vdwg.mxu0
  %v107 = vmax.f32 %v104, 0.0
  %vm108 = vcmask 517120
  %109 = vst.msk [vmem:[%s5] sm:$0x3] %vm108, %v107
  // Predicated region
  $region22: #{nnbase_forward.3} parent=0 // pred_check
    _
  $region23: #{nnbase_forward.3} parent=0 // pred_check_branch
    %111 = sbr.rel (0) target = $region25
  $region24: #{nnbase_forward.3} parent=0 // pred_region
    _
  $region25: #{nnbase_forward.3} parent=0 // pred_fallthru
    _
  // Predicated region
  $region26: #{nnbase_forward.3} parent=0 // pred_check
    _
  $region27: #{nnbase_forward.3} parent=0 // pred_check_branch
    %113 = sbr.rel (0) target = $region29
  $region28: #{nnbase_forward.3} parent=0 // pred_region
    _
  $region29: #{nnbase_forward.3} parent=0 // pred_fallthru
    _

// kernel: nnbase_forward.2
$region0: #{nnbase_forward.2}
  #allocation0 [shape = 'u32[]', space=smem, size = 0x4, offset = 0x4, fixed_abs, tag = 'smem constant byte address 0x4 - core index']
  #allocation1 [shape = 'u32[72,128]{1,0:T(1,128)}', space=vmem, size = 0x9000, scoped, tag = 'internal scratch']
  #allocation2 [shape = 'f32[304,4]{1,0:T(8,128)}', space=vmem, size = 0x26000, scoped, tag = 'scratch operand']
  #allocation3 [shape = 'f32[256,16]{1,0:T(8,128)}', space=vmem, size = 0x20000, scoped, tag = 'scratch operand']
  #allocation4 [shape = 'f32[128,16]{1,0:T(8,128)}', space=vmem, size = 0x10000, scoped, tag = 'scratch operand']
  #allocation5 [shape = 'f32[96,16]{1,0:T(8,128)}', space=vmem, size = 0xc000, scoped, tag = 'scratch operand']
  #allocation6 [shape = 'f32[64,32]{1,0:T(8,128)}', space=vmem, size = 0x8000, scoped, tag = 'scratch operand']
  #allocation7 [shape = 'f32[32,32]{1,0:T(8,128)}', space=vmem, size = 0x4000, scoped, tag = 'scratch operand']
  #allocation8 [shape = 'f32[32,32]{1,0:T(8,128)}', space=vmem, size = 0x4000, scoped, tag = 'scratch operand']
  %s0 = inlined_call_operand.vmem [shape: f32[2,256,4], index: 0, kind: input, shape index: {}]
  %s1 = inlined_call_operand.vmem [shape: bf16[36,16], index: 1, kind: input, shape index: {}]
  %s2 = inlined_call_operand.vmem [shape: f32[1,16], index: 2, kind: input, shape index: {}]
  %s3 = inlined_call_operand.vmem [shape: bf16[144,32], index: 3, kind: input, shape index: {}]
  %s4 = inlined_call_operand.vmem [shape: f32[1,32], index: 4, kind: input, shape index: {}]
  %s5 = inlined_call_operand.vmem [shape: bf16[288,64], index: 5, kind: input, shape index: {}]
  %s6 = inlined_call_operand.vmem [shape: f32[1,64], index: 6, kind: input, shape index: {}]
  %s7 = inlined_call_operand.vmem [shape: f32[2,16,64], index: 7, kind: output, shape index: {}]
  %s8 = sld [smem:[#allocation0]]
  $region61: #{nnbase_forward.2} parent=0
    _
  %s10 = ssub.s32 1, %s8
  %s11 = scalar_select 0, %s10, %s8
  loop: start=0, step=1, limit=4
  $region2: #{nnbase_forward.2} parent=0 // loop_pre_header
    _
  $region3: #{nnbase_forward.2} parent=0 // loop_header
    %s13 = sphi 0, %s17
    %p14 = scmp.ge.s32.totalorder %s13, 4
    %s23 = sphi 0, %s25
    %s26 = sphi 0, %s23
    %s27 = sphi 0, %s26
    %s43 = sphi 0, %s27
    %s47 = sphi 0, %s47
    %s49 = sphi 0, %s47
    %s50 = sphi 0, %s49
    %s64 = sphi 0, %s50
    %s68 = sphi 0, %s68
    %s70 = sphi 0, %s68
    %s71 = sphi 0, %s70
    %s85 = sphi 0, %s71
    %s89 = sphi 0, %s89
    %s91 = sphi 0, %s89
    %s92 = sphi 0, %s91
    %s106 = sphi 0, %s92
    %s110 = sphi 0, %s110
    %s112 = sphi 0, %s110
    %s113 = sphi 0, %s112
    %s127 = sphi 0, %s113
    %s131 = sphi 0, %s131
    %s133 = sphi 0, %s131
    %s134 = sphi 0, %s133
    %s148 = sphi 0, %s134
    %s152 = sphi 0, %s152
    %s154 = sphi 0, %s152
    %s155 = sphi 0, %s154
    %s169 = sphi 0, %s155
    %s175 = sphi 0, %s177
    %s178 = sphi 0, %s175
    %s179 = sphi 0, %s178
    %s195 = sphi 0, %s179
  $region4: #{nnbase_forward.2} parent=0 // loop_header_branch
    %16 = sbr.rel (%p14) target = $region8
  $region5: #{nnbase_forward.2} parent=0 // loop_body
    %s18 = ssub.s32 %s13, 1
    %s19 = ssub.s32 %s13, 2
    %s20 = sadd.s32 %s13, 1
    %s21 = ssub.s32 %s13, %s20
    %p22 = scmp.eq.s32.totalorder %s21, 0
    %s24 = sadd.s32 %s23, 1
    %s25 = scalar_select %p22, %s23, %s24
    %p28 = pneg %p22
    %p29 = scmp.eq.s32.totalorder %s13, 1
    %p30 = por %p28, %p29
    %p31 = scmp.ne.s32.totalorder %s23, %s26
    %p32 = scmp.eq.s32.totalorder %s13, 0
    %p33 = por %p31, %p32
    %p34 = scmp.ne.s32.totalorder %s23, %s26
    %p35 = scmp.eq.s32.totalorder %s18, 1
    %p36 = por %p34, %p35
    %p37 = scmp.ne.s32.totalorder %s26, %s27
    %p38 = scmp.eq.s32.totalorder %s18, 0
    %p39 = por %p37, %p38
    %p40 = scmp.ne.s32.totalorder %s26, %s27
    %p41 = scmp.eq.s32.totalorder %s19, 1
    %p42 = por %p40, %p41
    %p44 = scmp.ne.s32.totalorder %s27, %s43
    %p45 = scmp.eq.s32.totalorder %s19, 0
    %p46 = por %p44, %p45
    %s48 = sadd.s32 %s47, 1
    %p51 = scmp.eq.s32.totalorder %s13, 1
    %p52 = scmp.ne.s32.totalorder %s47, %s49
    %p53 = scmp.eq.s32.totalorder %s13, 0
    %p54 = por %p52, %p53
    %p55 = scmp.ne.s32.totalorder %s47, %s49
    %p56 = scmp.eq.s32.totalorder %s18, 1
    %p57 = por %p55, %p56
    %p58 = scmp.ne.s32.totalorder %s49, %s50
    %p59 = scmp.eq.s32.totalorder %s18, 0
    %p60 = por %p58, %p59
    %p61 = scmp.ne.s32.totalorder %s49, %s50
    %p62 = scmp.eq.s32.totalorder %s19, 1
    %p63 = por %p61, %p62
    %p65 = scmp.ne.s32.totalorder %s50, %s64
    %p66 = scmp.eq.s32.totalorder %s19, 0
    %p67 = por %p65, %p66
    %s69 = sadd.s32 %s68, 1
    %p72 = scmp.eq.s32.totalorder %s13, 1
    %p73 = scmp.ne.s32.totalorder %s68, %s70
    %p74 = scmp.eq.s32.totalorder %s13, 0
    %p75 = por %p73, %p74
    %p76 = scmp.ne.s32.totalorder %s68, %s70
    %p77 = scmp.eq.s32.totalorder %s18, 1
    %p78 = por %p76, %p77
    %p79 = scmp.ne.s32.totalorder %s70, %s71
    %p80 = scmp.eq.s32.totalorder %s18, 0
    %p81 = por %p79, %p80
    %p82 = scmp.ne.s32.totalorder %s70, %s71
    %p83 = scmp.eq.s32.totalorder %s19, 1
    %p84 = por %p82, %p83
    %p86 = scmp.ne.s32.totalorder %s71, %s85
    %p87 = scmp.eq.s32.totalorder %s19, 0
    %p88 = por %p86, %p87
    %s90 = sadd.s32 %s89, 1
    %p93 = scmp.eq.s32.totalorder %s13, 1
    %p94 = scmp.ne.s32.totalorder %s89, %s91
    %p95 = scmp.eq.s32.totalorder %s13, 0
    %p96 = por %p94, %p95
    %p97 = scmp.ne.s32.totalorder %s89, %s91
    %p98 = scmp.eq.s32.totalorder %s18, 1
    %p99 = por %p97, %p98
    %p100 = scmp.ne.s32.totalorder %s91, %s92
    %p101 = scmp.eq.s32.totalorder %s18, 0
    %p102 = por %p100, %p101
    %p103 = scmp.ne.s32.totalorder %s91, %s92
    %p104 = scmp.eq.s32.totalorder %s19, 1
    %p105 = por %p103, %p104
    %p107 = scmp.ne.s32.totalorder %s92, %s106
    %p108 = scmp.eq.s32.totalorder %s19, 0
    %p109 = por %p107, %p108
    %s111 = sadd.s32 %s110, 1
    %p114 = scmp.eq.s32.totalorder %s13, 1
    %p115 = scmp.ne.s32.totalorder %s110, %s112
    %p116 = scmp.eq.s32.totalorder %s13, 0
    %p117 = por %p115, %p116
    %p118 = scmp.ne.s32.totalorder %s110, %s112
    %p119 = scmp.eq.s32.totalorder %s18, 1
    %p120 = por %p118, %p119
    %p121 = scmp.ne.s32.totalorder %s112, %s113
    %p122 = scmp.eq.s32.totalorder %s18, 0
    %p123 = por %p121, %p122
    %p124 = scmp.ne.s32.totalorder %s112, %s113
    %p125 = scmp.eq.s32.totalorder %s19, 1
    %p126 = por %p124, %p125
    %p128 = scmp.ne.s32.totalorder %s113, %s127
    %p129 = scmp.eq.s32.totalorder %s19, 0
    %p130 = por %p128, %p129
    %s132 = sadd.s32 %s131, 1
    %p135 = scmp.eq.s32.totalorder %s13, 1
    %p136 = scmp.ne.s32.totalorder %s131, %s133
    %p137 = scmp.eq.s32.totalorder %s13, 0
    %p138 = por %p136, %p137
    %p139 = scmp.ne.s32.totalorder %s131, %s133
    %p140 = scmp.eq.s32.totalorder %s18, 1
    %p141 = por %p139, %p140
    %p142 = scmp.ne.s32.totalorder %s133, %s134
    %p143 = scmp.eq.s32.totalorder %s18, 0
    %p144 = por %p142, %p143
    %p145 = scmp.ne.s32.totalorder %s133, %s134
    %p146 = scmp.eq.s32.totalorder %s19, 1
    %p147 = por %p145, %p146
    %p149 = scmp.ne.s32.totalorder %s134, %s148
    %p150 = scmp.eq.s32.totalorder %s19, 0
    %p151 = por %p149, %p150
    %s153 = sadd.s32 %s152, 1
    %p156 = scmp.eq.s32.totalorder %s13, 1
    %p157 = scmp.ne.s32.totalorder %s152, %s154
    %p158 = scmp.eq.s32.totalorder %s13, 0
    %p159 = por %p157, %p158
    %p160 = scmp.ne.s32.totalorder %s152, %s154
    %p161 = scmp.eq.s32.totalorder %s18, 1
    %p162 = por %p160, %p161
    %p163 = scmp.ne.s32.totalorder %s154, %s155
    %p164 = scmp.eq.s32.totalorder %s18, 0
    %p165 = por %p163, %p164
    %p166 = scmp.ne.s32.totalorder %s154, %s155
    %p167 = scmp.eq.s32.totalorder %s19, 1
    %p168 = por %p166, %p167
    %p170 = scmp.ne.s32.totalorder %s155, %s169
    %p171 = scmp.eq.s32.totalorder %s19, 0
    %p172 = por %p170, %p171
    %s173 = ssub.s32 %s13, %s20
    %p174 = scmp.eq.s32.totalorder %s173, 0
    %s176 = sadd.s32 %s175, 1
    %s177 = scalar_select %p174, %s175, %s176
    %p180 = pneg %p174
    %p181 = scmp.eq.s32.totalorder %s13, 1
    %p182 = por %p180, %p181
    %p183 = scmp.ne.s32.totalorder %s175, %s178
    %p184 = scmp.eq.s32.totalorder %s13, 0
    %p185 = por %p183, %p184
    %p186 = scmp.ne.s32.totalorder %s175, %s178
    %p187 = scmp.eq.s32.totalorder %s18, 1
    %p188 = por %p186, %p187
    %p189 = scmp.ne.s32.totalorder %s178, %s179
    %p190 = scmp.eq.s32.totalorder %s18, 0
    %p191 = por %p189, %p190
    %p192 = scmp.ne.s32.totalorder %s178, %s179
    %p193 = scmp.eq.s32.totalorder %s19, 1
    %p194 = por %p192, %p193
    %p196 = scmp.ne.s32.totalorder %s179, %s195
    %p197 = scmp.eq.s32.totalorder %s19, 0
    %p198 = por %p196, %p197
    %p199 = scmp.le.s32.totalorder 1, %s13
    %p200 = scmp.lt.s32.totalorder %s13, 3
    %p201 = pnand %p199, %p200
    %p202 = pneg %p201
    // Predicated region
    $region9: #{nnbase_forward.2} parent=5 // pred_check
      _
    $region10: #{nnbase_forward.2} parent=5 // pred_check_branch
      %204 = sbr.rel (%p201) target = $region12
    $region11: #{nnbase_forward.2} parent=5 // pred_region
      %s205 = ssub.s32 %s13, 1
      // Predicated region
      $region13: #{nnbase_forward.2} parent=11 // pred_check
        %p206 = pneg %p60
      $region14: #{nnbase_forward.2} parent=11 // pred_check_branch
        %208 = sbr.rel (%p206) target = $region16
      $region15: #{nnbase_forward.2} parent=11 // pred_region
        _
      $region16: #{nnbase_forward.2} parent=11 // pred_fallthru
        _
      // Predicated region
      $region17: #{nnbase_forward.2} parent=11 // pred_check
        %p209 = pneg %p81
      $region18: #{nnbase_forward.2} parent=11 // pred_check_branch
        %211 = sbr.rel (%p209) target = $region20
      $region19: #{nnbase_forward.2} parent=11 // pred_region
        _
      $region20: #{nnbase_forward.2} parent=11 // pred_fallthru
        _
      // Predicated region
      $region21: #{nnbase_forward.2} parent=11 // pred_check
        %p212 = pneg %p102
      $region22: #{nnbase_forward.2} parent=11 // pred_check_branch
        %214 = sbr.rel (%p212) target = $region24
      $region23: #{nnbase_forward.2} parent=11 // pred_region
        _
      $region24: #{nnbase_forward.2} parent=11 // pred_fallthru
        _
      // Predicated region
      $region25: #{nnbase_forward.2} parent=11 // pred_check
        %p215 = pneg %p123
      $region26: #{nnbase_forward.2} parent=11 // pred_check_branch
        %217 = sbr.rel (%p215) target = $region28
      $region27: #{nnbase_forward.2} parent=11 // pred_region
        _
      $region28: #{nnbase_forward.2} parent=11 // pred_fallthru
        _
      // Predicated region
      $region29: #{nnbase_forward.2} parent=11 // pred_check
        %p218 = pneg %p144
      $region30: #{nnbase_forward.2} parent=11 // pred_check_branch
        %220 = sbr.rel (%p218) target = $region32
      $region31: #{nnbase_forward.2} parent=11 // pred_region
        _
      $region32: #{nnbase_forward.2} parent=11 // pred_fallthru
        _
      // Predicated region
      $region33: #{nnbase_forward.2} parent=11 // pred_check
        %p221 = pneg %p165
      $region34: #{nnbase_forward.2} parent=11 // pred_check_branch
        %223 = sbr.rel (%p221) target = $region36
      $region35: #{nnbase_forward.2} parent=11 // pred_region
        _
      $region36: #{nnbase_forward.2} parent=11 // pred_fallthru
        _
    $region12: #{nnbase_forward.2} parent=5 // pred_fallthru
      _
    %p224 = scmp.lt.s32.totalorder %s13, 2
    // Predicated region
    $region37: #{nnbase_forward.2} parent=5 // pred_check
      %p225 = pneg %p224
    $region38: #{nnbase_forward.2} parent=5 // pred_check_branch
      %227 = sbr.rel (%p225) target = $region40
    $region39: #{nnbase_forward.2} parent=5 // pred_region
      // Predicated region
      $region41: #{nnbase_forward.2} parent=39 // pred_check
        %p228 = pneg %p33
      $region42: #{nnbase_forward.2} parent=39 // pred_check_branch
        %230 = sbr.rel (%p228) target = $region44
      $region43: #{nnbase_forward.2} parent=39 // pred_region
        %p231 = scmp.lt.s32.totalorder %s13, 1
        %s232 = scalar_select %p231, %s13, 1
        %s233 = smul.addr %s232, 32
        %s234 = smul.addr %s233, 8
        %s235 = scalar_lea.vmem %s0, %s234
      $region44: #{nnbase_forward.2} parent=39 // pred_fallthru
        _
    $region40: #{nnbase_forward.2} parent=5 // pred_fallthru
      _
    %p236 = scmp.le.s32.totalorder 1, %s13
    %p237 = scmp.lt.s32.totalorder %s13, 3
    %p238 = pnand %p236, %p237
    %p239 = pneg %p238
    // Predicated region
    $region45: #{nnbase_forward.2} parent=5 // pred_check
      _
    $region46: #{nnbase_forward.2} parent=5 // pred_check_branch
      %241 = sbr.rel (%p238) target = $region48
    $region47: #{nnbase_forward.2} parent=5 // pred_region
      %s242 = ssub.s32 %s13, 1
      %p243 = scmp.lt.s32.totalorder %s18, 1
      %s244 = scalar_select %p243, %s18, 1
      %s245 = smul.addr %s244, 32
      %s246 = smul.addr %s245, 8
      %s247 = scalar_lea.vmem %s0, %s246
      %p248 = pneg %p39
      %p249 = pneg %p36
      %p250 = pneg %p60
      %p251 = pneg %p57
      %p252 = pneg %p81
      %p253 = pneg %p78
      %p254 = pneg %p102
      %p255 = pneg %p99
      %p256 = pneg %p123
      %p257 = pneg %p120
      %p258 = pneg %p144
      %p259 = pneg %p141
      %p260 = pneg %p165
      %p261 = pneg %p162
      %p262 = pneg %p191
      %p263 = pneg %p188
      %p264 = scmp.lt.s32.totalorder %s18, 1
      %s265 = scalar_select %p264, %s18, 1
      %s266 = smul.addr %s265, 2
      %s267 = smul.addr %s266, 8
      %s268 = scalar_lea.vmem %s7, %s267
      %p269 = scmp.lt.s32.totalorder %s18, 1
      %s270 = scalar_select %p269, %s18, 1
      %s271 = smul.addr %s270, 32
      %s272 = smul.addr %s271, 8
      %s273 = scalar_lea.vmem %s0, %s272
      %p274 = scmp.lt.s32.totalorder %s18, 1
      %s275 = scalar_select %p274, %s18, 1
      %s276 = smul.addr %s275, 2
      %s277 = smul.addr %s276, 8
      %s278 = scalar_lea.vmem %s7, %s277
      %vm280 = vcmask 31744
      %281 = vst.msk [vmem:[#allocation2] sm:$0xff] %vm280, 0.0
      %282 = vst.msk [vmem:[#allocation2 + $0x8] sm:$0xff] %vm280, 0.0
      %283 = vst.msk [vmem:[#allocation2 + $0x10] sm:$0xff] %vm280, 0.0
      %284 = vst.msk [vmem:[#allocation2 + $0x118] sm:$0xff] %vm280, 0.0
      %285 = vst.msk [vmem:[#allocation2 + $0x120] sm:$0xff] %vm280, 0.0
      %286 = vst.msk [vmem:[#allocation2 + $0x128] sm:$0xff] %vm280, 0.0
      %vm287 = vcmask 130048
      %288 = vst.msk [vmem:[#allocation5] sm:$0xff] %vm287, 0.0
      %289 = vst.msk [vmem:[#allocation5 + $0x8] sm:$0xff] %vm287, 0.0
      %290 = vst.msk [vmem:[#allocation5 + $0x50] sm:$0xff] %vm287, 0.0
      %291 = vst.msk [vmem:[#allocation5 + $0x58] sm:$0xff] %vm287, 0.0
      %vm292 = vcmask 261120
      %293 = vst.msk [vmem:[#allocation8] sm:$0xff] %vm292, 0.0
      %294 = vst.msk [vmem:[#allocation8 + $0x18] sm:$0xff] %vm292, 0.0
      %v295 = vld [vmem:[%s273] sm:$0xff]
      %v296 = vld [vmem:[%s273 + $0x8] sm:$0xff]
      %v297 = vld [vmem:[%s273 + $0x10] sm:$0xff]
      %v298 = vld [vmem:[%s273 + $0x18] sm:$0xff]
      %v299 = vld [vmem:[%s273 + $0x20] sm:$0xff]
      %v300 = vld [vmem:[%s273 + $0x28] sm:$0xff]
      %v301 = vld [vmem:[%s273 + $0x30] sm:$0xff]
      %v302 = vld [vmem:[%s273 + $0x38] sm:$0xff]
      %v303 = vld [vmem:[%s273 + $0x40] sm:$0xff]
      %v304 = vld [vmem:[%s273 + $0x48] sm:$0xff]
      %v305 = vld [vmem:[%s273 + $0x50] sm:$0xff]
      %v306 = vld [vmem:[%s273 + $0x58] sm:$0xff]
      %v307 = vld [vmem:[%s273 + $0x60] sm:$0xff]
      %v308 = vld [vmem:[%s273 + $0x68] sm:$0xff]
      %v309 = vld [vmem:[%s273 + $0x70] sm:$0xff]
      %v310 = vld [vmem:[%s273 + $0x78] sm:$0xff]
      %v311 = vld [vmem:[%s273 + $0x80] sm:$0xff]
      %v312 = vld [vmem:[%s273 + $0x88] sm:$0xff]
      %v313 = vld [vmem:[%s273 + $0x90] sm:$0xff]
      %v314 = vld [vmem:[%s273 + $0x98] sm:$0xff]
      %v315 = vld [vmem:[%s273 + $0xa0] sm:$0xff]
      %v316 = vld [vmem:[%s273 + $0xa8] sm:$0xff]
      %v317 = vld [vmem:[%s273 + $0xb0] sm:$0xff]
      %v318 = vld [vmem:[%s273 + $0xb8] sm:$0xff]
      %v319 = vld [vmem:[%s273 + $0xc0] sm:$0xff]
      %v320 = vld [vmem:[%s273 + $0xc8] sm:$0xff]
      %v321 = vld [vmem:[%s273 + $0xd0] sm:$0xff]
      %v322 = vld [vmem:[%s273 + $0xd8] sm:$0xff]
      %v323 = vld [vmem:[%s273 + $0xe0] sm:$0xff]
      %v324 = vld [vmem:[%s273 + $0xe8] sm:$0xff]
      %v325 = vld [vmem:[%s273 + $0xf0] sm:$0xff]
      %v326 = vld [vmem:[%s273 + $0xf8] sm:$0xff]
      %327 = vst.msk [vmem:[#allocation2 + $0x18] sm:$0xff] %vm280, %v295
      %328 = vst.msk [vmem:[#allocation2 + $0x20] sm:$0xff] %vm280, %v296
      %329 = vst.msk [vmem:[#allocation2 + $0x28] sm:$0xff] %vm280, %v297
      %330 = vst.msk [vmem:[#allocation2 + $0x30] sm:$0xff] %vm280, %v298
      %331 = vst.msk [vmem:[#allocation2 + $0x38] sm:$0xff] %vm280, %v299
      %332 = vst.msk [vmem:[#allocation2 + $0x40] sm:$0xff] %vm280, %v300
      %333 = vst.msk [vmem:[#allocation2 + $0x48] sm:$0xff] %vm280, %v301
      %334 = vst.msk [vmem:[#allocation2 + $0x50] sm:$0xff] %vm280, %v302
      %335 = vst.msk [vmem:[#allocation2 + $0x58] sm:$0xff] %vm280, %v303
      %336 = vst.msk [vmem:[#allocation2 + $0x60] sm:$0xff] %vm280, %v304
      %337 = vst.msk [vmem:[#allocation2 + $0x68] sm:$0xff] %vm280, %v305
      %338 = vst.msk [vmem:[#allocation2 + $0x70] sm:$0xff] %vm280, %v306
      %339 = vst.msk [vmem:[#allocation2 + $0x78] sm:$0xff] %vm280, %v307
      %340 = vst.msk [vmem:[#allocation2 + $0x80] sm:$0xff] %vm280, %v308
      %341 = vst.msk [vmem:[#allocation2 + $0x88] sm:$0xff] %vm280, %v309
      %342 = vst.msk [vmem:[#allocation2 + $0x90] sm:$0xff] %vm280, %v310
      %343 = vst.msk [vmem:[#allocation2 + $0x98] sm:$0xff] %vm280, %v311
      %344 = vst.msk [vmem:[#allocation2 + $0xa0] sm:$0xff] %vm280, %v312
      %345 = vst.msk [vmem:[#allocation2 + $0xa8] sm:$0xff] %vm280, %v313
      %346 = vst.msk [vmem:[#allocation2 + $0xb0] sm:$0xff] %vm280, %v314
      %347 = vst.msk [vmem:[#allocation2 + $0xb8] sm:$0xff] %vm280, %v315
      %348 = vst.msk [vmem:[#allocation2 + $0xc0] sm:$0xff] %vm280, %v316
      %349 = vst.msk [vmem:[#allocation2 + $0xc8] sm:$0xff] %vm280, %v317
      %350 = vst.msk [vmem:[#allocation2 + $0xd0] sm:$0xff] %vm280, %v318
      %351 = vst.msk [vmem:[#allocation2 + $0xd8] sm:$0xff] %vm280, %v319
      %352 = vst.msk [vmem:[#allocation2 + $0xe0] sm:$0xff] %vm280, %v320
      %353 = vst.msk [vmem:[#allocation2 + $0xe8] sm:$0xff] %vm280, %v321
      %354 = vst.msk [vmem:[#allocation2 + $0xf0] sm:$0xff] %vm280, %v322
      %355 = vst.msk [vmem:[#allocation2 + $0xf8] sm:$0xff] %vm280, %v323
      %356 = vst.msk [vmem:[#allocation2 + $0x100] sm:$0xff] %vm280, %v324
      %357 = vst.msk [vmem:[#allocation2 + $0x108] sm:$0xff] %vm280, %v325
      %358 = vst.msk [vmem:[#allocation2 + $0x110] sm:$0xff] %vm280, %v326
      %v359 = vlaneseq
      %v360 = vshrl.u32 %v359, 7
      %v361 = vadd.s32 %v360, 8
      %v362 = vadd.s32 %v360, 16
      %v363 = vadd.s32 %v360, 24
      %v364 = vadd.s32 %v360, 32
      %v365 = vadd.s32 %v360, 40
      %v366 = vadd.s32 %v360, 48
      %v367 = vadd.s32 %v360, 56
      %v368 = vadd.s32 %v360, 64
      %v369 = vadd.s32 %v360, 72
      %v370 = vadd.s32 %v360, 80
      %v371 = vadd.s32 %v360, 88
      %v372 = vadd.s32 %v360, 96
      %v373 = vadd.s32 %v360, 104
      %v374 = vadd.s32 %v360, 112
      %v375 = vadd.s32 %v360, 120
      %v376 = vadd.s32 %v360, 128
      %v377 = vadd.s32 %v360, 136
      %v378 = vadd.s32 %v360, 144
      %v379 = vadd.s32 %v360, 152
      %v380 = vadd.s32 %v360, 160
      %v381 = vadd.s32 %v360, 168
      %v382 = vadd.s32 %v360, 176
      %v383 = vadd.s32 %v360, 184
      %v384 = vadd.s32 %v360, 192
      %v385 = vadd.s32 %v360, 200
      %v386 = vadd.s32 %v360, 208
      %v387 = vadd.s32 %v360, 216
      %v388 = vadd.s32 %v360, 224
      %v389 = vadd.s32 %v360, 232
      %v390 = vadd.s32 %v360, 240
      %v391 = vadd.s32 %v360, 248
      %v392 = vand.u32 %v360, 15
      %v393 = vand.u32 %v361, 15
      %v394 = vand.u32 %v362, 15
      %v395 = vand.u32 %v363, 15
      %v396 = vand.u32 %v364, 15
      %v397 = vand.u32 %v365, 15
      %v398 = vand.u32 %v366, 15
      %v399 = vand.u32 %v367, 15
      %v400 = vand.u32 %v368, 15
      %v401 = vand.u32 %v369, 15
      %v402 = vand.u32 %v370, 15
      %v403 = vand.u32 %v371, 15
      %v404 = vand.u32 %v372, 15
      %v405 = vand.u32 %v373, 15
      %v406 = vand.u32 %v374, 15
      %v407 = vand.u32 %v375, 15
      %v408 = vand.u32 %v376, 15
      %v409 = vand.u32 %v377, 15
      %v410 = vand.u32 %v378, 15
      %v411 = vand.u32 %v379, 15
      %v412 = vand.u32 %v380, 15
      %v413 = vand.u32 %v381, 15
      %v414 = vand.u32 %v382, 15
      %v415 = vand.u32 %v383, 15
      %v416 = vand.u32 %v384, 15
      %v417 = vand.u32 %v385, 15
      %v418 = vand.u32 %v386, 15
      %v419 = vand.u32 %v387, 15
      %v420 = vand.u32 %v388, 15
      %v421 = vand.u32 %v389, 15
      %v422 = vand.u32 %v390, 15
      %v423 = vand.u32 %v391, 15
      %vm424 = vcmp.ge.s32.totalorder %v392, 1
      %vm425 = vcmp.ge.s32.totalorder %v393, 1
      %vm426 = vcmp.ge.s32.totalorder %v394, 1
      %vm427 = vcmp.ge.s32.totalorder %v395, 1
      %vm428 = vcmp.ge.s32.totalorder %v396, 1
      %vm429 = vcmp.ge.s32.totalorder %v397, 1
      %vm430 = vcmp.ge.s32.totalorder %v398, 1
      %vm431 = vcmp.ge.s32.totalorder %v399, 1
      %vm432 = vcmp.ge.s32.totalorder %v400, 1
      %vm433 = vcmp.ge.s32.totalorder %v401, 1
      %vm434 = vcmp.ge.s32.totalorder %v402, 1
      %vm435 = vcmp.ge.s32.totalorder %v403, 1
      %vm436 = vcmp.ge.s32.totalorder %v404, 1
      %vm437 = vcmp.ge.s32.totalorder %v405, 1
      %vm438 = vcmp.ge.s32.totalorder %v406, 1
      %vm439 = vcmp.ge.s32.totalorder %v407, 1
      %vm440 = vcmp.ge.s32.totalorder %v408, 1
      %vm441 = vcmp.ge.s32.totalorder %v409, 1
      %vm442 = vcmp.ge.s32.totalorder %v410, 1
      %vm443 = vcmp.ge.s32.totalorder %v411, 1
      %vm444 = vcmp.ge.s32.totalorder %v412, 1
      %vm445 = vcmp.ge.s32.totalorder %v413, 1
      %vm446 = vcmp.ge.s32.totalorder %v414, 1
      %vm447 = vcmp.ge.s32.totalorder %v415, 1
      %vm448 = vcmp.ge.s32.totalorder %v416, 1
      %vm449 = vcmp.ge.s32.totalorder %v417, 1
      %vm450 = vcmp.ge.s32.totalorder %v418, 1
      %vm451 = vcmp.ge.s32.totalorder %v419, 1
      %vm452 = vcmp.ge.s32.totalorder %v420, 1
      %vm453 = vcmp.ge.s32.totalorder %v421, 1
      %vm454 = vcmp.ge.s32.totalorder %v422, 1
      %vm455 = vcmp.ge.s32.totalorder %v423, 1
      %vm456 = vcmp.lt.s32.totalorder %v392, 15
      %vm457 = vcmp.lt.s32.totalorder %v393, 15
      %vm458 = vcmp.lt.s32.totalorder %v394, 15
      %vm459 = vcmp.lt.s32.totalorder %v395, 15
      %vm460 = vcmp.lt.s32.totalorder %v396, 15
      %vm461 = vcmp.lt.s32.totalorder %v397, 15
      %vm462 = vcmp.lt.s32.totalorder %v398, 15
      %vm463 = vcmp.lt.s32.totalorder %v399, 15
      %vm464 = vcmp.lt.s32.totalorder %v400, 15
      %vm465 = vcmp.lt.s32.totalorder %v401, 15
      %vm466 = vcmp.lt.s32.totalorder %v402, 15
      %vm467 = vcmp.lt.s32.totalorder %v403, 15
      %vm468 = vcmp.lt.s32.totalorder %v404, 15
      %vm469 = vcmp.lt.s32.totalorder %v405, 15
      %vm470 = vcmp.lt.s32.totalorder %v406, 15
      %vm471 = vcmp.lt.s32.totalorder %v407, 15
      %vm472 = vcmp.lt.s32.totalorder %v408, 15
      %vm473 = vcmp.lt.s32.totalorder %v409, 15
      %vm474 = vcmp.lt.s32.totalorder %v410, 15
      %vm475 = vcmp.lt.s32.totalorder %v411, 15
      %vm476 = vcmp.lt.s32.totalorder %v412, 15
      %vm477 = vcmp.lt.s32.totalorder %v413, 15
      %vm478 = vcmp.lt.s32.totalorder %v414, 15
      %vm479 = vcmp.lt.s32.totalorder %v415, 15
      %vm480 = vcmp.lt.s32.totalorder %v416, 15
      %vm481 = vcmp.lt.s32.totalorder %v417, 15
      %vm482 = vcmp.lt.s32.totalorder %v418, 15
      %vm483 = vcmp.lt.s32.totalorder %v419, 15
      %vm484 = vcmp.lt.s32.totalorder %v420, 15
      %vm485 = vcmp.lt.s32.totalorder %v421, 15
      %vm486 = vcmp.lt.s32.totalorder %v422, 15
      %vm487 = vcmp.lt.s32.totalorder %v423, 15
      %v488 = vld [vmem:[#allocation2 + $0x7] sm:$0xff]
      %v489 = vld [vmem:[#allocation2 + $0xf] sm:$0xff]
      %v490 = vld [vmem:[#allocation2 + $0x17] sm:$0xff]
      %v491 = vld [vmem:[#allocation2 + $0x1f] sm:$0xff]
      %v492 = vld [vmem:[#allocation2 + $0x27] sm:$0xff]
      %v493 = vld [vmem:[#allocation2 + $0x2f] sm:$0xff]
      %v494 = vld [vmem:[#allocation2 + $0x37] sm:$0xff]
      %v495 = vld [vmem:[#allocation2 + $0x3f] sm:$0xff]
      %v496 = vld [vmem:[#allocation2 + $0x47] sm:$0xff]
      %v497 = vld [vmem:[#allocation2 + $0x4f] sm:$0xff]
      %v498 = vld [vmem:[#allocation2 + $0x57] sm:$0xff]
      %v499 = vld [vmem:[#allocation2 + $0x5f] sm:$0xff]
      %v500 = vld [vmem:[#allocation2 + $0x67] sm:$0xff]
      %v501 = vld [vmem:[#allocation2 + $0x6f] sm:$0xff]
      %v502 = vld [vmem:[#allocation2 + $0x77] sm:$0xff]
      %v503 = vld [vmem:[#allocation2 + $0x7f] sm:$0xff]
      %v504 = vld [vmem:[#allocation2 + $0x87] sm:$0xff]
      %v505 = vld [vmem:[#allocation2 + $0x8f] sm:$0xff]
      %v506 = vld [vmem:[#allocation2 + $0x97] sm:$0xff]
      %v507 = vld [vmem:[#allocation2 + $0x9f] sm:$0xff]
      %v508 = vld [vmem:[#allocation2 + $0xa7] sm:$0xff]
      %v509 = vld [vmem:[#allocation2 + $0xaf] sm:$0xff]
      %v510 = vld [vmem:[#allocation2 + $0xb7] sm:$0xff]
      %v511 = vld [vmem:[#allocation2 + $0xbf] sm:$0xff]
      %v512 = vld [vmem:[#allocation2 + $0xc7] sm:$0xff]
      %v513 = vld [vmem:[#allocation2 + $0xcf] sm:$0xff]
      %v514 = vld [vmem:[#allocation2 + $0xd7] sm:$0xff]
      %v515 = vld [vmem:[#allocation2 + $0xdf] sm:$0xff]
      %v516 = vld [vmem:[#allocation2 + $0xe7] sm:$0xff]
      %v517 = vld [vmem:[#allocation2 + $0xef] sm:$0xff]
      %v518 = vld [vmem:[#allocation2 + $0xf7] sm:$0xff]
      %v519 = vld [vmem:[#allocation2 + $0xff] sm:$0xff]
      %v520 = vsel %vm424, 1, 0
      %v521 = vsel %vm425, 1, 0
      %v522 = vsel %vm426, 1, 0
      %v523 = vsel %vm427, 1, 0
      %v524 = vsel %vm428, 1, 0
      %v525 = vsel %vm429, 1, 0
      %v526 = vsel %vm430, 1, 0
      %v527 = vsel %vm431, 1, 0
      %v528 = vsel %vm432, 1, 0
      %v529 = vsel %vm433, 1, 0
      %v530 = vsel %vm434, 1, 0
      %v531 = vsel %vm435, 1, 0
      %v532 = vsel %vm436, 1, 0
      %v533 = vsel %vm437, 1, 0
      %v534 = vsel %vm438, 1, 0
      %v535 = vsel %vm439, 1, 0
      %v536 = vsel %vm440, 1, 0
      %v537 = vsel %vm441, 1, 0
      %v538 = vsel %vm442, 1, 0
      %v539 = vsel %vm443, 1, 0
      %v540 = vsel %vm444, 1, 0
      %v541 = vsel %vm445, 1, 0
      %v542 = vsel %vm446, 1, 0
      %v543 = vsel %vm447, 1, 0
      %v544 = vsel %vm448, 1, 0
      %v545 = vsel %vm449, 1, 0
      %v546 = vsel %vm450, 1, 0
      %v547 = vsel %vm451, 1, 0
      %v548 = vsel %vm452, 1, 0
      %v549 = vsel %vm453, 1, 0
      %v550 = vsel %vm454, 1, 0
      %v551 = vsel %vm455, 1, 0
      %vm552 = vcmp.eq.s32.totalorder %v520, 1
      %vm553 = vcmp.eq.s32.totalorder %v521, 1
      %vm554 = vcmp.eq.s32.totalorder %v522, 1
      %vm555 = vcmp.eq.s32.totalorder %v523, 1
      %vm556 = vcmp.eq.s32.totalorder %v524, 1
      %vm557 = vcmp.eq.s32.totalorder %v525, 1
      %vm558 = vcmp.eq.s32.totalorder %v526, 1
      %vm559 = vcmp.eq.s32.totalorder %v527, 1
      %vm560 = vcmp.eq.s32.totalorder %v528, 1
      %vm561 = vcmp.eq.s32.totalorder %v529, 1
      %vm562 = vcmp.eq.s32.totalorder %v530, 1
      %vm563 = vcmp.eq.s32.totalorder %v531, 1
      %vm564 = vcmp.eq.s32.totalorder %v532, 1
      %vm565 = vcmp.eq.s32.totalorder %v533, 1
      %vm566 = vcmp.eq.s32.totalorder %v534, 1
      %vm567 = vcmp.eq.s32.totalorder %v535, 1
      %vm568 = vcmp.eq.s32.totalorder %v536, 1
      %vm569 = vcmp.eq.s32.totalorder %v537, 1
      %vm570 = vcmp.eq.s32.totalorder %v538, 1
      %vm571 = vcmp.eq.s32.totalorder %v539, 1
      %vm572 = vcmp.eq.s32.totalorder %v540, 1
      %vm573 = vcmp.eq.s32.totalorder %v541, 1
      %vm574 = vcmp.eq.s32.totalorder %v542, 1
      %vm575 = vcmp.eq.s32.totalorder %v543, 1
      %vm576 = vcmp.eq.s32.totalorder %v544, 1
      %vm577 = vcmp.eq.s32.totalorder %v545, 1
      %vm578 = vcmp.eq.s32.totalorder %v546, 1
      %vm579 = vcmp.eq.s32.totalorder %v547, 1
      %vm580 = vcmp.eq.s32.totalorder %v548, 1
      %vm581 = vcmp.eq.s32.totalorder %v549, 1
      %vm582 = vcmp.eq.s32.totalorder %v550, 1
      %vm583 = vcmp.eq.s32.totalorder %v551, 1
      %v584 = vsel %vm552, %v488, 0.0
      %v585 = vsel %vm553, %v489, 0.0
      %v586 = vsel %vm554, %v490, 0.0
      %v587 = vsel %vm555, %v491, 0.0
      %v588 = vsel %vm556, %v492, 0.0
      %v589 = vsel %vm557, %v493, 0.0
      %v590 = vsel %vm558, %v494, 0.0
      %v591 = vsel %vm559, %v495, 0.0
      %v592 = vsel %vm560, %v496, 0.0
      %v593 = vsel %vm561, %v497, 0.0
      %v594 = vsel %vm562, %v498, 0.0
      %v595 = vsel %vm563, %v499, 0.0
      %v596 = vsel %vm564, %v500, 0.0
      %v597 = vsel %vm565, %v501, 0.0
      %v598 = vsel %vm566, %v502, 0.0
      %v599 = vsel %vm567, %v503, 0.0
      %v600 = vsel %vm568, %v504, 0.0
      %v601 = vsel %vm569, %v505, 0.0
      %v602 = vsel %vm570, %v506, 0.0
      %v603 = vsel %vm571, %v507, 0.0
      %v604 = vsel %vm572, %v508, 0.0
      %v605 = vsel %vm573, %v509, 0.0
      %v606 = vsel %vm574, %v510, 0.0
      %v607 = vsel %vm575, %v511, 0.0
      %v608 = vsel %vm576, %v512, 0.0
      %v609 = vsel %vm577, %v513, 0.0
      %v610 = vsel %vm578, %v514, 0.0
      %v611 = vsel %vm579, %v515, 0.0
      %v612 = vsel %vm580, %v516, 0.0
      %v613 = vsel %vm581, %v517, 0.0
      %v614 = vsel %vm582, %v518, 0.0
      %v615 = vsel %vm583, %v519, 0.0
      %v616 = vld [vmem:[#allocation2 + $0x8] sm:$0xff]
      %v617 = vld [vmem:[#allocation2 + $0x10] sm:$0xff]
      %v618 = vld [vmem:[#allocation2 + $0x18] sm:$0xff]
      %v619 = vld [vmem:[#allocation2 + $0x20] sm:$0xff]
      %v620 = vld [vmem:[#allocation2 + $0x28] sm:$0xff]
      %v621 = vld [vmem:[#allocation2 + $0x30] sm:$0xff]
      %v622 = vld [vmem:[#allocation2 + $0x38] sm:$0xff]
      %v623 = vld [vmem:[#allocation2 + $0x40] sm:$0xff]
      %v624 = vld [vmem:[#allocation2 + $0x48] sm:$0xff]
      %v625 = vld [vmem:[#allocation2 + $0x50] sm:$0xff]
      %v626 = vld [vmem:[#allocation2 + $0x58] sm:$0xff]
      %v627 = vld [vmem:[#allocation2 + $0x60] sm:$0xff]
      %v628 = vld [vmem:[#allocation2 + $0x68] sm:$0xff]
      %v629 = vld [vmem:[#allocation2 + $0x70] sm:$0xff]
      %v630 = vld [vmem:[#allocation2 + $0x78] sm:$0xff]
      %v631 = vld [vmem:[#allocation2 + $0x80] sm:$0xff]
      %v632 = vld [vmem:[#allocation2 + $0x88] sm:$0xff]
      %v633 = vld [vmem:[#allocation2 + $0x90] sm:$0xff]
      %v634 = vld [vmem:[#allocation2 + $0x98] sm:$0xff]
      %v635 = vld [vmem:[#allocation2 + $0xa0] sm:$0xff]
      %v636 = vld [vmem:[#allocation2 + $0xa8] sm:$0xff]
      %v637 = vld [vmem:[#allocation2 + $0xb0] sm:$0xff]
      %v638 = vld [vmem:[#allocation2 + $0xb8] sm:$0xff]
      %v639 = vld [vmem:[#allocation2 + $0xc0] sm:$0xff]
      %v640 = vld [vmem:[#allocation2 + $0xc8] sm:$0xff]
      %v641 = vld [vmem:[#allocation2 + $0xd0] sm:$0xff]
      %v642 = vld [vmem:[#allocation2 + $0xd8] sm:$0xff]
      %v643 = vld [vmem:[#allocation2 + $0xe0] sm:$0xff]
      %v644 = vld [vmem:[#allocation2 + $0xe8] sm:$0xff]
      %v645 = vld [vmem:[#allocation2 + $0xf0] sm:$0xff]
      %v646 = vld [vmem:[#allocation2 + $0xf8] sm:$0xff]
      %v647 = vld [vmem:[#allocation2 + $0x100] sm:$0xff]
      %v648 = vld [vmem:[#allocation2 + $0x9] sm:$0xff]
      %v649 = vld [vmem:[#allocation2 + $0x11] sm:$0xff]
      %v650 = vld [vmem:[#allocation2 + $0x19] sm:$0xff]
      %v651 = vld [vmem:[#allocation2 + $0x21] sm:$0xff]
      %v652 = vld [vmem:[#allocation2 + $0x29] sm:$0xff]
      %v653 = vld [vmem:[#allocation2 + $0x31] sm:$0xff]
      %v654 = vld [vmem:[#allocation2 + $0x39] sm:$0xff]
      %v655 = vld [vmem:[#allocation2 + $0x41] sm:$0xff]
      %v656 = vld [vmem:[#allocation2 + $0x49] sm:$0xff]
      %v657 = vld [vmem:[#allocation2 + $0x51] sm:$0xff]
      %v658 = vld [vmem:[#allocation2 + $0x59] sm:$0xff]
      %v659 = vld [vmem:[#allocation2 + $0x61] sm:$0xff]
      %v660 = vld [vmem:[#allocation2 + $0x69] sm:$0xff]
      %v661 = vld [vmem:[#allocation2 + $0x71] sm:$0xff]
      %v662 = vld [vmem:[#allocation2 + $0x79] sm:$0xff]
      %v663 = vld [vmem:[#allocation2 + $0x81] sm:$0xff]
      %v664 = vld [vmem:[#allocation2 + $0x89] sm:$0xff]
      %v665 = vld [vmem:[#allocation2 + $0x91] sm:$0xff]
      %v666 = vld [vmem:[#allocation2 + $0x99] sm:$0xff]
      %v667 = vld [vmem:[#allocation2 + $0xa1] sm:$0xff]
      %v668 = vld [vmem:[#allocation2 + $0xa9] sm:$0xff]
      %v669 = vld [vmem:[#allocation2 + $0xb1] sm:$0xff]
      %v670 = vld [vmem:[#allocation2 + $0xb9] sm:$0xff]
      %v671 = vld [vmem:[#allocation2 + $0xc1] sm:$0xff]
      %v672 = vld [vmem:[#allocation2 + $0xc9] sm:$0xff]
      %v673 = vld [vmem:[#allocation2 + $0xd1] sm:$0xff]
      %v674 = vld [vmem:[#allocation2 + $0xd9] sm:$0xff]
      %v675 = vld [vmem:[#allocation2 + $0xe1] sm:$0xff]
      %v676 = vld [vmem:[#allocation2 + $0xe9] sm:$0xff]
      %v677 = vld [vmem:[#allocation2 + $0xf1] sm:$0xff]
      %v678 = vld [vmem:[#allocation2 + $0xf9] sm:$0xff]
      %v679 = vld [vmem:[#allocation2 + $0x101] sm:$0xff]
      %v680 = vsel %vm456, 1, 0
      %v681 = vsel %vm457, 1, 0
      %v682 = vsel %vm458, 1, 0
      %v683 = vsel %vm459, 1, 0
      %v684 = vsel %vm460, 1, 0
      %v685 = vsel %vm461, 1, 0
      %v686 = vsel %vm462, 1, 0
      %v687 = vsel %vm463, 1, 0
      %v688 = vsel %vm464, 1, 0
      %v689 = vsel %vm465, 1, 0
      %v690 = vsel %vm466, 1, 0
      %v691 = vsel %vm467, 1, 0
      %v692 = vsel %vm468, 1, 0
      %v693 = vsel %vm469, 1, 0
      %v694 = vsel %vm470, 1, 0
      %v695 = vsel %vm471, 1, 0
      %v696 = vsel %vm472, 1, 0
      %v697 = vsel %vm473, 1, 0
      %v698 = vsel %vm474, 1, 0
      %v699 = vsel %vm475, 1, 0
      %v700 = vsel %vm476, 1, 0
      %v701 = vsel %vm477, 1, 0
      %v702 = vsel %vm478, 1, 0
      %v703 = vsel %vm479, 1, 0
      %v704 = vsel %vm480, 1, 0
      %v705 = vsel %vm481, 1, 0
      %v706 = vsel %vm482, 1, 0
      %v707 = vsel %vm483, 1, 0
      %v708 = vsel %vm484, 1, 0
      %v709 = vsel %vm485, 1, 0
      %v710 = vsel %vm486, 1, 0
      %v711 = vsel %vm487, 1, 0
      %vm712 = vcmp.eq.s32.totalorder %v680, 1
      %vm713 = vcmp.eq.s32.totalorder %v681, 1
      %vm714 = vcmp.eq.s32.totalorder %v682, 1
      %vm715 = vcmp.eq.s32.totalorder %v683, 1
      %vm716 = vcmp.eq.s32.totalorder %v684, 1
      %vm717 = vcmp.eq.s32.totalorder %v685, 1
      %vm718 = vcmp.eq.s32.totalorder %v686, 1
      %vm719 = vcmp.eq.s32.totalorder %v687, 1
      %vm720 = vcmp.eq.s32.totalorder %v688, 1
      %vm721 = vcmp.eq.s32.totalorder %v689, 1
      %vm722 = vcmp.eq.s32.totalorder %v690, 1
      %vm723 = vcmp.eq.s32.totalorder %v691, 1
      %vm724 = vcmp.eq.s32.totalorder %v692, 1
      %vm725 = vcmp.eq.s32.totalorder %v693, 1
      %vm726 = vcmp.eq.s32.totalorder %v694, 1
      %vm727 = vcmp.eq.s32.totalorder %v695, 1
      %vm728 = vcmp.eq.s32.totalorder %v696, 1
      %vm729 = vcmp.eq.s32.totalorder %v697, 1
      %vm730 = vcmp.eq.s32.totalorder %v698, 1
      %vm731 = vcmp.eq.s32.totalorder %v699, 1
      %vm732 = vcmp.eq.s32.totalorder %v700, 1
      %vm733 = vcmp.eq.s32.totalorder %v701, 1
      %vm734 = vcmp.eq.s32.totalorder %v702, 1
      %vm735 = vcmp.eq.s32.totalorder %v703, 1
      %vm736 = vcmp.eq.s32.totalorder %v704, 1
      %vm737 = vcmp.eq.s32.totalorder %v705, 1
      %vm738 = vcmp.eq.s32.totalorder %v706, 1
      %vm739 = vcmp.eq.s32.totalorder %v707, 1
      %vm740 = vcmp.eq.s32.totalorder %v708, 1
      %vm741 = vcmp.eq.s32.totalorder %v709, 1
      %vm742 = vcmp.eq.s32.totalorder %v710, 1
      %vm743 = vcmp.eq.s32.totalorder %v711, 1
      %v744 = vsel %vm712, %v648, 0.0
      %v745 = vsel %vm713, %v649, 0.0
      %v746 = vsel %vm714, %v650, 0.0
      %v747 = vsel %vm715, %v651, 0.0
      %v748 = vsel %vm716, %v652, 0.0
      %v749 = vsel %vm717, %v653, 0.0
      %v750 = vsel %vm718, %v654, 0.0
      %v751 = vsel %vm719, %v655, 0.0
      %v752 = vsel %vm720, %v656, 0.0
      %v753 = vsel %vm721, %v657, 0.0
      %v754 = vsel %vm722, %v658, 0.0
      %v755 = vsel %vm723, %v659, 0.0
      %v756 = vsel %vm724, %v660, 0.0
      %v757 = vsel %vm725, %v661, 0.0
      %v758 = vsel %vm726, %v662, 0.0
      %v759 = vsel %vm727, %v663, 0.0
      %v760 = vsel %vm728, %v664, 0.0
      %v761 = vsel %vm729, %v665, 0.0
      %v762 = vsel %vm730, %v666, 0.0
      %v763 = vsel %vm731, %v667, 0.0
      %v764 = vsel %vm732, %v668, 0.0
      %v765 = vsel %vm733, %v669, 0.0
      %v766 = vsel %vm734, %v670, 0.0
      %v767 = vsel %vm735, %v671, 0.0
      %v768 = vsel %vm736, %v672, 0.0
      %v769 = vsel %vm737, %v673, 0.0
      %v770 = vsel %vm738, %v674, 0.0
      %v771 = vsel %vm739, %v675, 0.0
      %v772 = vsel %vm740, %v676, 0.0
      %v773 = vsel %vm741, %v677, 0.0
      %v774 = vsel %vm742, %v678, 0.0
      %v775 = vsel %vm743, %v679, 0.0
      %v776 = vld [vmem:[#allocation2 + $0x107] sm:$0xff]
      %v777 = vld [vmem:[#allocation2 + $0x10f] sm:$0xff]
      %v778 = vsel %vm552, %v490, 0.0
      %v779 = vsel %vm553, %v491, 0.0
      %v780 = vsel %vm554, %v492, 0.0
      %v781 = vsel %vm555, %v493, 0.0
      %v782 = vsel %vm556, %v494, 0.0
      %v783 = vsel %vm557, %v495, 0.0
      %v784 = vsel %vm558, %v496, 0.0
      %v785 = vsel %vm559, %v497, 0.0
      %v786 = vsel %vm560, %v498, 0.0
      %v787 = vsel %vm561, %v499, 0.0
      %v788 = vsel %vm562, %v500, 0.0
      %v789 = vsel %vm563, %v501, 0.0
      %v790 = vsel %vm564, %v502, 0.0
      %v791 = vsel %vm565, %v503, 0.0
      %v792 = vsel %vm566, %v504, 0.0
      %v793 = vsel %vm567, %v505, 0.0
      %v794 = vsel %vm568, %v506, 0.0
      %v795 = vsel %vm569, %v507, 0.0
      %v796 = vsel %vm570, %v508, 0.0
      %v797 = vsel %vm571, %v509, 0.0
      %v798 = vsel %vm572, %v510, 0.0
      %v799 = vsel %vm573, %v511, 0.0
      %v800 = vsel %vm574, %v512, 0.0
      %v801 = vsel %vm575, %v513, 0.0
      %v802 = vsel %vm576, %v514, 0.0
      %v803 = vsel %vm577, %v515, 0.0
      %v804 = vsel %vm578, %v516, 0.0
      %v805 = vsel %vm579, %v517, 0.0
      %v806 = vsel %vm580, %v518, 0.0
      %v807 = vsel %vm581, %v519, 0.0
      %v808 = vsel %vm582, %v776, 0.0
      %v809 = vsel %vm583, %v777, 0.0
      %v810 = vld [vmem:[#allocation2 + $0x108] sm:$0xff]
      %v811 = vld [vmem:[#allocation2 + $0x110] sm:$0xff]
      %v812 = vld [vmem:[#allocation2 + $0x109] sm:$0xff]
      %v813 = vld [vmem:[#allocation2 + $0x111] sm:$0xff]
      %v814 = vsel %vm712, %v650, 0.0
      %v815 = vsel %vm713, %v651, 0.0
      %v816 = vsel %vm714, %v652, 0.0
      %v817 = vsel %vm715, %v653, 0.0
      %v818 = vsel %vm716, %v654, 0.0
      %v819 = vsel %vm717, %v655, 0.0
      %v820 = vsel %vm718, %v656, 0.0
      %v821 = vsel %vm719, %v657, 0.0
      %v822 = vsel %vm720, %v658, 0.0
      %v823 = vsel %vm721, %v659, 0.0
      %v824 = vsel %vm722, %v660, 0.0
      %v825 = vsel %vm723, %v661, 0.0
      %v826 = vsel %vm724, %v662, 0.0
      %v827 = vsel %vm725, %v663, 0.0
      %v828 = vsel %vm726, %v664, 0.0
      %v829 = vsel %vm727, %v665, 0.0
      %v830 = vsel %vm728, %v666, 0.0
      %v831 = vsel %vm729, %v667, 0.0
      %v832 = vsel %vm730, %v668, 0.0
      %v833 = vsel %vm731, %v669, 0.0
      %v834 = vsel %vm732, %v670, 0.0
      %v835 = vsel %vm733, %v671, 0.0
      %v836 = vsel %vm734, %v672, 0.0
      %v837 = vsel %vm735, %v673, 0.0
      %v838 = vsel %vm736, %v674, 0.0
      %v839 = vsel %vm737, %v675, 0.0
      %v840 = vsel %vm738, %v676, 0.0
      %v841 = vsel %vm739, %v677, 0.0
      %v842 = vsel %vm740, %v678, 0.0
      %v843 = vsel %vm741, %v679, 0.0
      %v844 = vsel %vm742, %v812, 0.0
      %v845 = vsel %vm743, %v813, 0.0
      %v846 = vld [vmem:[#allocation2 + $0x117] sm:$0xff]
      %v847 = vld [vmem:[#allocation2 + $0x11f] sm:$0xff]
      %v848 = vsel %vm552, %v492, 0.0
      %v849 = vsel %vm553, %v493, 0.0
      %v850 = vsel %vm554, %v494, 0.0
      %v851 = vsel %vm555, %v495, 0.0
      %v852 = vsel %vm556, %v496, 0.0
      %v853 = vsel %vm557, %v497, 0.0
      %v854 = vsel %vm558, %v498, 0.0
      %v855 = vsel %vm559, %v499, 0.0
      %v856 = vsel %vm560, %v500, 0.0
      %v857 = vsel %vm561, %v501, 0.0
      %v858 = vsel %vm562, %v502, 0.0
      %v859 = vsel %vm563, %v503, 0.0
      %v860 = vsel %vm564, %v504, 0.0
      %v861 = vsel %vm565, %v505, 0.0
      %v862 = vsel %vm566, %v506, 0.0
      %v863 = vsel %vm567, %v507, 0.0
      %v864 = vsel %vm568, %v508, 0.0
      %v865 = vsel %vm569, %v509, 0.0
      %v866 = vsel %vm570, %v510, 0.0
      %v867 = vsel %vm571, %v511, 0.0
      %v868 = vsel %vm572, %v512, 0.0
      %v869 = vsel %vm573, %v513, 0.0
      %v870 = vsel %vm574, %v514, 0.0
      %v871 = vsel %vm575, %v515, 0.0
      %v872 = vsel %vm576, %v516, 0.0
      %v873 = vsel %vm577, %v517, 0.0
      %v874 = vsel %vm578, %v518, 0.0
      %v875 = vsel %vm579, %v519, 0.0
      %v876 = vsel %vm580, %v776, 0.0
      %v877 = vsel %vm581, %v777, 0.0
      %v878 = vsel %vm582, %v846, 0.0
      %v879 = vsel %vm583, %v847, 0.0
      %v880 = vld [vmem:[#allocation2 + $0x118] sm:$0xff]
      %v881 = vld [vmem:[#allocation2 + $0x120] sm:$0xff]
      %v882 = vld [vmem:[#allocation2 + $0x119] sm:$0xff]
      %v883 = vld [vmem:[#allocation2 + $0x121] sm:$0xff]
      %v884 = vsel %vm712, %v652, 0.0
      %v885 = vsel %vm713, %v653, 0.0
      %v886 = vsel %vm714, %v654, 0.0
      %v887 = vsel %vm715, %v655, 0.0
      %v888 = vsel %vm716, %v656, 0.0
      %v889 = vsel %vm717, %v657, 0.0
      %v890 = vsel %vm718, %v658, 0.0
      %v891 = vsel %vm719, %v659, 0.0
      %v892 = vsel %vm720, %v660, 0.0
      %v893 = vsel %vm721, %v661, 0.0
      %v894 = vsel %vm722, %v662, 0.0
      %v895 = vsel %vm723, %v663, 0.0
      %v896 = vsel %vm724, %v664, 0.0
      %v897 = vsel %vm725, %v665, 0.0
      %v898 = vsel %vm726, %v666, 0.0
      %v899 = vsel %vm727, %v667, 0.0
      %v900 = vsel %vm728, %v668, 0.0
      %v901 = vsel %vm729, %v669, 0.0
      %v902 = vsel %vm730, %v670, 0.0
      %v903 = vsel %vm731, %v671, 0.0
      %v904 = vsel %vm732, %v672, 0.0
      %v905 = vsel %vm733, %v673, 0.0
      %v906 = vsel %vm734, %v674, 0.0
      %v907 = vsel %vm735, %v675, 0.0
      %v908 = vsel %vm736, %v676, 0.0
      %v909 = vsel %vm737, %v677, 0.0
      %v910 = vsel %vm738, %v678, 0.0
      %v911 = vsel %vm739, %v679, 0.0
      %v912 = vsel %vm740, %v812, 0.0
      %v913 = vsel %vm741, %v813, 0.0
      %v914 = vsel %vm742, %v882, 0.0
      %v915 = vsel %vm743, %v883, 0.0
      %948 = vrot.lane.b32.xlu0 %v616, 4
      %v949 = vpop.permute.xlu0 %948
      %950 = vrot.lane.b32.xlu0 %v617, 4
      %v951 = vpop.permute.xlu0 %950
      %952 = vrot.lane.b32.xlu0 %v618, 4
      %v953 = vpop.permute.xlu0 %952
      %954 = vrot.lane.b32.xlu0 %v619, 4
      %v955 = vpop.permute.xlu0 %954
      %956 = vrot.lane.b32.xlu0 %v620, 4
      %v957 = vpop.permute.xlu0 %956
      %958 = vrot.lane.b32.xlu0 %v621, 4
      %v959 = vpop.permute.xlu0 %958
      %960 = vrot.lane.b32.xlu0 %v622, 4
      %v961 = vpop.permute.xlu0 %960
      %962 = vrot.lane.b32.xlu0 %v623, 4
      %v963 = vpop.permute.xlu0 %962
      %964 = vrot.lane.b32.xlu0 %v624, 4
      %v965 = vpop.permute.xlu0 %964
      %966 = vrot.lane.b32.xlu0 %v625, 4
      %v967 = vpop.permute.xlu0 %966
      %968 = vrot.lane.b32.xlu0 %v626, 4
      %v969 = vpop.permute.xlu0 %968
      %970 = vrot.lane.b32.xlu0 %v627, 4
      %v971 = vpop.permute.xlu0 %970
      %972 = vrot.lane.b32.xlu0 %v628, 4
      %v973 = vpop.permute.xlu0 %972
      %974 = vrot.lane.b32.xlu0 %v629, 4
      %v975 = vpop.permute.xlu0 %974
      %976 = vrot.lane.b32.xlu0 %v630, 4
      %v977 = vpop.permute.xlu0 %976
      %978 = vrot.lane.b32.xlu0 %v631, 4
      %v979 = vpop.permute.xlu0 %978
      %980 = vrot.lane.b32.xlu0 %v632, 4
      %v981 = vpop.permute.xlu0 %980
      %982 = vrot.lane.b32.xlu0 %v633, 4
      %v983 = vpop.permute.xlu0 %982
      %984 = vrot.lane.b32.xlu0 %v634, 4
      %v985 = vpop.permute.xlu0 %984
      %986 = vrot.lane.b32.xlu0 %v635, 4
      %v987 = vpop.permute.xlu0 %986
      %988 = vrot.lane.b32.xlu0 %v636, 4
      %v989 = vpop.permute.xlu0 %988
      %990 = vrot.lane.b32.xlu0 %v637, 4
      %v991 = vpop.permute.xlu0 %990
      %992 = vrot.lane.b32.xlu0 %v638, 4
      %v993 = vpop.permute.xlu0 %992
      %994 = vrot.lane.b32.xlu0 %v639, 4
      %v995 = vpop.permute.xlu0 %994
      %996 = vrot.lane.b32.xlu0 %v640, 4
      %v997 = vpop.permute.xlu0 %996
      %998 = vrot.lane.b32.xlu0 %v641, 4
      %v999 = vpop.permute.xlu0 %998
      %1000 = vrot.lane.b32.xlu0 %v642, 4
      %v1001 = vpop.permute.xlu0 %1000
      %1002 = vrot.lane.b32.xlu0 %v643, 4
      %v1003 = vpop.permute.xlu0 %1002
      %1004 = vrot.lane.b32.xlu0 %v644, 4
      %v1005 = vpop.permute.xlu0 %1004
      %1006 = vrot.lane.b32.xlu0 %v645, 4
      %v1007 = vpop.permute.xlu0 %1006
      %1008 = vrot.lane.b32.xlu0 %v646, 4
      %v1009 = vpop.permute.xlu0 %1008
      %1010 = vrot.lane.b32.xlu0 %v647, 4
      %v1011 = vpop.permute.xlu0 %1010
      %1076 = vrot.lane.b32.xlu0 %v744, 8
      %v1077 = vpop.permute.xlu0 %1076
      %1078 = vrot.lane.b32.xlu0 %v745, 8
      %v1079 = vpop.permute.xlu0 %1078
      %1080 = vrot.lane.b32.xlu0 %v746, 8
      %v1081 = vpop.permute.xlu0 %1080
      %1082 = vrot.lane.b32.xlu0 %v747, 8
      %v1083 = vpop.permute.xlu0 %1082
      %1084 = vrot.lane.b32.xlu0 %v748, 8
      %v1085 = vpop.permute.xlu0 %1084
      %1086 = vrot.lane.b32.xlu0 %v749, 8
      %v1087 = vpop.permute.xlu0 %1086
      %1088 = vrot.lane.b32.xlu0 %v750, 8
      %v1089 = vpop.permute.xlu0 %1088
      %1090 = vrot.lane.b32.xlu0 %v751, 8
      %v1091 = vpop.permute.xlu0 %1090
      %1092 = vrot.lane.b32.xlu0 %v752, 8
      %v1093 = vpop.permute.xlu0 %1092
      %1094 = vrot.lane.b32.xlu0 %v753, 8
      %v1095 = vpop.permute.xlu0 %1094
      %1096 = vrot.lane.b32.xlu0 %v754, 8
      %v1097 = vpop.permute.xlu0 %1096
      %1098 = vrot.lane.b32.xlu0 %v755, 8
      %v1099 = vpop.permute.xlu0 %1098
      %1100 = vrot.lane.b32.xlu0 %v756, 8
      %v1101 = vpop.permute.xlu0 %1100
      %1102 = vrot.lane.b32.xlu0 %v757, 8
      %v1103 = vpop.permute.xlu0 %1102
      %1104 = vrot.lane.b32.xlu0 %v758, 8
      %v1105 = vpop.permute.xlu0 %1104
      %1106 = vrot.lane.b32.xlu0 %v759, 8
      %v1107 = vpop.permute.xlu0 %1106
      %1108 = vrot.lane.b32.xlu0 %v760, 8
      %v1109 = vpop.permute.xlu0 %1108
      %1110 = vrot.lane.b32.xlu0 %v761, 8
      %v1111 = vpop.permute.xlu0 %1110
      %1112 = vrot.lane.b32.xlu0 %v762, 8
      %v1113 = vpop.permute.xlu0 %1112
      %1114 = vrot.lane.b32.xlu0 %v763, 8
      %v1115 = vpop.permute.xlu0 %1114
      %1116 = vrot.lane.b32.xlu0 %v764, 8
      %v1117 = vpop.permute.xlu0 %1116
      %1118 = vrot.lane.b32.xlu0 %v765, 8
      %v1119 = vpop.permute.xlu0 %1118
      %1120 = vrot.lane.b32.xlu0 %v766, 8
      %v1121 = vpop.permute.xlu0 %1120
      %1122 = vrot.lane.b32.xlu0 %v767, 8
      %v1123 = vpop.permute.xlu0 %1122
      %1124 = vrot.lane.b32.xlu0 %v768, 8
      %v1125 = vpop.permute.xlu0 %1124
      %1126 = vrot.lane.b32.xlu0 %v769, 8
      %v1127 = vpop.permute.xlu0 %1126
      %1128 = vrot.lane.b32.xlu0 %v770, 8
      %v1129 = vpop.permute.xlu0 %1128
      %1130 = vrot.lane.b32.xlu0 %v771, 8
      %v1131 = vpop.permute.xlu0 %1130
      %1132 = vrot.lane.b32.xlu0 %v772, 8
      %v1133 = vpop.permute.xlu0 %1132
      %1134 = vrot.lane.b32.xlu0 %v773, 8
      %v1135 = vpop.permute.xlu0 %1134
      %1136 = vrot.lane.b32.xlu0 %v774, 8
      %v1137 = vpop.permute.xlu0 %1136
      %1138 = vrot.lane.b32.xlu0 %v775, 8
      %v1139 = vpop.permute.xlu0 %1138
      %1204 = vrot.lane.b32.xlu0 %v778, 12
      %v1205 = vpop.permute.xlu0 %1204
      %1206 = vrot.lane.b32.xlu0 %v779, 12
      %v1207 = vpop.permute.xlu0 %1206
      %1208 = vrot.lane.b32.xlu0 %v780, 12
      %v1209 = vpop.permute.xlu0 %1208
      %1210 = vrot.lane.b32.xlu0 %v781, 12
      %v1211 = vpop.permute.xlu0 %1210
      %1212 = vrot.lane.b32.xlu0 %v782, 12
      %v1213 = vpop.permute.xlu0 %1212
      %1214 = vrot.lane.b32.xlu0 %v783, 12
      %v1215 = vpop.permute.xlu0 %1214
      %1216 = vrot.lane.b32.xlu0 %v784, 12
      %v1217 = vpop.permute.xlu0 %1216
      %1218 = vrot.lane.b32.xlu0 %v785, 12
      %v1219 = vpop.permute.xlu0 %1218
      %1220 = vrot.lane.b32.xlu0 %v786, 12
      %v1221 = vpop.permute.xlu0 %1220
      %1222 = vrot.lane.b32.xlu0 %v787, 12
      %v1223 = vpop.permute.xlu0 %1222
      %1224 = vrot.lane.b32.xlu0 %v788, 12
      %v1225 = vpop.permute.xlu0 %1224
      %1226 = vrot.lane.b32.xlu0 %v789, 12
      %v1227 = vpop.permute.xlu0 %1226
      %1228 = vrot.lane.b32.xlu0 %v790, 12
      %v1229 = vpop.permute.xlu0 %1228
      %1230 = vrot.lane.b32.xlu0 %v791, 12
      %v1231 = vpop.permute.xlu0 %1230
      %1232 = vrot.lane.b32.xlu0 %v792, 12
      %v1233 = vpop.permute.xlu0 %1232
      %1234 = vrot.lane.b32.xlu0 %v793, 12
      %v1235 = vpop.permute.xlu0 %1234
      %1236 = vrot.lane.b32.xlu0 %v794, 12
      %v1237 = vpop.permute.xlu0 %1236
      %1238 = vrot.lane.b32.xlu0 %v795, 12
      %v1239 = vpop.permute.xlu0 %1238
      %1240 = vrot.lane.b32.xlu0 %v796, 12
      %v1241 = vpop.permute.xlu0 %1240
      %1242 = vrot.lane.b32.xlu0 %v797, 12
      %v1243 = vpop.permute.xlu0 %1242
      %1244 = vrot.lane.b32.xlu0 %v798, 12
      %v1245 = vpop.permute.xlu0 %1244
      %1246 = vrot.lane.b32.xlu0 %v799, 12
      %v1247 = vpop.permute.xlu0 %1246
      %1248 = vrot.lane.b32.xlu0 %v800, 12
      %v1249 = vpop.permute.xlu0 %1248
      %1250 = vrot.lane.b32.xlu0 %v801, 12
      %v1251 = vpop.permute.xlu0 %1250
      %1252 = vrot.lane.b32.xlu0 %v802, 12
      %v1253 = vpop.permute.xlu0 %1252
      %1254 = vrot.lane.b32.xlu0 %v803, 12
      %v1255 = vpop.permute.xlu0 %1254
      %1256 = vrot.lane.b32.xlu0 %v804, 12
      %v1257 = vpop.permute.xlu0 %1256
      %1258 = vrot.lane.b32.xlu0 %v805, 12
      %v1259 = vpop.permute.xlu0 %1258
      %1260 = vrot.lane.b32.xlu0 %v806, 12
      %v1261 = vpop.permute.xlu0 %1260
      %1262 = vrot.lane.b32.xlu0 %v807, 12
      %v1263 = vpop.permute.xlu0 %1262
      %1264 = vrot.lane.b32.xlu0 %v808, 12
      %v1265 = vpop.permute.xlu0 %1264
      %1266 = vrot.lane.b32.xlu0 %v809, 12
      %v1267 = vpop.permute.xlu0 %1266
      %1302 = vrot.lane.b32.xlu0 %v618, 16
      %v1303 = vpop.permute.xlu0 %1302
      %1304 = vrot.lane.b32.xlu0 %v619, 16
      %v1305 = vpop.permute.xlu0 %1304
      %1306 = vrot.lane.b32.xlu0 %v620, 16
      %v1307 = vpop.permute.xlu0 %1306
      %1308 = vrot.lane.b32.xlu0 %v621, 16
      %v1309 = vpop.permute.xlu0 %1308
      %1310 = vrot.lane.b32.xlu0 %v622, 16
      %v1311 = vpop.permute.xlu0 %1310
      %1312 = vrot.lane.b32.xlu0 %v623, 16
      %v1313 = vpop.permute.xlu0 %1312
      %1314 = vrot.lane.b32.xlu0 %v624, 16
      %v1315 = vpop.permute.xlu0 %1314
      %1316 = vrot.lane.b32.xlu0 %v625, 16
      %v1317 = vpop.permute.xlu0 %1316
      %1318 = vrot.lane.b32.xlu0 %v626, 16
      %v1319 = vpop.permute.xlu0 %1318
      %1320 = vrot.lane.b32.xlu0 %v627, 16
      %v1321 = vpop.permute.xlu0 %1320
      %1322 = vrot.lane.b32.xlu0 %v628, 16
      %v1323 = vpop.permute.xlu0 %1322
      %1324 = vrot.lane.b32.xlu0 %v629, 16
      %v1325 = vpop.permute.xlu0 %1324
      %1326 = vrot.lane.b32.xlu0 %v630, 16
      %v1327 = vpop.permute.xlu0 %1326
      %1328 = vrot.lane.b32.xlu0 %v631, 16
      %v1329 = vpop.permute.xlu0 %1328
      %1330 = vrot.lane.b32.xlu0 %v632, 16
      %v1331 = vpop.permute.xlu0 %1330
      %1332 = vrot.lane.b32.xlu0 %v633, 16
      %v1333 = vpop.permute.xlu0 %1332
      %1334 = vrot.lane.b32.xlu0 %v634, 16
      %v1335 = vpop.permute.xlu0 %1334
      %1336 = vrot.lane.b32.xlu0 %v635, 16
      %v1337 = vpop.permute.xlu0 %1336
      %1338 = vrot.lane.b32.xlu0 %v636, 16
      %v1339 = vpop.permute.xlu0 %1338
      %1340 = vrot.lane.b32.xlu0 %v637, 16
      %v1341 = vpop.permute.xlu0 %1340
      %1342 = vrot.lane.b32.xlu0 %v638, 16
      %v1343 = vpop.permute.xlu0 %1342
      %1344 = vrot.lane.b32.xlu0 %v639, 16
      %v1345 = vpop.permute.xlu0 %1344
      %1346 = vrot.lane.b32.xlu0 %v640, 16
      %v1347 = vpop.permute.xlu0 %1346
      %1348 = vrot.lane.b32.xlu0 %v641, 16
      %v1349 = vpop.permute.xlu0 %1348
      %1350 = vrot.lane.b32.xlu0 %v642, 16
      %v1351 = vpop.permute.xlu0 %1350
      %1352 = vrot.lane.b32.xlu0 %v643, 16
      %v1353 = vpop.permute.xlu0 %1352
      %1354 = vrot.lane.b32.xlu0 %v644, 16
      %v1355 = vpop.permute.xlu0 %1354
      %1356 = vrot.lane.b32.xlu0 %v645, 16
      %v1357 = vpop.permute.xlu0 %1356
      %1358 = vrot.lane.b32.xlu0 %v646, 16
      %v1359 = vpop.permute.xlu0 %1358
      %1360 = vrot.lane.b32.xlu0 %v647, 16
      %v1361 = vpop.permute.xlu0 %1360
      %1362 = vrot.lane.b32.xlu0 %v810, 16
      %v1363 = vpop.permute.xlu0 %1362
      %1364 = vrot.lane.b32.xlu0 %v811, 16
      %v1365 = vpop.permute.xlu0 %1364
      %1430 = vrot.lane.b32.xlu0 %v814, 20
      %v1431 = vpop.permute.xlu0 %1430
      %1432 = vrot.lane.b32.xlu0 %v815, 20
      %v1433 = vpop.permute.xlu0 %1432
      %1434 = vrot.lane.b32.xlu0 %v816, 20
      %v1435 = vpop.permute.xlu0 %1434
      %1436 = vrot.lane.b32.xlu0 %v817, 20
      %v1437 = vpop.permute.xlu0 %1436
      %1438 = vrot.lane.b32.xlu0 %v818, 20
      %v1439 = vpop.permute.xlu0 %1438
      %1440 = vrot.lane.b32.xlu0 %v819, 20
      %v1441 = vpop.permute.xlu0 %1440
      %1442 = vrot.lane.b32.xlu0 %v820, 20
      %v1443 = vpop.permute.xlu0 %1442
      %1444 = vrot.lane.b32.xlu0 %v821, 20
      %v1445 = vpop.permute.xlu0 %1444
      %1446 = vrot.lane.b32.xlu0 %v822, 20
      %v1447 = vpop.permute.xlu0 %1446
      %1448 = vrot.lane.b32.xlu0 %v823, 20
      %v1449 = vpop.permute.xlu0 %1448
      %1450 = vrot.lane.b32.xlu0 %v824, 20
      %v1451 = vpop.permute.xlu0 %1450
      %1452 = vrot.lane.b32.xlu0 %v825, 20
      %v1453 = vpop.permute.xlu0 %1452
      %1454 = vrot.lane.b32.xlu0 %v826, 20
      %v1455 = vpop.permute.xlu0 %1454
      %1456 = vrot.lane.b32.xlu0 %v827, 20
      %v1457 = vpop.permute.xlu0 %1456
      %1458 = vrot.lane.b32.xlu0 %v828, 20
      %v1459 = vpop.permute.xlu0 %1458
      %1460 = vrot.lane.b32.xlu0 %v829, 20
      %v1461 = vpop.permute.xlu0 %1460
      %1462 = vrot.lane.b32.xlu0 %v830, 20
      %v1463 = vpop.permute.xlu0 %1462
      %1464 = vrot.lane.b32.xlu0 %v831, 20
      %v1465 = vpop.permute.xlu0 %1464
      %1466 = vrot.lane.b32.xlu0 %v832, 20
      %v1467 = vpop.permute.xlu0 %1466
      %1468 = vrot.lane.b32.xlu0 %v833, 20
      %v1469 = vpop.permute.xlu0 %1468
      %1470 = vrot.lane.b32.xlu0 %v834, 20
      %v1471 = vpop.permute.xlu0 %1470
      %1472 = vrot.lane.b32.xlu0 %v835, 20
      %v1473 = vpop.permute.xlu0 %1472
      %1474 = vrot.lane.b32.xlu0 %v836, 20
      %v1475 = vpop.permute.xlu0 %1474
      %1476 = vrot.lane.b32.xlu0 %v837, 20
      %v1477 = vpop.permute.xlu0 %1476
      %1478 = vrot.lane.b32.xlu0 %v838, 20
      %v1479 = vpop.permute.xlu0 %1478
      %1480 = vrot.lane.b32.xlu0 %v839, 20
      %v1481 = vpop.permute.xlu0 %1480
      %1482 = vrot.lane.b32.xlu0 %v840, 20
      %v1483 = vpop.permute.xlu0 %1482
      %1484 = vrot.lane.b32.xlu0 %v841, 20
      %v1485 = vpop.permute.xlu0 %1484
      %1486 = vrot.lane.b32.xlu0 %v842, 20
      %v1487 = vpop.permute.xlu0 %1486
      %1488 = vrot.lane.b32.xlu0 %v843, 20
      %v1489 = vpop.permute.xlu0 %1488
      %1490 = vrot.lane.b32.xlu0 %v844, 20
      %v1491 = vpop.permute.xlu0 %1490
      %1492 = vrot.lane.b32.xlu0 %v845, 20
      %v1493 = vpop.permute.xlu0 %1492
      %1558 = vrot.lane.b32.xlu0 %v848, 24
      %v1559 = vpop.permute.xlu0 %1558
      %1560 = vrot.lane.b32.xlu0 %v849, 24
      %v1561 = vpop.permute.xlu0 %1560
      %1562 = vrot.lane.b32.xlu0 %v850, 24
      %v1563 = vpop.permute.xlu0 %1562
      %1564 = vrot.lane.b32.xlu0 %v851, 24
      %v1565 = vpop.permute.xlu0 %1564
      %1566 = vrot.lane.b32.xlu0 %v852, 24
      %v1567 = vpop.permute.xlu0 %1566
      %1568 = vrot.lane.b32.xlu0 %v853, 24
      %v1569 = vpop.permute.xlu0 %1568
      %1570 = vrot.lane.b32.xlu0 %v854, 24
      %v1571 = vpop.permute.xlu0 %1570
      %1572 = vrot.lane.b32.xlu0 %v855, 24
      %v1573 = vpop.permute.xlu0 %1572
      %1574 = vrot.lane.b32.xlu0 %v856, 24
      %v1575 = vpop.permute.xlu0 %1574
      %1576 = vrot.lane.b32.xlu0 %v857, 24
      %v1577 = vpop.permute.xlu0 %1576
      %1578 = vrot.lane.b32.xlu0 %v858, 24
      %v1579 = vpop.permute.xlu0 %1578
      %1580 = vrot.lane.b32.xlu0 %v859, 24
      %v1581 = vpop.permute.xlu0 %1580
      %1582 = vrot.lane.b32.xlu0 %v860, 24
      %v1583 = vpop.permute.xlu0 %1582
      %1584 = vrot.lane.b32.xlu0 %v861, 24
      %v1585 = vpop.permute.xlu0 %1584
      %1586 = vrot.lane.b32.xlu0 %v862, 24
      %v1587 = vpop.permute.xlu0 %1586
      %1588 = vrot.lane.b32.xlu0 %v863, 24
      %v1589 = vpop.permute.xlu0 %1588
      %1590 = vrot.lane.b32.xlu0 %v864, 24
      %v1591 = vpop.permute.xlu0 %1590
      %1592 = vrot.lane.b32.xlu0 %v865, 24
      %v1593 = vpop.permute.xlu0 %1592
      %1594 = vrot.lane.b32.xlu0 %v866, 24
      %v1595 = vpop.permute.xlu0 %1594
      %1596 = vrot.lane.b32.xlu0 %v867, 24
      %v1597 = vpop.permute.xlu0 %1596
      %1598 = vrot.lane.b32.xlu0 %v868, 24
      %v1599 = vpop.permute.xlu0 %1598
      %1600 = vrot.lane.b32.xlu0 %v869, 24
      %v1601 = vpop.permute.xlu0 %1600
      %1602 = vrot.lane.b32.xlu0 %v870, 24
      %v1603 = vpop.permute.xlu0 %1602
      %1604 = vrot.lane.b32.xlu0 %v871, 24
      %v1605 = vpop.permute.xlu0 %1604
      %1606 = vrot.lane.b32.xlu0 %v872, 24
      %v1607 = vpop.permute.xlu0 %1606
      %1608 = vrot.lane.b32.xlu0 %v873, 24
      %v1609 = vpop.permute.xlu0 %1608
      %1610 = vrot.lane.b32.xlu0 %v874, 24
      %v1611 = vpop.permute.xlu0 %1610
      %1612 = vrot.lane.b32.xlu0 %v875, 24
      %v1613 = vpop.permute.xlu0 %1612
      %1614 = vrot.lane.b32.xlu0 %v876, 24
      %v1615 = vpop.permute.xlu0 %1614
      %1616 = vrot.lane.b32.xlu0 %v877, 24
      %v1617 = vpop.permute.xlu0 %1616
      %1618 = vrot.lane.b32.xlu0 %v878, 24
      %v1619 = vpop.permute.xlu0 %1618
      %1620 = vrot.lane.b32.xlu0 %v879, 24
      %v1621 = vpop.permute.xlu0 %1620
      %1656 = vrot.lane.b32.xlu0 %v620, 28
      %v1657 = vpop.permute.xlu0 %1656
      %1658 = vrot.lane.b32.xlu0 %v621, 28
      %v1659 = vpop.permute.xlu0 %1658
      %1660 = vrot.lane.b32.xlu0 %v622, 28
      %v1661 = vpop.permute.xlu0 %1660
      %1662 = vrot.lane.b32.xlu0 %v623, 28
      %v1663 = vpop.permute.xlu0 %1662
      %1664 = vrot.lane.b32.xlu0 %v624, 28
      %v1665 = vpop.permute.xlu0 %1664
      %1666 = vrot.lane.b32.xlu0 %v625, 28
      %v1667 = vpop.permute.xlu0 %1666
      %1668 = vrot.lane.b32.xlu0 %v626, 28
      %v1669 = vpop.permute.xlu0 %1668
      %1670 = vrot.lane.b32.xlu0 %v627, 28
      %v1671 = vpop.permute.xlu0 %1670
      %1672 = vrot.lane.b32.xlu0 %v628, 28
      %v1673 = vpop.permute.xlu0 %1672
      %1674 = vrot.lane.b32.xlu0 %v629, 28
      %v1675 = vpop.permute.xlu0 %1674
      %1676 = vrot.lane.b32.xlu0 %v630, 28
      %v1677 = vpop.permute.xlu0 %1676
      %1678 = vrot.lane.b32.xlu0 %v631, 28
      %v1679 = vpop.permute.xlu0 %1678
      %1680 = vrot.lane.b32.xlu0 %v632, 28
      %v1681 = vpop.permute.xlu0 %1680
      %1682 = vrot.lane.b32.xlu0 %v633, 28
      %v1683 = vpop.permute.xlu0 %1682
      %1684 = vrot.lane.b32.xlu0 %v634, 28
      %v1685 = vpop.permute.xlu0 %1684
      %1686 = vrot.lane.b32.xlu0 %v635, 28
      %v1687 = vpop.permute.xlu0 %1686
      %1688 = vrot.lane.b32.xlu0 %v636, 28
      %v1689 = vpop.permute.xlu0 %1688
      %1690 = vrot.lane.b32.xlu0 %v637, 28
      %v1691 = vpop.permute.xlu0 %1690
      %1692 = vrot.lane.b32.xlu0 %v638, 28
      %v1693 = vpop.permute.xlu0 %1692
      %1694 = vrot.lane.b32.xlu0 %v639, 28
      %v1695 = vpop.permute.xlu0 %1694
      %1696 = vrot.lane.b32.xlu0 %v640, 28
      %v1697 = vpop.permute.xlu0 %1696
      %1698 = vrot.lane.b32.xlu0 %v641, 28
      %v1699 = vpop.permute.xlu0 %1698
      %1700 = vrot.lane.b32.xlu0 %v642, 28
      %v1701 = vpop.permute.xlu0 %1700
      %1702 = vrot.lane.b32.xlu0 %v643, 28
      %v1703 = vpop.permute.xlu0 %1702
      %1704 = vrot.lane.b32.xlu0 %v644, 28
      %v1705 = vpop.permute.xlu0 %1704
      %1706 = vrot.lane.b32.xlu0 %v645, 28
      %v1707 = vpop.permute.xlu0 %1706
      %1708 = vrot.lane.b32.xlu0 %v646, 28
      %v1709 = vpop.permute.xlu0 %1708
      %1710 = vrot.lane.b32.xlu0 %v647, 28
      %v1711 = vpop.permute.xlu0 %1710
      %1712 = vrot.lane.b32.xlu0 %v810, 28
      %v1713 = vpop.permute.xlu0 %1712
      %1714 = vrot.lane.b32.xlu0 %v811, 28
      %v1715 = vpop.permute.xlu0 %1714
      %1716 = vrot.lane.b32.xlu0 %v880, 28
      %v1717 = vpop.permute.xlu0 %1716
      %1718 = vrot.lane.b32.xlu0 %v881, 28
      %v1719 = vpop.permute.xlu0 %1718
      %1784 = vrot.lane.b32.xlu0 %v884, 32
      %v1785 = vpop.permute.xlu0 %1784
      %1786 = vrot.lane.b32.xlu0 %v885, 32
      %v1787 = vpop.permute.xlu0 %1786
      %1788 = vrot.lane.b32.xlu0 %v886, 32
      %v1789 = vpop.permute.xlu0 %1788
      %1790 = vrot.lane.b32.xlu0 %v887, 32
      %v1791 = vpop.permute.xlu0 %1790
      %1792 = vrot.lane.b32.xlu0 %v888, 32
      %v1793 = vpop.permute.xlu0 %1792
      %1794 = vrot.lane.b32.xlu0 %v889, 32
      %v1795 = vpop.permute.xlu0 %1794
      %1796 = vrot.lane.b32.xlu0 %v890, 32
      %v1797 = vpop.permute.xlu0 %1796
      %1798 = vrot.lane.b32.xlu0 %v891, 32
      %v1799 = vpop.permute.xlu0 %1798
      %1800 = vrot.lane.b32.xlu0 %v892, 32
      %v1801 = vpop.permute.xlu0 %1800
      %1802 = vrot.lane.b32.xlu0 %v893, 32
      %v1803 = vpop.permute.xlu0 %1802
      %1804 = vrot.lane.b32.xlu0 %v894, 32
      %v1805 = vpop.permute.xlu0 %1804
      %1806 = vrot.lane.b32.xlu0 %v895, 32
      %v1807 = vpop.permute.xlu0 %1806
      %1808 = vrot.lane.b32.xlu0 %v896, 32
      %v1809 = vpop.permute.xlu0 %1808
      %1810 = vrot.lane.b32.xlu0 %v897, 32
      %v1811 = vpop.permute.xlu0 %1810
      %1812 = vrot.lane.b32.xlu0 %v898, 32
      %v1813 = vpop.permute.xlu0 %1812
      %1814 = vrot.lane.b32.xlu0 %v899, 32
      %v1815 = vpop.permute.xlu0 %1814
      %1816 = vrot.lane.b32.xlu0 %v900, 32
      %v1817 = vpop.permute.xlu0 %1816
      %1818 = vrot.lane.b32.xlu0 %v901, 32
      %v1819 = vpop.permute.xlu0 %1818
      %1820 = vrot.lane.b32.xlu0 %v902, 32
      %v1821 = vpop.permute.xlu0 %1820
      %1822 = vrot.lane.b32.xlu0 %v903, 32
      %v1823 = vpop.permute.xlu0 %1822
      %1824 = vrot.lane.b32.xlu0 %v904, 32
      %v1825 = vpop.permute.xlu0 %1824
      %1826 = vrot.lane.b32.xlu0 %v905, 32
      %v1827 = vpop.permute.xlu0 %1826
      %1828 = vrot.lane.b32.xlu0 %v906, 32
      %v1829 = vpop.permute.xlu0 %1828
      %1830 = vrot.lane.b32.xlu0 %v907, 32
      %v1831 = vpop.permute.xlu0 %1830
      %1832 = vrot.lane.b32.xlu0 %v908, 32
      %v1833 = vpop.permute.xlu0 %1832
      %1834 = vrot.lane.b32.xlu0 %v909, 32
      %v1835 = vpop.permute.xlu0 %1834
      %1836 = vrot.lane.b32.xlu0 %v910, 32
      %v1837 = vpop.permute.xlu0 %1836
      %1838 = vrot.lane.b32.xlu0 %v911, 32
      %v1839 = vpop.permute.xlu0 %1838
      %1840 = vrot.lane.b32.xlu0 %v912, 32
      %v1841 = vpop.permute.xlu0 %1840
      %1842 = vrot.lane.b32.xlu0 %v913, 32
      %v1843 = vpop.permute.xlu0 %1842
      %1844 = vrot.lane.b32.xlu0 %v914, 32
      %v1845 = vpop.permute.xlu0 %1844
      %1846 = vrot.lane.b32.xlu0 %v915, 32
      %v1847 = vpop.permute.xlu0 %1846
      %v1880 = vsel %vm280, %v584, %v949
      %v1881 = vsel %vm280, %v585, %v951
      %v1882 = vsel %vm280, %v586, %v953
      %v1883 = vsel %vm280, %v587, %v955
      %v1884 = vsel %vm280, %v588, %v957
      %v1885 = vsel %vm280, %v589, %v959
      %v1886 = vsel %vm280, %v590, %v961
      %v1887 = vsel %vm280, %v591, %v963
      %v1888 = vsel %vm280, %v592, %v965
      %v1889 = vsel %vm280, %v593, %v967
      %v1890 = vsel %vm280, %v594, %v969
      %v1891 = vsel %vm280, %v595, %v971
      %v1892 = vsel %vm280, %v596, %v973
      %v1893 = vsel %vm280, %v597, %v975
      %v1894 = vsel %vm280, %v598, %v977
      %v1895 = vsel %vm280, %v599, %v979
      %v1896 = vsel %vm280, %v600, %v981
      %v1897 = vsel %vm280, %v601, %v983
      %v1898 = vsel %vm280, %v602, %v985
      %v1899 = vsel %vm280, %v603, %v987
      %v1900 = vsel %vm280, %v604, %v989
      %v1901 = vsel %vm280, %v605, %v991
      %v1902 = vsel %vm280, %v606, %v993
      %v1903 = vsel %vm280, %v607, %v995
      %v1904 = vsel %vm280, %v608, %v997
      %v1905 = vsel %vm280, %v609, %v999
      %v1906 = vsel %vm280, %v610, %v1001
      %v1907 = vsel %vm280, %v611, %v1003
      %v1908 = vsel %vm280, %v612, %v1005
      %v1909 = vsel %vm280, %v613, %v1007
      %v1910 = vsel %vm280, %v614, %v1009
      %v1911 = vsel %vm280, %v615, %v1011
      %vm1912 = vcmask 64512
      %v1913 = vsel %vm1912, %v1880, %v1077
      %v1914 = vsel %vm1912, %v1881, %v1079
      %v1915 = vsel %vm1912, %v1882, %v1081
      %v1916 = vsel %vm1912, %v1883, %v1083
      %v1917 = vsel %vm1912, %v1884, %v1085
      %v1918 = vsel %vm1912, %v1885, %v1087
      %v1919 = vsel %vm1912, %v1886, %v1089
      %v1920 = vsel %vm1912, %v1887, %v1091
      %v1921 = vsel %vm1912, %v1888, %v1093
      %v1922 = vsel %vm1912, %v1889, %v1095
      %v1923 = vsel %vm1912, %v1890, %v1097
      %v1924 = vsel %vm1912, %v1891, %v1099
      %v1925 = vsel %vm1912, %v1892, %v1101
      %v1926 = vsel %vm1912, %v1893, %v1103
      %v1927 = vsel %vm1912, %v1894, %v1105
      %v1928 = vsel %vm1912, %v1895, %v1107
      %v1929 = vsel %vm1912, %v1896, %v1109
      %v1930 = vsel %vm1912, %v1897, %v1111
      %v1931 = vsel %vm1912, %v1898, %v1113
      %v1932 = vsel %vm1912, %v1899, %v1115
      %v1933 = vsel %vm1912, %v1900, %v1117
      %v1934 = vsel %vm1912, %v1901, %v1119
      %v1935 = vsel %vm1912, %v1902, %v1121
      %v1936 = vsel %vm1912, %v1903, %v1123
      %v1937 = vsel %vm1912, %v1904, %v1125
      %v1938 = vsel %vm1912, %v1905, %v1127
      %v1939 = vsel %vm1912, %v1906, %v1129
      %v1940 = vsel %vm1912, %v1907, %v1131
      %v1941 = vsel %vm1912, %v1908, %v1133
      %v1942 = vsel %vm1912, %v1909, %v1135
      %v1943 = vsel %vm1912, %v1910, %v1137
      %v1944 = vsel %vm1912, %v1911, %v1139
      %vm1945 = vcmask 97280
      %v1946 = vsel %vm1945, %v1913, %v1205
      %v1947 = vsel %vm1945, %v1914, %v1207
      %v1948 = vsel %vm1945, %v1915, %v1209
      %v1949 = vsel %vm1945, %v1916, %v1211
      %v1950 = vsel %vm1945, %v1917, %v1213
      %v1951 = vsel %vm1945, %v1918, %v1215
      %v1952 = vsel %vm1945, %v1919, %v1217
      %v1953 = vsel %vm1945, %v1920, %v1219
      %v1954 = vsel %vm1945, %v1921, %v1221
      %v1955 = vsel %vm1945, %v1922, %v1223
      %v1956 = vsel %vm1945, %v1923, %v1225
      %v1957 = vsel %vm1945, %v1924, %v1227
      %v1958 = vsel %vm1945, %v1925, %v1229
      %v1959 = vsel %vm1945, %v1926, %v1231
      %v1960 = vsel %vm1945, %v1927, %v1233
      %v1961 = vsel %vm1945, %v1928, %v1235
      %v1962 = vsel %vm1945, %v1929, %v1237
      %v1963 = vsel %vm1945, %v1930, %v1239
      %v1964 = vsel %vm1945, %v1931, %v1241
      %v1965 = vsel %vm1945, %v1932, %v1243
      %v1966 = vsel %vm1945, %v1933, %v1245
      %v1967 = vsel %vm1945, %v1934, %v1247
      %v1968 = vsel %vm1945, %v1935, %v1249
      %v1969 = vsel %vm1945, %v1936, %v1251
      %v1970 = vsel %vm1945, %v1937, %v1253
      %v1971 = vsel %vm1945, %v1938, %v1255
      %v1972 = vsel %vm1945, %v1939, %v1257
      %v1973 = vsel %vm1945, %v1940, %v1259
      %v1974 = vsel %vm1945, %v1941, %v1261
      %v1975 = vsel %vm1945, %v1942, %v1263
      %v1976 = vsel %vm1945, %v1943, %v1265
      %v1977 = vsel %vm1945, %v1944, %v1267
      %v1978 = vsel %vm287, %v1946, %v1303
      %v1979 = vsel %vm287, %v1947, %v1305
      %v1980 = vsel %vm287, %v1948, %v1307
      %v1981 = vsel %vm287, %v1949, %v1309
      %v1982 = vsel %vm287, %v1950, %v1311
      %v1983 = vsel %vm287, %v1951, %v1313
      %v1984 = vsel %vm287, %v1952, %v1315
      %v1985 = vsel %vm287, %v1953, %v1317
      %v1986 = vsel %vm287, %v1954, %v1319
      %v1987 = vsel %vm287, %v1955, %v1321
      %v1988 = vsel %vm287, %v1956, %v1323
      %v1989 = vsel %vm287, %v1957, %v1325
      %v1990 = vsel %vm287, %v1958, %v1327
      %v1991 = vsel %vm287, %v1959, %v1329
      %v1992 = vsel %vm287, %v1960, %v1331
      %v1993 = vsel %vm287, %v1961, %v1333
      %v1994 = vsel %vm287, %v1962, %v1335
      %v1995 = vsel %vm287, %v1963, %v1337
      %v1996 = vsel %vm287, %v1964, %v1339
      %v1997 = vsel %vm287, %v1965, %v1341
      %v1998 = vsel %vm287, %v1966, %v1343
      %v1999 = vsel %vm287, %v1967, %v1345
      %v2000 = vsel %vm287, %v1968, %v1347
      %v2001 = vsel %vm287, %v1969, %v1349
      %v2002 = vsel %vm287, %v1970, %v1351
      %v2003 = vsel %vm287, %v1971, %v1353
      %v2004 = vsel %vm287, %v1972, %v1355
      %v2005 = vsel %vm287, %v1973, %v1357
      %v2006 = vsel %vm287, %v1974, %v1359
      %v2007 = vsel %vm287, %v1975, %v1361
      %v2008 = vsel %vm287, %v1976, %v1363
      %v2009 = vsel %vm287, %v1977, %v1365
      %vm2010 = vcmask 162816
      %v2011 = vsel %vm2010, %v1978, %v1431
      %v2012 = vsel %vm2010, %v1979, %v1433
      %v2013 = vsel %vm2010, %v1980, %v1435
      %v2014 = vsel %vm2010, %v1981, %v1437
      %v2015 = vsel %vm2010, %v1982, %v1439
      %v2016 = vsel %vm2010, %v1983, %v1441
      %v2017 = vsel %vm2010, %v1984, %v1443
      %v2018 = vsel %vm2010, %v1985, %v1445
      %v2019 = vsel %vm2010, %v1986, %v1447
      %v2020 = vsel %vm2010, %v1987, %v1449
      %v2021 = vsel %vm2010, %v1988, %v1451
      %v2022 = vsel %vm2010, %v1989, %v1453
      %v2023 = vsel %vm2010, %v1990, %v1455
      %v2024 = vsel %vm2010, %v1991, %v1457
      %v2025 = vsel %vm2010, %v1992, %v1459
      %v2026 = vsel %vm2010, %v1993, %v1461
      %v2027 = vsel %vm2010, %v1994, %v1463
      %v2028 = vsel %vm2010, %v1995, %v1465
      %v2029 = vsel %vm2010, %v1996, %v1467
      %v2030 = vsel %vm2010, %v1997, %v1469
      %v2031 = vsel %vm2010, %v1998, %v1471
      %v2032 = vsel %vm2010, %v1999, %v1473
      %v2033 = vsel %vm2010, %v2000, %v1475
      %v2034 = vsel %vm2010, %v2001, %v1477
      %v2035 = vsel %vm2010, %v2002, %v1479
      %v2036 = vsel %vm2010, %v2003, %v1481
      %v2037 = vsel %vm2010, %v2004, %v1483
      %v2038 = vsel %vm2010, %v2005, %v1485
      %v2039 = vsel %vm2010, %v2006, %v1487
      %v2040 = vsel %vm2010, %v2007, %v1489
      %v2041 = vsel %vm2010, %v2008, %v1491
      %v2042 = vsel %vm2010, %v2009, %v1493
      %vm2043 = vcmask 195584
      %v2044 = vsel %vm2043, %v2011, %v1559
      %v2045 = vsel %vm2043, %v2012, %v1561
      %v2046 = vsel %vm2043, %v2013, %v1563
      %v2047 = vsel %vm2043, %v2014, %v1565
      %v2048 = vsel %vm2043, %v2015, %v1567
      %v2049 = vsel %vm2043, %v2016, %v1569
      %v2050 = vsel %vm2043, %v2017, %v1571
      %v2051 = vsel %vm2043, %v2018, %v1573
      %v2052 = vsel %vm2043, %v2019, %v1575
      %v2053 = vsel %vm2043, %v2020, %v1577
      %v2054 = vsel %vm2043, %v2021, %v1579
      %v2055 = vsel %vm2043, %v2022, %v1581
      %v2056 = vsel %vm2043, %v2023, %v1583
      %v2057 = vsel %vm2043, %v2024, %v1585
      %v2058 = vsel %vm2043, %v2025, %v1587
      %v2059 = vsel %vm2043, %v2026, %v1589
      %v2060 = vsel %vm2043, %v2027, %v1591
      %v2061 = vsel %vm2043, %v2028, %v1593
      %v2062 = vsel %vm2043, %v2029, %v1595
      %v2063 = vsel %vm2043, %v2030, %v1597
      %v2064 = vsel %vm2043, %v2031, %v1599
      %v2065 = vsel %vm2043, %v2032, %v1601
      %v2066 = vsel %vm2043, %v2033, %v1603
      %v2067 = vsel %vm2043, %v2034, %v1605
      %v2068 = vsel %vm2043, %v2035, %v1607
      %v2069 = vsel %vm2043, %v2036, %v1609
      %v2070 = vsel %vm2043, %v2037, %v1611
      %v2071 = vsel %vm2043, %v2038, %v1613
      %v2072 = vsel %vm2043, %v2039, %v1615
      %v2073 = vsel %vm2043, %v2040, %v1617
      %v2074 = vsel %vm2043, %v2041, %v1619
      %v2075 = vsel %vm2043, %v2042, %v1621
      %vm2076 = vcmask 228352
      %v2077 = vsel %vm2076, %v2044, %v1657
      %v2078 = vsel %vm2076, %v2045, %v1659
      %v2079 = vsel %vm2076, %v2046, %v1661
      %v2080 = vsel %vm2076, %v2047, %v1663
      %v2081 = vsel %vm2076, %v2048, %v1665
      %v2082 = vsel %vm2076, %v2049, %v1667
      %v2083 = vsel %vm2076, %v2050, %v1669
      %v2084 = vsel %vm2076, %v2051, %v1671
      %v2085 = vsel %vm2076, %v2052, %v1673
      %v2086 = vsel %vm2076, %v2053, %v1675
      %v2087 = vsel %vm2076, %v2054, %v1677
      %v2088 = vsel %vm2076, %v2055, %v1679
      %v2089 = vsel %vm2076, %v2056, %v1681
      %v2090 = vsel %vm2076, %v2057, %v1683
      %v2091 = vsel %vm2076, %v2058, %v1685
      %v2092 = vsel %vm2076, %v2059, %v1687
      %v2093 = vsel %vm2076, %v2060, %v1689
      %v2094 = vsel %vm2076, %v2061, %v1691
      %v2095 = vsel %vm2076, %v2062, %v1693
      %v2096 = vsel %vm2076, %v2063, %v1695
      %v2097 = vsel %vm2076, %v2064, %v1697
      %v2098 = vsel %vm2076, %v2065, %v1699
      %v2099 = vsel %vm2076, %v2066, %v1701
      %v2100 = vsel %vm2076, %v2067, %v1703
      %v2101 = vsel %vm2076, %v2068, %v1705
      %v2102 = vsel %vm2076, %v2069, %v1707
      %v2103 = vsel %vm2076, %v2070, %v1709
      %v2104 = vsel %vm2076, %v2071, %v1711
      %v2105 = vsel %vm2076, %v2072, %v1713
      %v2106 = vsel %vm2076, %v2073, %v1715
      %v2107 = vsel %vm2076, %v2074, %v1717
      %v2108 = vsel %vm2076, %v2075, %v1719
      %v2109 = vsel %vm292, %v2077, %v1785
      %v2110 = vsel %vm292, %v2078, %v1787
      %v2111 = vsel %vm292, %v2079, %v1789
      %v2112 = vsel %vm292, %v2080, %v1791
      %v2113 = vsel %vm292, %v2081, %v1793
      %v2114 = vsel %vm292, %v2082, %v1795
      %v2115 = vsel %vm292, %v2083, %v1797
      %v2116 = vsel %vm292, %v2084, %v1799
      %v2117 = vsel %vm292, %v2085, %v1801
      %v2118 = vsel %vm292, %v2086, %v1803
      %v2119 = vsel %vm292, %v2087, %v1805
      %v2120 = vsel %vm292, %v2088, %v1807
      %v2121 = vsel %vm292, %v2089, %v1809
      %v2122 = vsel %vm292, %v2090, %v1811
      %v2123 = vsel %vm292, %v2091, %v1813
      %v2124 = vsel %vm292, %v2092, %v1815
      %v2125 = vsel %vm292, %v2093, %v1817
      %v2126 = vsel %vm292, %v2094, %v1819
      %v2127 = vsel %vm292, %v2095, %v1821
      %v2128 = vsel %vm292, %v2096, %v1823
      %v2129 = vsel %vm292, %v2097, %v1825
      %v2130 = vsel %vm292, %v2098, %v1827
      %v2131 = vsel %vm292, %v2099, %v1829
      %v2132 = vsel %vm292, %v2100, %v1831
      %v2133 = vsel %vm292, %v2101, %v1833
      %v2134 = vsel %vm292, %v2102, %v1835
      %v2135 = vsel %vm292, %v2103, %v1837
      %v2136 = vsel %vm292, %v2104, %v1839
      %v2137 = vsel %vm292, %v2105, %v1841
      %v2138 = vsel %vm292, %v2106, %v1843
      %v2139 = vsel %vm292, %v2107, %v1845
      %v2140 = vsel %vm292, %v2108, %v1847
      %v2141 = vpack.c.bf16 %v2110, %v2109
      %v2142 = vpack.c.bf16 %v2112, %v2111
      %v2143 = vpack.c.bf16 %v2114, %v2113
      %v2144 = vpack.c.bf16 %v2116, %v2115
      %v2145 = vpack.c.bf16 %v2118, %v2117
      %v2146 = vpack.c.bf16 %v2120, %v2119
      %v2147 = vpack.c.bf16 %v2122, %v2121
      %v2148 = vpack.c.bf16 %v2124, %v2123
      %v2149 = vpack.c.bf16 %v2126, %v2125
      %v2150 = vpack.c.bf16 %v2128, %v2127
      %v2151 = vpack.c.bf16 %v2130, %v2129
      %v2152 = vpack.c.bf16 %v2132, %v2131
      %v2153 = vpack.c.bf16 %v2134, %v2133
      %v2154 = vpack.c.bf16 %v2136, %v2135
      %v2155 = vpack.c.bf16 %v2138, %v2137
      %v2156 = vpack.c.bf16 %v2140, %v2139
      %v2157 = vld [vmem:[%s1] sm:$0xf]
      %v2158 = vld [vmem:[%s1 + $0x4] sm:$0xf]
      %v2159 = vld [vmem:[%s1 + $0x8] sm:$0xf]
      %v2160 = vld [vmem:[%s1 + $0xc] sm:$0xf]
      %v2161 = vld [vmem:[%s1 + $0x10] sm:$0x3]
      %v2162 = vld [vmem:[%s2] sm:$0x1]
      %v2164 = vperm.slane %v2162, 0
      %v2171 = vunpack.c.l.b16 %v2157
      %v2172 = vunpack.c.l.b16 %v2158
      %v2173 = vunpack.c.l.b16 %v2159
      %v2174 = vunpack.c.l.b16 %v2160
      %v2175 = vunpack.c.l.b16 %v2161
      %v2176 = vpack.c.b16 %v2172, %v2171
      %v2177 = vpack.c.b16 %v2174, %v2173
      %v2178 = vpack.c.b16 %v2175, %v2175
      %vm2181 = vcmask 293888
      %v2183 = vsel %vm2181, %v2141, 0
      %v2186 = vsel %vm2181, %v2142, 0
      %v2189 = vsel %vm2181, %v2143, 0
      %v2192 = vsel %vm2181, %v2144, 0
      %v2195 = vsel %vm2181, %v2145, 0
      %v2198 = vsel %vm2181, %v2146, 0
      %v2201 = vsel %vm2181, %v2147, 0
      %v2204 = vsel %vm2181, %v2148, 0
      %v2207 = vsel %vm2181, %v2149, 0
      %v2210 = vsel %vm2181, %v2150, 0
      %v2213 = vsel %vm2181, %v2151, 0
      %v2216 = vsel %vm2181, %v2152, 0
      %v2219 = vsel %vm2181, %v2153, 0
      %v2222 = vsel %vm2181, %v2154, 0
      %v2225 = vsel %vm2181, %v2155, 0
      %v2228 = vsel %vm2181, %v2156, 0
      %vm2230 = vcmask 1041408
      %v2232 = vsel %vm2230, %v2178, 0
      %2234 = vmatpush.bf16.msra.mxu0 0
      %2235 = vmatpush.bf16.msra.mxu0 0
      %2236 = vmatpush.bf16.msra.mxu0 0
      %2237 = vmatpush.bf16.msra.mxu0 0
      %2238 = vmatpush.bf16.msra.mxu0 0
      %2239 = vmatpush.bf16.msra.mxu0 %v2232
      %2240 = vmatpush.bf16.msra.mxu0 %v2177
      %2241 = vmatpush.bf16.msra.mxu0 %v2176
      %2242 = vmatmul.bf16.gmra.mxu0 %v2183
      %v2243 = vpop.f32.mrf.mxu0
      %v2244 = vadd.f32 %v2164, %v2243
      %v2245 = vpop.f32.mrf.mxu0
      %v2246 = vadd.f32 %v2164, %v2245
      %2247 = vmatmul.bf16.gmra.mxu0 %v2186
      %v2248 = vpop.f32.mrf.mxu0
      %v2249 = vadd.f32 %v2164, %v2248
      %v2250 = vpop.f32.mrf.mxu0
      %v2251 = vadd.f32 %v2164, %v2250
      %2252 = vmatmul.bf16.gmra.mxu0 %v2189
      %v2253 = vpop.f32.mrf.mxu0
      %v2254 = vadd.f32 %v2164, %v2253
      %v2255 = vpop.f32.mrf.mxu0
      %v2256 = vadd.f32 %v2164, %v2255
      %2257 = vmatmul.bf16.gmra.mxu0 %v2192
      %v2258 = vpop.f32.mrf.mxu0
      %v2259 = vadd.f32 %v2164, %v2258
      %v2260 = vpop.f32.mrf.mxu0
      %v2261 = vadd.f32 %v2164, %v2260
      %2262 = vmatmul.bf16.gmra.mxu0 %v2195
      %v2263 = vpop.f32.mrf.mxu0
      %v2264 = vadd.f32 %v2164, %v2263
      %v2265 = vpop.f32.mrf.mxu0
      %v2266 = vadd.f32 %v2164, %v2265
      %2267 = vmatmul.bf16.gmra.mxu0 %v2198
      %v2268 = vpop.f32.mrf.mxu0
      %v2269 = vadd.f32 %v2164, %v2268
      %v2270 = vpop.f32.mrf.mxu0
      %v2271 = vadd.f32 %v2164, %v2270
      %2272 = vmatmul.bf16.gmra.mxu0 %v2201
      %v2273 = vpop.f32.mrf.mxu0
      %v2274 = vadd.f32 %v2164, %v2273
      %v2275 = vpop.f32.mrf.mxu0
      %v2276 = vadd.f32 %v2164, %v2275
      %2277 = vmatmul.bf16.gmra.mxu0 %v2204
      %v2278 = vpop.f32.mrf.mxu0
      %v2279 = vadd.f32 %v2164, %v2278
      %v2280 = vpop.f32.mrf.mxu0
      %v2281 = vadd.f32 %v2164, %v2280
      %2282 = vmatmul.bf16.gmra.mxu0 %v2207
      %v2283 = vpop.f32.mrf.mxu0
      %v2284 = vadd.f32 %v2164, %v2283
      %v2285 = vpop.f32.mrf.mxu0
      %v2286 = vadd.f32 %v2164, %v2285
      %2287 = vmatmul.bf16.gmra.mxu0 %v2210
      %v2288 = vpop.f32.mrf.mxu0
      %v2289 = vadd.f32 %v2164, %v2288
      %v2290 = vpop.f32.mrf.mxu0
      %v2291 = vadd.f32 %v2164, %v2290
      %2292 = vmatmul.bf16.gmra.mxu0 %v2213
      %v2293 = vpop.f32.mrf.mxu0
      %v2294 = vadd.f32 %v2164, %v2293
      %v2295 = vpop.f32.mrf.mxu0
      %v2296 = vadd.f32 %v2164, %v2295
      %2297 = vmatmul.bf16.gmra.mxu0 %v2216
      %v2298 = vpop.f32.mrf.mxu0
      %v2299 = vadd.f32 %v2164, %v2298
      %v2300 = vpop.f32.mrf.mxu0
      %v2301 = vadd.f32 %v2164, %v2300
      %2302 = vmatmul.bf16.gmra.mxu0 %v2219
      %v2303 = vpop.f32.mrf.mxu0
      %v2304 = vadd.f32 %v2164, %v2303
      %v2305 = vpop.f32.mrf.mxu0
      %v2306 = vadd.f32 %v2164, %v2305
      %2307 = vmatmul.bf16.gmra.mxu0 %v2222
      %v2308 = vpop.f32.mrf.mxu0
      %v2309 = vadd.f32 %v2164, %v2308
      %v2310 = vpop.f32.mrf.mxu0
      %v2311 = vadd.f32 %v2164, %v2310
      %2312 = vmatmul.bf16.gmra.mxu0 %v2225
      %v2313 = vpop.f32.mrf.mxu0
      %v2314 = vadd.f32 %v2164, %v2313
      %v2315 = vpop.f32.mrf.mxu0
      %v2316 = vadd.f32 %v2164, %v2315
      %2317 = vmatmul.bf16.gmra.mxu0 %v2228
      %v2318 = vpop.f32.mrf.mxu0
      %v2319 = vadd.f32 %v2164, %v2318
      %v2320 = vpop.f32.mrf.mxu0
      %v2321 = vadd.f32 %v2164, %v2320
      %2322 = vdwg.mxu0
      %v2323 = vmax.f32 %v2244, 0.0
      %v2324 = vmax.f32 %v2246, 0.0
      %v2325 = vmax.f32 %v2249, 0.0
      %v2326 = vmax.f32 %v2251, 0.0
      %v2327 = vmax.f32 %v2254, 0.0
      %v2328 = vmax.f32 %v2256, 0.0
      %v2329 = vmax.f32 %v2259, 0.0
      %v2330 = vmax.f32 %v2261, 0.0
      %v2331 = vmax.f32 %v2264, 0.0
      %v2332 = vmax.f32 %v2266, 0.0
      %v2333 = vmax.f32 %v2269, 0.0
      %v2334 = vmax.f32 %v2271, 0.0
      %v2335 = vmax.f32 %v2274, 0.0
      %v2336 = vmax.f32 %v2276, 0.0
      %v2337 = vmax.f32 %v2279, 0.0
      %v2338 = vmax.f32 %v2281, 0.0
      %v2339 = vmax.f32 %v2284, 0.0
      %v2340 = vmax.f32 %v2286, 0.0
      %v2341 = vmax.f32 %v2289, 0.0
      %v2342 = vmax.f32 %v2291, 0.0
      %v2343 = vmax.f32 %v2294, 0.0
      %v2344 = vmax.f32 %v2296, 0.0
      %v2345 = vmax.f32 %v2299, 0.0
      %v2346 = vmax.f32 %v2301, 0.0
      %v2347 = vmax.f32 %v2304, 0.0
      %v2348 = vmax.f32 %v2306, 0.0
      %v2349 = vmax.f32 %v2309, 0.0
      %v2350 = vmax.f32 %v2311, 0.0
      %v2351 = vmax.f32 %v2314, 0.0
      %v2352 = vmax.f32 %v2316, 0.0
      %v2353 = vmax.f32 %v2319, 0.0
      %v2354 = vmax.f32 %v2321, 0.0
      %2355 = vst.msk [vmem:[#allocation3] sm:$0xff] %vm287, %v2323
      %2356 = vst.msk [vmem:[#allocation3 + $0x8] sm:$0xff] %vm287, %v2324
      %2357 = vst.msk [vmem:[#allocation3 + $0x10] sm:$0xff] %vm287, %v2325
      %2358 = vst.msk [vmem:[#allocation3 + $0x18] sm:$0xff] %vm287, %v2326
      %2359 = vst.msk [vmem:[#allocation3 + $0x20] sm:$0xff] %vm287, %v2327
      %2360 = vst.msk [vmem:[#allocation3 + $0x28] sm:$0xff] %vm287, %v2328
      %2361 = vst.msk [vmem:[#allocation3 + $0x30] sm:$0xff] %vm287, %v2329
      %2362 = vst.msk [vmem:[#allocation3 + $0x38] sm:$0xff] %vm287, %v2330
      %2363 = vst.msk [vmem:[#allocation3 + $0x40] sm:$0xff] %vm287, %v2331
      %2364 = vst.msk [vmem:[#allocation3 + $0x48] sm:$0xff] %vm287, %v2332
      %2365 = vst.msk [vmem:[#allocation3 + $0x50] sm:$0xff] %vm287, %v2333
      %2366 = vst.msk [vmem:[#allocation3 + $0x58] sm:$0xff] %vm287, %v2334
      %2367 = vst.msk [vmem:[#allocation3 + $0x60] sm:$0xff] %vm287, %v2335
      %2368 = vst.msk [vmem:[#allocation3 + $0x68] sm:$0xff] %vm287, %v2336
      %2369 = vst.msk [vmem:[#allocation3 + $0x70] sm:$0xff] %vm287, %v2337
      %2370 = vst.msk [vmem:[#allocation3 + $0x78] sm:$0xff] %vm287, %v2338
      %2371 = vst.msk [vmem:[#allocation3 + $0x80] sm:$0xff] %vm287, %v2339
      %2372 = vst.msk [vmem:[#allocation3 + $0x88] sm:$0xff] %vm287, %v2340
      %2373 = vst.msk [vmem:[#allocation3 + $0x90] sm:$0xff] %vm287, %v2341
      %2374 = vst.msk [vmem:[#allocation3 + $0x98] sm:$0xff] %vm287, %v2342
      %2375 = vst.msk [vmem:[#allocation3 + $0xa0] sm:$0xff] %vm287, %v2343
      %2376 = vst.msk [vmem:[#allocation3 + $0xa8] sm:$0xff] %vm287, %v2344
      %2377 = vst.msk [vmem:[#allocation3 + $0xb0] sm:$0xff] %vm287, %v2345
      %2378 = vst.msk [vmem:[#allocation3 + $0xb8] sm:$0xff] %vm287, %v2346
      %2379 = vst.msk [vmem:[#allocation3 + $0xc0] sm:$0xff] %vm287, %v2347
      %2380 = vst.msk [vmem:[#allocation3 + $0xc8] sm:$0xff] %vm287, %v2348
      %2381 = vst.msk [vmem:[#allocation3 + $0xd0] sm:$0xff] %vm287, %v2349
      %2382 = vst.msk [vmem:[#allocation3 + $0xd8] sm:$0xff] %vm287, %v2350
      %2383 = vst.msk [vmem:[#allocation3 + $0xe0] sm:$0xff] %vm287, %v2351
      %2384 = vst.msk [vmem:[#allocation3 + $0xe8] sm:$0xff] %vm287, %v2352
      %2385 = vst.msk [vmem:[#allocation3 + $0xf0] sm:$0xff] %vm287, %v2353
      %2386 = vst.msk [vmem:[#allocation3 + $0xf8] sm:$0xff] %vm287, %v2354
      %v2387 = vld [vmem:[#allocation3] ss:$2 sm:$0xff]
      %s2388 = scalar_lea.vmem [#allocation3], 16
      %v2389 = vld [vmem:[%s2388] ss:$2 sm:$0xff]
      %s2390 = scalar_lea.vmem [#allocation3], 32
      %v2391 = vld [vmem:[%s2390] ss:$2 sm:$0xff]
      %s2392 = scalar_lea.vmem [#allocation3], 48
      %v2393 = vld [vmem:[%s2392] ss:$2 sm:$0xff]
      %s2394 = scalar_lea.vmem [#allocation3], 64
      %v2395 = vld [vmem:[%s2394] ss:$2 sm:$0xff]
      %s2396 = scalar_lea.vmem [#allocation3], 80
      %v2397 = vld [vmem:[%s2396] ss:$2 sm:$0xff]
      %s2398 = scalar_lea.vmem [#allocation3], 96
      %v2399 = vld [vmem:[%s2398] ss:$2 sm:$0xff]
      %s2400 = scalar_lea.vmem [#allocation3], 112
      %v2401 = vld [vmem:[%s2400] ss:$2 sm:$0xff]
      %s2402 = scalar_lea.vmem [#allocation3], 128
      %v2403 = vld [vmem:[%s2402] ss:$2 sm:$0xff]
      %s2404 = scalar_lea.vmem [#allocation3], 144
      %v2405 = vld [vmem:[%s2404] ss:$2 sm:$0xff]
      %s2406 = scalar_lea.vmem [#allocation3], 160
      %v2407 = vld [vmem:[%s2406] ss:$2 sm:$0xff]
      %s2408 = scalar_lea.vmem [#allocation3], 176
      %v2409 = vld [vmem:[%s2408] ss:$2 sm:$0xff]
      %s2410 = scalar_lea.vmem [#allocation3], 192
      %v2411 = vld [vmem:[%s2410] ss:$2 sm:$0xff]
      %s2412 = scalar_lea.vmem [#allocation3], 208
      %v2413 = vld [vmem:[%s2412] ss:$2 sm:$0xff]
      %s2414 = scalar_lea.vmem [#allocation3], 224
      %v2415 = vld [vmem:[%s2414] ss:$2 sm:$0xff]
      %s2416 = scalar_lea.vmem [#allocation3], 240
      %v2417 = vld [vmem:[%s2416] ss:$2 sm:$0xff]
      %s2418 = scalar_lea.vmem [#allocation3], 1
      %v2419 = vld [vmem:[%s2418] ss:$2 sm:$0xff]
      %s2420 = scalar_lea.vmem [#allocation3], 17
      %v2421 = vld [vmem:[%s2420] ss:$2 sm:$0xff]
      %s2422 = scalar_lea.vmem [#allocation3], 33
      %v2423 = vld [vmem:[%s2422] ss:$2 sm:$0xff]
      %s2424 = scalar_lea.vmem [#allocation3], 49
      %v2425 = vld [vmem:[%s2424] ss:$2 sm:$0xff]
      %s2426 = scalar_lea.vmem [#allocation3], 65
      %v2427 = vld [vmem:[%s2426] ss:$2 sm:$0xff]
      %s2428 = scalar_lea.vmem [#allocation3], 81
      %v2429 = vld [vmem:[%s2428] ss:$2 sm:$0xff]
      %s2430 = scalar_lea.vmem [#allocation3], 97
      %v2431 = vld [vmem:[%s2430] ss:$2 sm:$0xff]
      %s2432 = scalar_lea.vmem [#allocation3], 113
      %v2433 = vld [vmem:[%s2432] ss:$2 sm:$0xff]
      %s2434 = scalar_lea.vmem [#allocation3], 129
      %v2435 = vld [vmem:[%s2434] ss:$2 sm:$0xff]
      %s2436 = scalar_lea.vmem [#allocation3], 145
      %v2437 = vld [vmem:[%s2436] ss:$2 sm:$0xff]
      %s2438 = scalar_lea.vmem [#allocation3], 161
      %v2439 = vld [vmem:[%s2438] ss:$2 sm:$0xff]
      %s2440 = scalar_lea.vmem [#allocation3], 177
      %v2441 = vld [vmem:[%s2440] ss:$2 sm:$0xff]
      %s2442 = scalar_lea.vmem [#allocation3], 193
      %v2443 = vld [vmem:[%s2442] ss:$2 sm:$0xff]
      %s2444 = scalar_lea.vmem [#allocation3], 209
      %v2445 = vld [vmem:[%s2444] ss:$2 sm:$0xff]
      %s2446 = scalar_lea.vmem [#allocation3], 225
      %v2447 = vld [vmem:[%s2446] ss:$2 sm:$0xff]
      %s2448 = scalar_lea.vmem [#allocation3], 241
      %v2449 = vld [vmem:[%s2448] ss:$2 sm:$0xff]
      %v2450 = vmax.f32 %v2387, %v2419
      %v2451 = vmax.f32 %v2389, %v2421
      %v2452 = vmax.f32 %v2391, %v2423
      %v2453 = vmax.f32 %v2393, %v2425
      %v2454 = vmax.f32 %v2395, %v2427
      %v2455 = vmax.f32 %v2397, %v2429
      %v2456 = vmax.f32 %v2399, %v2431
      %v2457 = vmax.f32 %v2401, %v2433
      %v2458 = vmax.f32 %v2403, %v2435
      %v2459 = vmax.f32 %v2405, %v2437
      %v2460 = vmax.f32 %v2407, %v2439
      %v2461 = vmax.f32 %v2409, %v2441
      %v2462 = vmax.f32 %v2411, %v2443
      %v2463 = vmax.f32 %v2413, %v2445
      %v2464 = vmax.f32 %v2415, %v2447
      %v2465 = vmax.f32 %v2417, %v2449
      %2466 = vst.msk [vmem:[#allocation4] sm:$0xff] %vm287, %v2450
      %2467 = vst.msk [vmem:[#allocation4 + $0x8] sm:$0xff] %vm287, %v2451
      %2468 = vst.msk [vmem:[#allocation4 + $0x10] sm:$0xff] %vm287, %v2452
      %2469 = vst.msk [vmem:[#allocation4 + $0x18] sm:$0xff] %vm287, %v2453
      %2470 = vst.msk [vmem:[#allocation4 + $0x20] sm:$0xff] %vm287, %v2454
      %2471 = vst.msk [vmem:[#allocation4 + $0x28] sm:$0xff] %vm287, %v2455
      %2472 = vst.msk [vmem:[#allocation4 + $0x30] sm:$0xff] %vm287, %v2456
      %2473 = vst.msk [vmem:[#allocation4 + $0x38] sm:$0xff] %vm287, %v2457
      %2474 = vst.msk [vmem:[#allocation4 + $0x40] sm:$0xff] %vm287, %v2458
      %2475 = vst.msk [vmem:[#allocation4 + $0x48] sm:$0xff] %vm287, %v2459
      %2476 = vst.msk [vmem:[#allocation4 + $0x50] sm:$0xff] %vm287, %v2460
      %2477 = vst.msk [vmem:[#allocation4 + $0x58] sm:$0xff] %vm287, %v2461
      %2478 = vst.msk [vmem:[#allocation4 + $0x60] sm:$0xff] %vm287, %v2462
      %2479 = vst.msk [vmem:[#allocation4 + $0x68] sm:$0xff] %vm287, %v2463
      %2480 = vst.msk [vmem:[#allocation4 + $0x70] sm:$0xff] %vm287, %v2464
      %2481 = vst.msk [vmem:[#allocation4 + $0x78] sm:$0xff] %vm287, %v2465
      %v2482 = vld [vmem:[#allocation4] sm:$0xff]
      %v2483 = vld [vmem:[#allocation4 + $0x8] sm:$0xff]
      %v2484 = vmax.f32 %v2482, %v2483
      %v2485 = vld [vmem:[#allocation4 + $0x10] sm:$0xff]
      %v2486 = vld [vmem:[#allocation4 + $0x18] sm:$0xff]
      %v2487 = vmax.f32 %v2485, %v2486
      %v2488 = vld [vmem:[#allocation4 + $0x20] sm:$0xff]
      %v2489 = vld [vmem:[#allocation4 + $0x28] sm:$0xff]
      %v2490 = vmax.f32 %v2488, %v2489
      %v2491 = vld [vmem:[#allocation4 + $0x30] sm:$0xff]
      %v2492 = vld [vmem:[#allocation4 + $0x38] sm:$0xff]
      %v2493 = vmax.f32 %v2491, %v2492
      %v2494 = vld [vmem:[#allocation4 + $0x40] sm:$0xff]
      %v2495 = vld [vmem:[#allocation4 + $0x48] sm:$0xff]
      %v2496 = vmax.f32 %v2494, %v2495
      %v2497 = vld [vmem:[#allocation4 + $0x50] sm:$0xff]
      %v2498 = vld [vmem:[#allocation4 + $0x58] sm:$0xff]
      %v2499 = vmax.f32 %v2497, %v2498
      %v2500 = vld [vmem:[#allocation4 + $0x60] sm:$0xff]
      %v2501 = vld [vmem:[#allocation4 + $0x68] sm:$0xff]
      %v2502 = vmax.f32 %v2500, %v2501
      %v2503 = vld [vmem:[#allocation4 + $0x70] sm:$0xff]
      %v2504 = vld [vmem:[#allocation4 + $0x78] sm:$0xff]
      %v2505 = vmax.f32 %v2503, %v2504
      %2506 = vst.msk [vmem:[#allocation5 + $0x10] sm:$0xff] %vm287, %v2484
      %2507 = vst.msk [vmem:[#allocation5 + $0x18] sm:$0xff] %vm287, %v2487
      %2508 = vst.msk [vmem:[#allocation5 + $0x20] sm:$0xff] %vm287, %v2490
      %2509 = vst.msk [vmem:[#allocation5 + $0x28] sm:$0xff] %vm287, %v2493
      %2510 = vst.msk [vmem:[#allocation5 + $0x30] sm:$0xff] %vm287, %v2496
      %2511 = vst.msk [vmem:[#allocation5 + $0x38] sm:$0xff] %vm287, %v2499
      %2512 = vst.msk [vmem:[#allocation5 + $0x40] sm:$0xff] %vm287, %v2502
      %2513 = vst.msk [vmem:[#allocation5 + $0x48] sm:$0xff] %vm287, %v2505
      %v2514 = vand.u32 %v360, 7
      %v2515 = vand.u32 %v361, 7
      %v2516 = vand.u32 %v362, 7
      %v2517 = vand.u32 %v363, 7
      %v2518 = vand.u32 %v364, 7
      %v2519 = vand.u32 %v365, 7
      %v2520 = vand.u32 %v366, 7
      %v2521 = vand.u32 %v367, 7
      %vm2522 = vcmp.ge.s32.totalorder %v2514, 1
      %vm2523 = vcmp.ge.s32.totalorder %v2515, 1
      %vm2524 = vcmp.ge.s32.totalorder %v2516, 1
      %vm2525 = vcmp.ge.s32.totalorder %v2517, 1
      %vm2526 = vcmp.ge.s32.totalorder %v2518, 1
      %vm2527 = vcmp.ge.s32.totalorder %v2519, 1
      %vm2528 = vcmp.ge.s32.totalorder %v2520, 1
      %vm2529 = vcmp.ge.s32.totalorder %v2521, 1
      %vm2530 = vcmp.lt.s32.totalorder %v2514, 7
      %vm2531 = vcmp.lt.s32.totalorder %v2515, 7
      %vm2532 = vcmp.lt.s32.totalorder %v2516, 7
      %vm2533 = vcmp.lt.s32.totalorder %v2517, 7
      %vm2534 = vcmp.lt.s32.totalorder %v2518, 7
      %vm2535 = vcmp.lt.s32.totalorder %v2519, 7
      %vm2536 = vcmp.lt.s32.totalorder %v2520, 7
      %vm2537 = vcmp.lt.s32.totalorder %v2521, 7
      %v2538 = vld [vmem:[#allocation5 + $0x7] sm:$0xff]
      %v2539 = vld [vmem:[#allocation5 + $0xf] sm:$0xff]
      %v2540 = vld [vmem:[#allocation5 + $0x17] sm:$0xff]
      %v2541 = vld [vmem:[#allocation5 + $0x1f] sm:$0xff]
      %v2542 = vld [vmem:[#allocation5 + $0x27] sm:$0xff]
      %v2543 = vld [vmem:[#allocation5 + $0x2f] sm:$0xff]
      %v2544 = vld [vmem:[#allocation5 + $0x37] sm:$0xff]
      %v2545 = vld [vmem:[#allocation5 + $0x3f] sm:$0xff]
      %v2546 = vsel %vm2522, 1, 0
      %v2547 = vsel %vm2523, 1, 0
      %v2548 = vsel %vm2524, 1, 0
      %v2549 = vsel %vm2525, 1, 0
      %v2550 = vsel %vm2526, 1, 0
      %v2551 = vsel %vm2527, 1, 0
      %v2552 = vsel %vm2528, 1, 0
      %v2553 = vsel %vm2529, 1, 0
      %vm2554 = vcmp.eq.s32.totalorder %v2546, 1
      %vm2555 = vcmp.eq.s32.totalorder %v2547, 1
      %vm2556 = vcmp.eq.s32.totalorder %v2548, 1
      %vm2557 = vcmp.eq.s32.totalorder %v2549, 1
      %vm2558 = vcmp.eq.s32.totalorder %v2550, 1
      %vm2559 = vcmp.eq.s32.totalorder %v2551, 1
      %vm2560 = vcmp.eq.s32.totalorder %v2552, 1
      %vm2561 = vcmp.eq.s32.totalorder %v2553, 1
      %v2562 = vsel %vm2554, %v2538, 0.0
      %v2563 = vsel %vm2555, %v2539, 0.0
      %v2564 = vsel %vm2556, %v2540, 0.0
      %v2565 = vsel %vm2557, %v2541, 0.0
      %v2566 = vsel %vm2558, %v2542, 0.0
      %v2567 = vsel %vm2559, %v2543, 0.0
      %v2568 = vsel %vm2560, %v2544, 0.0
      %v2569 = vsel %vm2561, %v2545, 0.0
      %v2570 = vld [vmem:[#allocation5 + $0x8] sm:$0xff]
      %v2571 = vld [vmem:[#allocation5 + $0x10] sm:$0xff]
      %v2572 = vld [vmem:[#allocation5 + $0x18] sm:$0xff]
      %v2573 = vld [vmem:[#allocation5 + $0x20] sm:$0xff]
      %v2574 = vld [vmem:[#allocation5 + $0x28] sm:$0xff]
      %v2575 = vld [vmem:[#allocation5 + $0x30] sm:$0xff]
      %v2576 = vld [vmem:[#allocation5 + $0x38] sm:$0xff]
      %v2577 = vld [vmem:[#allocation5 + $0x40] sm:$0xff]
      %v2578 = vld [vmem:[#allocation5 + $0x9] sm:$0xff]
      %v2579 = vld [vmem:[#allocation5 + $0x11] sm:$0xff]
      %v2580 = vld [vmem:[#allocation5 + $0x19] sm:$0xff]
      %v2581 = vld [vmem:[#allocation5 + $0x21] sm:$0xff]
      %v2582 = vld [vmem:[#allocation5 + $0x29] sm:$0xff]
      %v2583 = vld [vmem:[#allocation5 + $0x31] sm:$0xff]
      %v2584 = vld [vmem:[#allocation5 + $0x39] sm:$0xff]
      %v2585 = vld [vmem:[#allocation5 + $0x41] sm:$0xff]
      %v2586 = vsel %vm2530, 1, 0
      %v2587 = vsel %vm2531, 1, 0
      %v2588 = vsel %vm2532, 1, 0
      %v2589 = vsel %vm2533, 1, 0
      %v2590 = vsel %vm2534, 1, 0
      %v2591 = vsel %vm2535, 1, 0
      %v2592 = vsel %vm2536, 1, 0
      %v2593 = vsel %vm2537, 1, 0
      %vm2594 = vcmp.eq.s32.totalorder %v2586, 1
      %vm2595 = vcmp.eq.s32.totalorder %v2587, 1
      %vm2596 = vcmp.eq.s32.totalorder %v2588, 1
      %vm2597 = vcmp.eq.s32.totalorder %v2589, 1
      %vm2598 = vcmp.eq.s32.totalorder %v2590, 1
      %vm2599 = vcmp.eq.s32.totalorder %v2591, 1
      %vm2600 = vcmp.eq.s32.totalorder %v2592, 1
      %vm2601 = vcmp.eq.s32.totalorder %v2593, 1
      %v2602 = vsel %vm2594, %v2578, 0.0
      %v2603 = vsel %vm2595, %v2579, 0.0
      %v2604 = vsel %vm2596, %v2580, 0.0
      %v2605 = vsel %vm2597, %v2581, 0.0
      %v2606 = vsel %vm2598, %v2582, 0.0
      %v2607 = vsel %vm2599, %v2583, 0.0
      %v2608 = vsel %vm2600, %v2584, 0.0
      %v2609 = vsel %vm2601, %v2585, 0.0
      %v2610 = vld [vmem:[#allocation5 + $0x47] sm:$0xff]
      %v2611 = vsel %vm2554, %v2539, 0.0
      %v2612 = vsel %vm2555, %v2540, 0.0
      %v2613 = vsel %vm2556, %v2541, 0.0
      %v2614 = vsel %vm2557, %v2542, 0.0
      %v2615 = vsel %vm2558, %v2543, 0.0
      %v2616 = vsel %vm2559, %v2544, 0.0
      %v2617 = vsel %vm2560, %v2545, 0.0
      %v2618 = vsel %vm2561, %v2610, 0.0
      %v2619 = vld [vmem:[#allocation5 + $0x48] sm:$0xff]
      %v2620 = vld [vmem:[#allocation5 + $0x49] sm:$0xff]
      %v2621 = vsel %vm2594, %v2579, 0.0
      %v2622 = vsel %vm2595, %v2580, 0.0
      %v2623 = vsel %vm2596, %v2581, 0.0
      %v2624 = vsel %vm2597, %v2582, 0.0
      %v2625 = vsel %vm2598, %v2583, 0.0
      %v2626 = vsel %vm2599, %v2584, 0.0
      %v2627 = vsel %vm2600, %v2585, 0.0
      %v2628 = vsel %vm2601, %v2620, 0.0
      %v2629 = vld [vmem:[#allocation5 + $0x4f] sm:$0xff]
      %v2630 = vsel %vm2554, %v2540, 0.0
      %v2631 = vsel %vm2555, %v2541, 0.0
      %v2632 = vsel %vm2556, %v2542, 0.0
      %v2633 = vsel %vm2557, %v2543, 0.0
      %v2634 = vsel %vm2558, %v2544, 0.0
      %v2635 = vsel %vm2559, %v2545, 0.0
      %v2636 = vsel %vm2560, %v2610, 0.0
      %v2637 = vsel %vm2561, %v2629, 0.0
      %v2638 = vld [vmem:[#allocation5 + $0x50] sm:$0xff]
      %v2639 = vld [vmem:[#allocation5 + $0x51] sm:$0xff]
      %v2640 = vsel %vm2594, %v2580, 0.0
      %v2641 = vsel %vm2595, %v2581, 0.0
      %v2642 = vsel %vm2596, %v2582, 0.0
      %v2643 = vsel %vm2597, %v2583, 0.0
      %v2644 = vsel %vm2598, %v2584, 0.0
      %v2645 = vsel %vm2599, %v2585, 0.0
      %v2646 = vsel %vm2600, %v2620, 0.0
      %v2647 = vsel %vm2601, %v2639, 0.0
      %2656 = vrot.lane.b32.xlu0 %v2570, 16
      %v2657 = vpop.permute.xlu0 %2656
      %2658 = vrot.lane.b32.xlu0 %v2571, 16
      %v2659 = vpop.permute.xlu0 %2658
      %2660 = vrot.lane.b32.xlu0 %v2572, 16
      %v2661 = vpop.permute.xlu0 %2660
      %2662 = vrot.lane.b32.xlu0 %v2573, 16
      %v2663 = vpop.permute.xlu0 %2662
      %2664 = vrot.lane.b32.xlu0 %v2574, 16
      %v2665 = vpop.permute.xlu0 %2664
      %2666 = vrot.lane.b32.xlu0 %v2575, 16
      %v2667 = vpop.permute.xlu0 %2666
      %2668 = vrot.lane.b32.xlu0 %v2576, 16
      %v2669 = vpop.permute.xlu0 %2668
      %2670 = vrot.lane.b32.xlu0 %v2577, 16
      %v2671 = vpop.permute.xlu0 %2670
      %2688 = vrot.lane.b32.xlu0 %v2602, 32
      %v2689 = vpop.permute.xlu0 %2688
      %2690 = vrot.lane.b32.xlu0 %v2603, 32
      %v2691 = vpop.permute.xlu0 %2690
      %2692 = vrot.lane.b32.xlu0 %v2604, 32
      %v2693 = vpop.permute.xlu0 %2692
      %2694 = vrot.lane.b32.xlu0 %v2605, 32
      %v2695 = vpop.permute.xlu0 %2694
      %2696 = vrot.lane.b32.xlu0 %v2606, 32
      %v2697 = vpop.permute.xlu0 %2696
      %2698 = vrot.lane.b32.xlu0 %v2607, 32
      %v2699 = vpop.permute.xlu0 %2698
      %2700 = vrot.lane.b32.xlu0 %v2608, 32
      %v2701 = vpop.permute.xlu0 %2700
      %2702 = vrot.lane.b32.xlu0 %v2609, 32
      %v2703 = vpop.permute.xlu0 %2702
      %2720 = vrot.lane.b32.xlu0 %v2611, 48
      %v2721 = vpop.permute.xlu0 %2720
      %2722 = vrot.lane.b32.xlu0 %v2612, 48
      %v2723 = vpop.permute.xlu0 %2722
      %2724 = vrot.lane.b32.xlu0 %v2613, 48
      %v2725 = vpop.permute.xlu0 %2724
      %2726 = vrot.lane.b32.xlu0 %v2614, 48
      %v2727 = vpop.permute.xlu0 %2726
      %2728 = vrot.lane.b32.xlu0 %v2615, 48
      %v2729 = vpop.permute.xlu0 %2728
      %2730 = vrot.lane.b32.xlu0 %v2616, 48
      %v2731 = vpop.permute.xlu0 %2730
      %2732 = vrot.lane.b32.xlu0 %v2617, 48
      %v2733 = vpop.permute.xlu0 %2732
      %2734 = vrot.lane.b32.xlu0 %v2618, 48
      %v2735 = vpop.permute.xlu0 %2734
      %2745 = vrot.lane.b32.xlu0 %v2571, 64
      %v2746 = vpop.permute.xlu0 %2745
      %2747 = vrot.lane.b32.xlu0 %v2572, 64
      %v2748 = vpop.permute.xlu0 %2747
      %2749 = vrot.lane.b32.xlu0 %v2573, 64
      %v2750 = vpop.permute.xlu0 %2749
      %2751 = vrot.lane.b32.xlu0 %v2574, 64
      %v2752 = vpop.permute.xlu0 %2751
      %2753 = vrot.lane.b32.xlu0 %v2575, 64
      %v2754 = vpop.permute.xlu0 %2753
      %2755 = vrot.lane.b32.xlu0 %v2576, 64
      %v2756 = vpop.permute.xlu0 %2755
      %2757 = vrot.lane.b32.xlu0 %v2577, 64
      %v2758 = vpop.permute.xlu0 %2757
      %2759 = vrot.lane.b32.xlu0 %v2619, 64
      %v2760 = vpop.permute.xlu0 %2759
      %2777 = vrot.lane.b32.xlu0 %v2621, 80
      %v2778 = vpop.permute.xlu0 %2777
      %2779 = vrot.lane.b32.xlu0 %v2622, 80
      %v2780 = vpop.permute.xlu0 %2779
      %2781 = vrot.lane.b32.xlu0 %v2623, 80
      %v2782 = vpop.permute.xlu0 %2781
      %2783 = vrot.lane.b32.xlu0 %v2624, 80
      %v2784 = vpop.permute.xlu0 %2783
      %2785 = vrot.lane.b32.xlu0 %v2625, 80
      %v2786 = vpop.permute.xlu0 %2785
      %2787 = vrot.lane.b32.xlu0 %v2626, 80
      %v2788 = vpop.permute.xlu0 %2787
      %2789 = vrot.lane.b32.xlu0 %v2627, 80
      %v2790 = vpop.permute.xlu0 %2789
      %2791 = vrot.lane.b32.xlu0 %v2628, 80
      %v2792 = vpop.permute.xlu0 %2791
      %2809 = vrot.lane.b32.xlu0 %v2630, 96
      %v2810 = vpop.permute.xlu0 %2809
      %2811 = vrot.lane.b32.xlu0 %v2631, 96
      %v2812 = vpop.permute.xlu0 %2811
      %2813 = vrot.lane.b32.xlu0 %v2632, 96
      %v2814 = vpop.permute.xlu0 %2813
      %2815 = vrot.lane.b32.xlu0 %v2633, 96
      %v2816 = vpop.permute.xlu0 %2815
      %2817 = vrot.lane.b32.xlu0 %v2634, 96
      %v2818 = vpop.permute.xlu0 %2817
      %2819 = vrot.lane.b32.xlu0 %v2635, 96
      %v2820 = vpop.permute.xlu0 %2819
      %2821 = vrot.lane.b32.xlu0 %v2636, 96
      %v2822 = vpop.permute.xlu0 %2821
      %2823 = vrot.lane.b32.xlu0 %v2637, 96
      %v2824 = vpop.permute.xlu0 %2823
      %2834 = vrot.lane.b32.xlu0 %v2572, 112
      %v2835 = vpop.permute.xlu0 %2834
      %2836 = vrot.lane.b32.xlu0 %v2573, 112
      %v2837 = vpop.permute.xlu0 %2836
      %2838 = vrot.lane.b32.xlu0 %v2574, 112
      %v2839 = vpop.permute.xlu0 %2838
      %2840 = vrot.lane.b32.xlu0 %v2575, 112
      %v2841 = vpop.permute.xlu0 %2840
      %2842 = vrot.lane.b32.xlu0 %v2576, 112
      %v2843 = vpop.permute.xlu0 %2842
      %2844 = vrot.lane.b32.xlu0 %v2577, 112
      %v2845 = vpop.permute.xlu0 %2844
      %2846 = vrot.lane.b32.xlu0 %v2619, 112
      %v2847 = vpop.permute.xlu0 %2846
      %2848 = vrot.lane.b32.xlu0 %v2638, 112
      %v2849 = vpop.permute.xlu0 %2848
      %v2858 = vsel %vm287, %v2562, %v2657
      %v2859 = vsel %vm287, %v2563, %v2659
      %v2860 = vsel %vm287, %v2564, %v2661
      %v2861 = vsel %vm287, %v2565, %v2663
      %v2862 = vsel %vm287, %v2566, %v2665
      %v2863 = vsel %vm287, %v2567, %v2667
      %v2864 = vsel %vm287, %v2568, %v2669
      %v2865 = vsel %vm287, %v2569, %v2671
      %v2866 = vsel %vm292, %v2858, %v2689
      %v2867 = vsel %vm292, %v2859, %v2691
      %v2868 = vsel %vm292, %v2860, %v2693
      %v2869 = vsel %vm292, %v2861, %v2695
      %v2870 = vsel %vm292, %v2862, %v2697
      %v2871 = vsel %vm292, %v2863, %v2699
      %v2872 = vsel %vm292, %v2864, %v2701
      %v2873 = vsel %vm292, %v2865, %v2703
      %vm2874 = vcmask 392192
      %v2875 = vsel %vm2874, %v2866, %v2721
      %v2876 = vsel %vm2874, %v2867, %v2723
      %v2877 = vsel %vm2874, %v2868, %v2725
      %v2878 = vsel %vm2874, %v2869, %v2727
      %v2879 = vsel %vm2874, %v2870, %v2729
      %v2880 = vsel %vm2874, %v2871, %v2731
      %v2881 = vsel %vm2874, %v2872, %v2733
      %v2882 = vsel %vm2874, %v2873, %v2735
      %vm2883 = vcmask 523264
      %v2884 = vsel %vm2883, %v2875, %v2746
      %v2885 = vsel %vm2883, %v2876, %v2748
      %v2886 = vsel %vm2883, %v2877, %v2750
      %v2887 = vsel %vm2883, %v2878, %v2752
      %v2888 = vsel %vm2883, %v2879, %v2754
      %v2889 = vsel %vm2883, %v2880, %v2756
      %v2890 = vsel %vm2883, %v2881, %v2758
      %v2891 = vsel %vm2883, %v2882, %v2760
      %vm2892 = vcmask 654336
      %v2893 = vsel %vm2892, %v2884, %v2778
      %v2894 = vsel %vm2892, %v2885, %v2780
      %v2895 = vsel %vm2892, %v2886, %v2782
      %v2896 = vsel %vm2892, %v2887, %v2784
      %v2897 = vsel %vm2892, %v2888, %v2786
      %v2898 = vsel %vm2892, %v2889, %v2788
      %v2899 = vsel %vm2892, %v2890, %v2790
      %v2900 = vsel %vm2892, %v2891, %v2792
      %vm2901 = vcmask 785408
      %v2902 = vsel %vm2901, %v2893, %v2810
      %v2903 = vsel %vm2901, %v2894, %v2812
      %v2904 = vsel %vm2901, %v2895, %v2814
      %v2905 = vsel %vm2901, %v2896, %v2816
      %v2906 = vsel %vm2901, %v2897, %v2818
      %v2907 = vsel %vm2901, %v2898, %v2820
      %v2908 = vsel %vm2901, %v2899, %v2822
      %v2909 = vsel %vm2901, %v2900, %v2824
      %vm2910 = vcmask 916480
      %v2911 = vsel %vm2910, %v2902, %v2835
      %v2912 = vsel %vm2910, %v2903, %v2837
      %v2913 = vsel %vm2910, %v2904, %v2839
      %v2914 = vsel %vm2910, %v2905, %v2841
      %v2915 = vsel %vm2910, %v2906, %v2843
      %v2916 = vsel %vm2910, %v2907, %v2845
      %v2917 = vsel %vm2910, %v2908, %v2847
      %v2918 = vsel %vm2910, %v2909, %v2849
      %v2919 = vpack.c.bf16 %v2912, %v2911
      %v2920 = vpack.c.bf16 %v2641, %v2640
      %v2921 = vpack.c.bf16 %v2914, %v2913
      %v2922 = vpack.c.bf16 %v2643, %v2642
      %v2923 = vpack.c.bf16 %v2916, %v2915
      %v2924 = vpack.c.bf16 %v2645, %v2644
      %v2925 = vpack.c.bf16 %v2918, %v2917
      %v2926 = vpack.c.bf16 %v2647, %v2646
      %v2927 = vld [vmem:[%s3] sm:$0xf]
      %v2928 = vld [vmem:[%s3 + $0x4] sm:$0xf]
      %v2929 = vld [vmem:[%s3 + $0x8] sm:$0xf]
      %v2930 = vld [vmem:[%s3 + $0xc] sm:$0xf]
      %v2931 = vld [vmem:[%s3 + $0x10] sm:$0xf]
      %v2932 = vld [vmem:[%s3 + $0x14] sm:$0xf]
      %v2933 = vld [vmem:[%s3 + $0x18] sm:$0xf]
      %v2934 = vld [vmem:[%s3 + $0x1c] sm:$0xf]
      %v2935 = vld [vmem:[%s3 + $0x20] sm:$0xf]
      %v2936 = vld [vmem:[%s3 + $0x24] sm:$0xf]
      %v2937 = vld [vmem:[%s3 + $0x28] sm:$0xf]
      %v2938 = vld [vmem:[%s3 + $0x2c] sm:$0xf]
      %v2939 = vld [vmem:[%s3 + $0x30] sm:$0xf]
      %v2940 = vld [vmem:[%s3 + $0x34] sm:$0xf]
      %v2941 = vld [vmem:[%s3 + $0x38] sm:$0xf]
      %v2942 = vld [vmem:[%s3 + $0x3c] sm:$0xf]
      %v2943 = vld [vmem:[%s3 + $0x40] sm:$0xf]
      %v2944 = vld [vmem:[%s3 + $0x44] sm:$0xf]
      %v2945 = vld [vmem:[%s4] sm:$0x1]
      %v2947 = vperm.slane %v2945, 0
      %v2967 = vunpack.c.l.b16 %v2927
      %v2968 = vunpack.c.l.b16 %v2928
      %v2969 = vunpack.c.l.b16 %v2929
      %v2970 = vunpack.c.l.b16 %v2930
      %v2971 = vunpack.c.l.b16 %v2931
      %v2972 = vunpack.c.l.b16 %v2932
      %v2973 = vunpack.c.l.b16 %v2933
      %v2974 = vunpack.c.l.b16 %v2934
      %v2975 = vunpack.c.l.b16 %v2935
      %v2976 = vunpack.c.l.b16 %v2936
      %v2977 = vunpack.c.l.b16 %v2937
      %v2978 = vunpack.c.l.b16 %v2938
      %v2979 = vunpack.c.l.b16 %v2939
      %v2980 = vunpack.c.l.b16 %v2940
      %v2981 = vunpack.c.l.b16 %v2941
      %v2982 = vunpack.c.l.b16 %v2942
      %v2983 = vunpack.c.l.b16 %v2943
      %v2984 = vunpack.c.l.b16 %v2944
      %v2985 = vpack.c.b16 %v2968, %v2967
      %v2986 = vpack.c.b16 %v2970, %v2969
      %v2987 = vpack.c.b16 %v2972, %v2971
      %v2988 = vpack.c.b16 %v2974, %v2973
      %v2989 = vpack.c.b16 %v2976, %v2975
      %v2990 = vpack.c.b16 %v2978, %v2977
      %v2991 = vpack.c.b16 %v2980, %v2979
      %v2992 = vpack.c.b16 %v2982, %v2981
      %v2993 = vpack.c.b16 %v2984, %v2983
      %v3004 = vsel %vm287, %v2920, 0
      %v3007 = vsel %vm287, %v2922, 0
      %v3010 = vsel %vm287, %v2924, 0
      %v3013 = vsel %vm287, %v2926, 0
      %3015 = vmatpush.bf16.msra.mxu0 %v2992
      %3016 = vmatpush.bf16.msra.mxu0 %v2991
      %3017 = vmatpush.bf16.msra.mxu0 %v2990
      %3018 = vmatpush.bf16.msra.mxu0 %v2989
      %3019 = vmatpush.bf16.msra.mxu0 %v2988
      %3020 = vmatpush.bf16.msra.mxu0 %v2987
      %3021 = vmatpush.bf16.msra.mxu0 %v2986
      %3022 = vmatpush.bf16.msra.mxu0 %v2985
      %3023 = vmatmul.bf16.gmra.mxu0 %v2919
      %v3024 = vpop.f32.mrf.mxu0
      %v3025 = vadd.f32 %v2947, %v3024
      %v3026 = vpop.f32.mrf.mxu0
      %v3027 = vadd.f32 %v2947, %v3026
      %3028 = vmatmul.bf16.gmra.mxu0 %v2921
      %v3029 = vpop.f32.mrf.mxu0
      %v3030 = vadd.f32 %v2947, %v3029
      %v3031 = vpop.f32.mrf.mxu0
      %v3032 = vadd.f32 %v2947, %v3031
      %3033 = vmatmul.bf16.gmra.mxu0 %v2923
      %v3034 = vpop.f32.mrf.mxu0
      %v3035 = vadd.f32 %v2947, %v3034
      %v3036 = vpop.f32.mrf.mxu0
      %v3037 = vadd.f32 %v2947, %v3036
      %3038 = vmatmul.bf16.gmra.mxu0 %v2925
      %v3039 = vpop.f32.mrf.mxu0
      %v3040 = vadd.f32 %v2947, %v3039
      %v3041 = vpop.f32.mrf.mxu0
      %v3042 = vadd.f32 %v2947, %v3041
      %3043 = vdwg.mxu0
      %3044 = vmatpush.bf16.msra.mxu0 0
      %3045 = vmatpush.bf16.msra.mxu0 0
      %3046 = vmatpush.bf16.msra.mxu0 0
      %3047 = vmatpush.bf16.msra.mxu0 0
      %3048 = vmatpush.bf16.msra.mxu0 0
      %3049 = vmatpush.bf16.msra.mxu0 0
      %3050 = vmatpush.bf16.msra.mxu0 0
      %3051 = vmatpush.bf16.msra.mxu0 %v2993
      %3052 = vmatmul.bf16.gmra.mxu0 %v3004
      %v3053 = vpop.f32.mrf.mxu0
      %v3054 = vadd.f32 %v3025, %v3053
      %v3055 = vpop.f32.mrf.mxu0
      %v3056 = vadd.f32 %v3027, %v3055
      %3057 = vmatmul.bf16.gmra.mxu0 %v3007
      %v3058 = vpop.f32.mrf.mxu0
      %v3059 = vadd.f32 %v3030, %v3058
      %v3060 = vpop.f32.mrf.mxu0
      %v3061 = vadd.f32 %v3032, %v3060
      %3062 = vmatmul.bf16.gmra.mxu0 %v3010
      %v3063 = vpop.f32.mrf.mxu0
      %v3064 = vadd.f32 %v3035, %v3063
      %v3065 = vpop.f32.mrf.mxu0
      %v3066 = vadd.f32 %v3037, %v3065
      %3067 = vmatmul.bf16.gmra.mxu0 %v3013
      %v3068 = vpop.f32.mrf.mxu0
      %v3069 = vadd.f32 %v3040, %v3068
      %v3070 = vpop.f32.mrf.mxu0
      %v3071 = vadd.f32 %v3042, %v3070
      %3072 = vdwg.mxu0
      %v3073 = vmax.f32 %v3054, 0.0
      %v3074 = vmax.f32 %v3056, 0.0
      %v3075 = vmax.f32 %v3059, 0.0
      %v3076 = vmax.f32 %v3061, 0.0
      %v3077 = vmax.f32 %v3064, 0.0
      %v3078 = vmax.f32 %v3066, 0.0
      %v3079 = vmax.f32 %v3069, 0.0
      %v3080 = vmax.f32 %v3071, 0.0
      %3081 = vst.msk [vmem:[#allocation6] sm:$0xff] %vm292, %v3073
      %3082 = vst.msk [vmem:[#allocation6 + $0x8] sm:$0xff] %vm292, %v3074
      %3083 = vst.msk [vmem:[#allocation6 + $0x10] sm:$0xff] %vm292, %v3075
      %3084 = vst.msk [vmem:[#allocation6 + $0x18] sm:$0xff] %vm292, %v3076
      %3085 = vst.msk [vmem:[#allocation6 + $0x20] sm:$0xff] %vm292, %v3077
      %3086 = vst.msk [vmem:[#allocation6 + $0x28] sm:$0xff] %vm292, %v3078
      %3087 = vst.msk [vmem:[#allocation6 + $0x30] sm:$0xff] %vm292, %v3079
      %3088 = vst.msk [vmem:[#allocation6 + $0x38] sm:$0xff] %vm292, %v3080
      %v3089 = vld [vmem:[#allocation6] ss:$2 sm:$0xff]
      %s3090 = scalar_lea.vmem [#allocation6], 16
      %v3091 = vld [vmem:[%s3090] ss:$2 sm:$0xff]
      %s3092 = scalar_lea.vmem [#allocation6], 32
      %v3093 = vld [vmem:[%s3092] ss:$2 sm:$0xff]
      %s3094 = scalar_lea.vmem [#allocation6], 48
      %v3095 = vld [vmem:[%s3094] ss:$2 sm:$0xff]
      %s3096 = scalar_lea.vmem [#allocation6], 1
      %v3097 = vld [vmem:[%s3096] ss:$2 sm:$0xff]
      %s3098 = scalar_lea.vmem [#allocation6], 17
      %v3099 = vld [vmem:[%s3098] ss:$2 sm:$0xff]
      %s3100 = scalar_lea.vmem [#allocation6], 33
      %v3101 = vld [vmem:[%s3100] ss:$2 sm:$0xff]
      %s3102 = scalar_lea.vmem [#allocation6], 49
      %v3103 = vld [vmem:[%s3102] ss:$2 sm:$0xff]
      %v3104 = vmax.f32 %v3089, %v3097
      %v3105 = vmax.f32 %v3091, %v3099
      %v3106 = vmax.f32 %v3093, %v3101
      %v3107 = vmax.f32 %v3095, %v3103
      %3108 = vst.msk [vmem:[#allocation7] sm:$0xff] %vm292, %v3104
      %3109 = vst.msk [vmem:[#allocation7 + $0x8] sm:$0xff] %vm292, %v3105
      %3110 = vst.msk [vmem:[#allocation7 + $0x10] sm:$0xff] %vm292, %v3106
      %3111 = vst.msk [vmem:[#allocation7 + $0x18] sm:$0xff] %vm292, %v3107
      %v3112 = vld [vmem:[#allocation7] sm:$0xf]
      %v3113 = vld [vmem:[#allocation7 + $0x4] sm:$0xf]
      %v3114 = vmax.f32 %v3112, %v3113
      %v3115 = vld [vmem:[#allocation7 + $0x8] sm:$0xf]
      %v3116 = vld [vmem:[#allocation7 + $0xc] sm:$0xf]
      %v3117 = vmax.f32 %v3115, %v3116
      %v3118 = vld [vmem:[#allocation7 + $0x10] sm:$0xf]
      %v3119 = vld [vmem:[#allocation7 + $0x14] sm:$0xf]
      %v3120 = vmax.f32 %v3118, %v3119
      %v3121 = vld [vmem:[#allocation7 + $0x18] sm:$0xf]
      %v3122 = vld [vmem:[#allocation7 + $0x1c] sm:$0xf]
      %v3123 = vmax.f32 %v3121, %v3122
      %v3125 = vrot.slane %v3117, 4
      %v3128 = vrot.slane %v3123, 4
      %vm3130 = vcmask 1043456
      %v3131 = vsel %vm3130, %v3114, %v3125
      %v3132 = vsel %vm3130, %v3120, %v3128
      %3133 = vst.msk [vmem:[#allocation8 + $0x8] sm:$0xff] %vm292, %v3131
      %3134 = vst.msk [vmem:[#allocation8 + $0x10] sm:$0xff] %vm292, %v3132
      %v3135 = vand.u32 %v360, 3
      %v3136 = vand.u32 %v361, 3
      %vm3137 = vcmp.ge.s32.totalorder %v3135, 1
      %vm3138 = vcmp.ge.s32.totalorder %v3136, 1
      %vm3139 = vcmp.lt.s32.totalorder %v3135, 3
      %vm3140 = vcmp.lt.s32.totalorder %v3136, 3
      %v3141 = vld [vmem:[#allocation8 + $0x3] sm:$0xff]
      %v3142 = vld [vmem:[#allocation8 + $0xb] sm:$0xff]
      %v3143 = vsel %vm3137, 1, 0
      %v3144 = vsel %vm3138, 1, 0
      %vm3145 = vcmp.eq.s32.totalorder %v3143, 1
      %vm3146 = vcmp.eq.s32.totalorder %v3144, 1
      %v3147 = vsel %vm3145, %v3141, 0.0
      %v3148 = vsel %vm3146, %v3142, 0.0
      %v3149 = vld [vmem:[#allocation8 + $0x4] sm:$0xff]
      %v3150 = vld [vmem:[#allocation8 + $0xc] sm:$0xff]
      %v3151 = vld [vmem:[#allocation8 + $0x5] sm:$0xff]
      %v3152 = vld [vmem:[#allocation8 + $0xd] sm:$0xff]
      %v3153 = vsel %vm3139, 1, 0
      %v3154 = vsel %vm3140, 1, 0
      %vm3155 = vcmp.eq.s32.totalorder %v3153, 1
      %vm3156 = vcmp.eq.s32.totalorder %v3154, 1
      %v3157 = vsel %vm3155, %v3151, 0.0
      %v3158 = vsel %vm3156, %v3152, 0.0
      %v3159 = vld [vmem:[#allocation8 + $0x7] sm:$0xff]
      %v3160 = vld [vmem:[#allocation8 + $0xf] sm:$0xff]
      %v3161 = vsel %vm3145, %v3159, 0.0
      %v3162 = vsel %vm3146, %v3160, 0.0
      %v3163 = vld [vmem:[#allocation8 + $0x8] sm:$0xff]
      %v3164 = vld [vmem:[#allocation8 + $0x10] sm:$0xff]
      %v3165 = vld [vmem:[#allocation8 + $0x9] sm:$0xff]
      %v3166 = vld [vmem:[#allocation8 + $0x11] sm:$0xff]
      %v3167 = vsel %vm3155, %v3165, 0.0
      %v3168 = vsel %vm3156, %v3166, 0.0
      %v3169 = vld [vmem:[#allocation8 + $0x13] sm:$0xff]
      %v3170 = vsel %vm3145, %v3142, 0.0
      %v3171 = vsel %vm3146, %v3169, 0.0
      %v3172 = vld [vmem:[#allocation8 + $0x14] sm:$0xff]
      %v3173 = vld [vmem:[#allocation8 + $0x15] sm:$0xff]
      %v3174 = vsel %vm3155, %v3152, 0.0
      %v3175 = vsel %vm3156, %v3173, 0.0
      %3178 = vrot.lane.b32.xlu0 %v3149, 32
      %v3179 = vpop.permute.xlu0 %3178
      %3180 = vrot.lane.b32.xlu0 %v3150, 32
      %v3181 = vpop.permute.xlu0 %3180
      %3186 = vrot.lane.b32.xlu0 %v3157, 64
      %v3187 = vpop.permute.xlu0 %3186
      %3188 = vrot.lane.b32.xlu0 %v3158, 64
      %v3189 = vpop.permute.xlu0 %3188
      %3194 = vrot.lane.b32.xlu0 %v3161, 96
      %v3195 = vpop.permute.xlu0 %3194
      %3196 = vrot.lane.b32.xlu0 %v3162, 96
      %v3197 = vpop.permute.xlu0 %3196
      %3202 = vrot.lane.b32.xlu0 %v3167, 32
      %v3203 = vpop.permute.xlu0 %3202
      %3204 = vrot.lane.b32.xlu0 %v3168, 32
      %v3205 = vpop.permute.xlu0 %3204
      %3210 = vrot.lane.b32.xlu0 %v3170, 64
      %v3211 = vpop.permute.xlu0 %3210
      %3212 = vrot.lane.b32.xlu0 %v3171, 64
      %v3213 = vpop.permute.xlu0 %3212
      %3217 = vrot.lane.b32.xlu0 %v3150, 96
      %v3218 = vpop.permute.xlu0 %3217
      %3219 = vrot.lane.b32.xlu0 %v3172, 96
      %v3220 = vpop.permute.xlu0 %3219
      %v3223 = vsel %vm292, %v3147, %v3179
      %v3224 = vsel %vm292, %v3148, %v3181
      %v3225 = vsel %vm2883, %v3223, %v3187
      %v3226 = vsel %vm2883, %v3224, %v3189
      %v3227 = vsel %vm2901, %v3225, %v3195
      %v3228 = vsel %vm2901, %v3226, %v3197
      %v3229 = vsel %vm292, %v3163, %v3203
      %v3230 = vsel %vm292, %v3164, %v3205
      %v3231 = vsel %vm2883, %v3229, %v3211
      %v3232 = vsel %vm2883, %v3230, %v3213
      %v3233 = vsel %vm2901, %v3231, %v3218
      %v3234 = vsel %vm2901, %v3232, %v3220
      %v3235 = vpack.c.bf16 %v3228, %v3227
      %v3236 = vpack.c.bf16 %v3234, %v3233
      %v3237 = vpack.c.bf16 %v3175, %v3174
      %v3238 = vld [vmem:[%s5] sm:$0xf]
      %v3239 = vld [vmem:[%s5 + $0x4] sm:$0xf]
      %v3240 = vld [vmem:[%s5 + $0x8] sm:$0xf]
      %v3241 = vld [vmem:[%s5 + $0xc] sm:$0xf]
      %v3242 = vld [vmem:[%s5 + $0x10] sm:$0xf]
      %v3243 = vld [vmem:[%s5 + $0x14] sm:$0xf]
      %v3244 = vld [vmem:[%s5 + $0x18] sm:$0xf]
      %v3245 = vld [vmem:[%s5 + $0x1c] sm:$0xf]
      %v3246 = vld [vmem:[%s5 + $0x20] sm:$0xf]
      %v3247 = vld [vmem:[%s5 + $0x24] sm:$0xf]
      %v3248 = vld [vmem:[%s5 + $0x28] sm:$0xf]
      %v3249 = vld [vmem:[%s5 + $0x2c] sm:$0xf]
      %v3250 = vld [vmem:[%s5 + $0x30] sm:$0xf]
      %v3251 = vld [vmem:[%s5 + $0x34] sm:$0xf]
      %v3252 = vld [vmem:[%s5 + $0x38] sm:$0xf]
      %v3253 = vld [vmem:[%s5 + $0x3c] sm:$0xf]
      %v3254 = vld [vmem:[%s5 + $0x40] sm:$0xf]
      %v3255 = vld [vmem:[%s5 + $0x44] sm:$0xf]
      %v3256 = vld [vmem:[%s5 + $0x48] sm:$0xf]
      %v3257 = vld [vmem:[%s5 + $0x4c] sm:$0xf]
      %v3258 = vld [vmem:[%s5 + $0x50] sm:$0xf]
      %v3259 = vld [vmem:[%s5 + $0x54] sm:$0xf]
      %v3260 = vld [vmem:[%s5 + $0x58] sm:$0xf]
      %v3261 = vld [vmem:[%s5 + $0x5c] sm:$0xf]
      %v3262 = vld [vmem:[%s5 + $0x60] sm:$0xf]
      %v3263 = vld [vmem:[%s5 + $0x64] sm:$0xf]
      %v3264 = vld [vmem:[%s5 + $0x68] sm:$0xf]
      %v3265 = vld [vmem:[%s5 + $0x6c] sm:$0xf]
      %v3266 = vld [vmem:[%s5 + $0x70] sm:$0xf]
      %v3267 = vld [vmem:[%s5 + $0x74] sm:$0xf]
      %v3268 = vld [vmem:[%s5 + $0x78] sm:$0xf]
      %v3269 = vld [vmem:[%s5 + $0x7c] sm:$0xf]
      %v3270 = vld [vmem:[%s5 + $0x80] sm:$0xf]
      %v3271 = vld [vmem:[%s5 + $0x84] sm:$0xf]
      %v3272 = vld [vmem:[%s5 + $0x88] sm:$0xf]
      %v3273 = vld [vmem:[%s5 + $0x8c] sm:$0xf]
      %v3274 = vld [vmem:[%s6] sm:$0x1]
      %v3276 = vperm.slane %v3274, 0
      %v3314 = vunpack.c.l.b16 %v3238
      %v3315 = vunpack.c.l.b16 %v3239
      %v3316 = vunpack.c.l.b16 %v3240
      %v3317 = vunpack.c.l.b16 %v3241
      %v3318 = vunpack.c.l.b16 %v3242
      %v3319 = vunpack.c.l.b16 %v3243
      %v3320 = vunpack.c.l.b16 %v3244
      %v3321 = vunpack.c.l.b16 %v3245
      %v3322 = vunpack.c.l.b16 %v3246
      %v3323 = vunpack.c.l.b16 %v3247
      %v3324 = vunpack.c.l.b16 %v3248
      %v3325 = vunpack.c.l.b16 %v3249
      %v3326 = vunpack.c.l.b16 %v3250
      %v3327 = vunpack.c.l.b16 %v3251
      %v3328 = vunpack.c.l.b16 %v3252
      %v3329 = vunpack.c.l.b16 %v3253
      %v3330 = vunpack.c.l.b16 %v3254
      %v3331 = vunpack.c.l.b16 %v3255
      %v3332 = vunpack.c.l.b16 %v3256
      %v3333 = vunpack.c.l.b16 %v3257
      %v3334 = vunpack.c.l.b16 %v3258
      %v3335 = vunpack.c.l.b16 %v3259
      %v3336 = vunpack.c.l.b16 %v3260
      %v3337 = vunpack.c.l.b16 %v3261
      %v3338 = vunpack.c.l.b16 %v3262
      %v3339 = vunpack.c.l.b16 %v3263
      %v3340 = vunpack.c.l.b16 %v3264
      %v3341 = vunpack.c.l.b16 %v3265
      %v3342 = vunpack.c.l.b16 %v3266
      %v3343 = vunpack.c.l.b16 %v3267
      %v3344 = vunpack.c.l.b16 %v3268
      %v3345 = vunpack.c.l.b16 %v3269
      %v3346 = vunpack.c.l.b16 %v3270
      %v3347 = vunpack.c.l.b16 %v3271
      %v3348 = vunpack.c.l.b16 %v3272
      %v3349 = vunpack.c.l.b16 %v3273
      %v3350 = vpack.c.b16 %v3315, %v3314
      %v3351 = vpack.c.b16 %v3317, %v3316
      %v3352 = vpack.c.b16 %v3319, %v3318
      %v3353 = vpack.c.b16 %v3321, %v3320
      %v3354 = vpack.c.b16 %v3323, %v3322
      %v3355 = vpack.c.b16 %v3325, %v3324
      %v3356 = vpack.c.b16 %v3327, %v3326
      %v3357 = vpack.c.b16 %v3329, %v3328
      %v3358 = vpack.c.b16 %v3331, %v3330
      %v3359 = vpack.c.b16 %v3333, %v3332
      %v3360 = vpack.c.b16 %v3335, %v3334
      %v3361 = vpack.c.b16 %v3337, %v3336
      %v3362 = vpack.c.b16 %v3339, %v3338
      %v3363 = vpack.c.b16 %v3341, %v3340
      %v3364 = vpack.c.b16 %v3343, %v3342
      %v3365 = vpack.c.b16 %v3345, %v3344
      %v3366 = vpack.c.b16 %v3347, %v3346
      %v3367 = vpack.c.b16 %v3349, %v3348
      %v3387 = vsel %vm292, %v3237, 0
      %3389 = vmatpush.bf16.msra.mxu0 %v3357
      %3390 = vmatpush.bf16.msra.mxu0 %v3356
      %3391 = vmatpush.bf16.msra.mxu0 %v3355
      %3392 = vmatpush.bf16.msra.mxu0 %v3354
      %3393 = vmatpush.bf16.msra.mxu0 %v3353
      %3394 = vmatpush.bf16.msra.mxu0 %v3352
      %3395 = vmatpush.bf16.msra.mxu0 %v3351
      %3396 = vmatpush.bf16.msra.mxu0 %v3350
      %3397 = vmatmul.bf16.gmra.mxu0 %v3235
      %v3398 = vpop.f32.mrf.mxu0
      %v3399 = vadd.f32 %v3276, %v3398
      %v3400 = vpop.f32.mrf.mxu0
      %v3401 = vadd.f32 %v3276, %v3400
      %3402 = vdwg.mxu0
      %3403 = vmatpush.bf16.msra.mxu0 %v3365
      %3404 = vmatpush.bf16.msra.mxu0 %v3364
      %3405 = vmatpush.bf16.msra.mxu0 %v3363
      %3406 = vmatpush.bf16.msra.mxu0 %v3362
      %3407 = vmatpush.bf16.msra.mxu0 %v3361
      %3408 = vmatpush.bf16.msra.mxu0 %v3360
      %3409 = vmatpush.bf16.msra.mxu0 %v3359
      %3410 = vmatpush.bf16.msra.mxu0 %v3358
      %3411 = vmatmul.bf16.gmra.mxu0 %v3236
      %v3412 = vpop.f32.mrf.mxu0
      %v3413 = vadd.f32 %v3399, %v3412
      %v3414 = vpop.f32.mrf.mxu0
      %v3415 = vadd.f32 %v3401, %v3414
      %3416 = vdwg.mxu0
      %3417 = vmatpush.bf16.msra.mxu0 0
      %3418 = vmatpush.bf16.msra.mxu0 0
      %3419 = vmatpush.bf16.msra.mxu0 0
      %3420 = vmatpush.bf16.msra.mxu0 0
      %3421 = vmatpush.bf16.msra.mxu0 0
      %3422 = vmatpush.bf16.msra.mxu0 0
      %3423 = vmatpush.bf16.msra.mxu0 %v3367
      %3424 = vmatpush.bf16.msra.mxu0 %v3366
      %3425 = vmatmul.bf16.gmra.mxu0 %v3387
      %v3426 = vpop.f32.mrf.mxu0
      %v3427 = vadd.f32 %v3413, %v3426
      %v3428 = vpop.f32.mrf.mxu0
      %v3429 = vadd.f32 %v3415, %v3428
      %3430 = vdwg.mxu0
      %v3431 = vmax.f32 %v3427, 0.0
      %v3432 = vmax.f32 %v3429, 0.0
      %3433 = vst.msk [vmem:[%s278] sm:$0xff] %vm2883, %v3431
      %3434 = vst.msk [vmem:[%s278 + $0x8] sm:$0xff] %vm2883, %v3432
      %p3435 = scmp.lt.s32.totalorder %s18, 1
      %s3436 = scalar_select %p3435, %s18, 1
      %s3437 = smul.addr %s3436, 2
      %s3438 = smul.addr %s3437, 8
      %s3439 = scalar_lea.vmem %s7, %s3438
      // Predicated region
      $region49: #{nnbase_forward.2} parent=47 // pred_check
        %p3440 = pneg %p188
      $region50: #{nnbase_forward.2} parent=47 // pred_check_branch
        %3442 = sbr.rel (%p3440) target = $region52
      $region51: #{nnbase_forward.2} parent=47 // pred_region
        _
      $region52: #{nnbase_forward.2} parent=47 // pred_fallthru
        _
    $region48: #{nnbase_forward.2} parent=5 // pred_fallthru
      _
    %p3443 = scmp.le.s32.totalorder 2, %s13
    // Predicated region
    $region53: #{nnbase_forward.2} parent=5 // pred_check
      %p3444 = pneg %p3443
    $region54: #{nnbase_forward.2} parent=5 // pred_check_branch
      %3446 = sbr.rel (%p3444) target = $region56
    $region55: #{nnbase_forward.2} parent=5 // pred_region
      %s3447 = ssub.s32 %s13, 2
      // Predicated region
      $region57: #{nnbase_forward.2} parent=55 // pred_check
        %p3448 = pneg %p194
      $region58: #{nnbase_forward.2} parent=55 // pred_check_branch
        %3450 = sbr.rel (%p3448) target = $region60
      $region59: #{nnbase_forward.2} parent=55 // pred_region
        %p3451 = scmp.lt.s32.totalorder %s19, 1
        %s3452 = scalar_select %p3451, %s19, 1
        %s3453 = smul.addr %s3452, 2
        %s3454 = smul.addr %s3453, 8
        %s3455 = scalar_lea.vmem %s7, %s3454
      $region60: #{nnbase_forward.2} parent=55 // pred_fallthru
        _
    $region56: #{nnbase_forward.2} parent=5 // pred_fallthru
      _
  $region6: #{nnbase_forward.2} parent=0 // loop_footer
    %s17 = sadd.s32 1, %s13
  $region7: #{nnbase_forward.2} parent=0 // loop_footer_branch
    %12 = sbr.rel target = $region3
  $region8: #{nnbase_forward.2} parent=0 // loop_exit
    _

</llo_original>
